<compile_context>
chip_gen: v6e
topology: v6e:2x2x1
jax: 0.10.0
libtpu: 0.0.40
codegen_flags: <defaults>
</compile_context>

<pallas_src>
import numpy as np
import jax
import jax.numpy as jnp
from jax.experimental import pallas as pl
from jax.experimental.pallas import tpu as pltpu

# ---- static configuration (mirrors the PyTorch module's args) ----
B = 2              # batch size
N = 8              # number of atoms == args.max_atom (LSTM input size)
IN_F = 16          # in_features
OUT_F = 32         # out_features
E_OUT = 16         # args.gat_e_out_dim
CI = 8             # args.gat_ci_out (LSTM hidden size per direction)
NEG_SLOPE = 0.01   # nn.LeakyReLU default slope
NEG_BIG = -9e15    # mask value used by the torch code


def _leaky(x):
    return jnp.where(x > 0, x, NEG_SLOPE * x)


def _selection_constants():
    """One-hot matrices encoding the exact torch index gymnastics.

    The torch code builds
        atom_trans = cat([af.repeat(1,1,N).view(B,N*N,-1), af.repeat(1,N,1)], dim=1)
                       .view(B, N, N, 2*OUT_F)
    Simulating that on row indices gives, for p = i*N + j:
        atom_trans[b,i,j, :OUT_F ] = af[b, r0[p], :]
        atom_trans[b,i,j, OUT_F: ] = af[b, r1[p], :]
    """
    idx = np.arange(N)
    part1_rows = np.repeat(idx, N)              # af.repeat(1,1,N).view(B,N*N,F) sources
    part2_rows = np.tile(idx, N)                # af.repeat(1,N,1) sources
    pair = np.concatenate([part1_rows, part2_rows]).reshape(N * N, 2)   # cat(dim=1)+view
    r0, r1 = pair[:, 0], pair[:, 1]

    p = np.arange(N * N)
    G0 = np.zeros((N * N, N), np.float32); G0[p, r0] = 1.0
    G1 = np.zeros((N * N, N), np.float32); G1[p, r1] = 1.0
    # matmul-based "(N*N,1) -> (N,N) reshape":  e2d = L @ (e_flat * R)
    Lm = np.zeros((N, N * N), np.float32); Lm[p // N, p] = 1.0
    Rm = np.zeros((N * N, N), np.float32); Rm[p, p % N] = 1.0
    # direction block-mask for the stacked biLSTM recurrence matmul
    dm = np.zeros((2 * B, 2 * CI), np.float32)
    dm[:B, :CI] = 1.0      # forward rows use Whh_f (top half of whh_stack)
    dm[B:, CI:] = 1.0      # backward rows use Whh_b (bottom half)
    return (jnp.asarray(G0), jnp.asarray(G1), jnp.asarray(Lm), jnp.asarray(Rm),
            jnp.asarray(dm))


# ----------------------------------------------------------------------------
# Single fused kernel: af -> edge logits -> masked softmax -> fcc -> biLSTM ->
#                      attention@features -> fc_out -> ELU
# ----------------------------------------------------------------------------
def _gat_fused_kernel(x_ref, adj_ref,
                      w_ref, atop_ref, abot_ref, fcw_ref, fcb_ref,
                      g0_ref, g1_ref, l_ref, r_ref,
                      fccw_ref, fccb_ref,
                      wihf_ref, wihb_ref, whh_ref, bf_ref, bb_ref, dm_ref,
                      woutf_ref, woutb_ref, wouth1_ref, bout_ref,
                      o_ref, fwd_scr, bwd_scr):
    f32 = jnp.float32

    # ---- atom_feature = input @ W, both batch items at once --------------------
    af_all = jnp.dot(x_ref[...], w_ref[...], preferred_element_type=f32)   # (B*N, OUT_F)

    # batched projections reused below
    src_all = jnp.dot(af_all, atop_ref[...], preferred_element_type=f32)   # (B*N, E_OUT)
    dst_all = jnp.dot(af_all, abot_ref[...], preferred_element_type=f32)   # (B*N, E_OUT)
    s_all = jnp.dot(af_all, fccw_ref[...], preferred_element_type=f32)     # (B*N, 1)

    G0 = g0_ref[...]
    G1 = g1_ref[...]
    Lm = l_ref[...]
    Rm = r_ref[...]
    fc_w = fcw_ref[...]

    hns = []
    h1s = []
    for b in range(B):                       # static unroll, B is a compile-time constant
        af_b = af_all[b * N:(b + 1) * N, :]                                 # (N, OUT_F)
        src_b = src_all[b * N:(b + 1) * N, :]
        dst_b = dst_all[b * N:(b + 1) * N, :]

        # e == fc(leaky(atom_trans @ a)), using the exact torch index structure (G0/G1)
        eh = _leaky(jnp.dot(G0, src_b, preferred_element_type=f32)
                    + jnp.dot(G1, dst_b, preferred_element_type=f32))       # (N*N, E_OUT)
        e_flat = jnp.dot(eh, fc_w, preferred_element_type=f32)              # (N*N, 1)
        e2d = (jnp.dot(Lm, e_flat * Rm, preferred_element_type=f32)
               + fcb_ref[...])                                              # (N, N)

        # attention = softmax(where(adj > 0, e, -9e15), dim=-1)
        adj_b = adj_ref[b]                                                  # (N, N)
        logits = jnp.where(adj_b > 0, e2d, jnp.full_like(e2d, NEG_BIG))
        m = jnp.max(logits, axis=-1, keepdims=True)
        pe = jnp.exp(logits - m)
        att = pe / jnp.sum(pe, axis=-1, keepdims=True)                      # (N, N)
        # TODO(synk): nn.Dropout(args.gnn_dropout) applied as eval-mode identity.

        # hn[i,j] = att[i,j] * (af[i,:]@fcc_w) + fcc_b   (af indexed by row i, matching
        # atom_feature.unsqueeze(2).expand(-1,-1,N,-1) in the torch code)
        s_b = s_all[b * N:(b + 1) * N, :]                                   # (N, 1)
        hn = _leaky(att * s_b + fccb_ref[...])                              # (N, N)

        h1 = jnp.dot(att, af_b, preferred_element_type=f32)                 # (N, OUT_F)
        hns.append(hn)
        h1s.append(h1)

    # ---- bidirectional LSTM over N timesteps, both directions x both batches ---
    # advanced together as one stacked (2B, .) state (rows: [fwd_b0, fwd_b1, bwd_b0, bwd_b1])
    hn_all = jnp.concatenate(hns, axis=0)                                   # (B*N, N)
    xf = (jnp.dot(hn_all, wihf_ref[...], preferred_element_type=f32)
          + bf_ref[...])                                                    # (B*N, 4*CI)
    xb = (jnp.dot(hn_all, wihb_ref[...], preferred_element_type=f32)
          + bb_ref[...])                                                    # (B*N, 4*CI)
    whh = whh_ref[...]                                                      # (2*CI, 4*CI)
    dirmask = dm_ref[...]                                                   # (2*B, 2*CI)

    hs = jnp.zeros((2 * B, CI), f32)
    cs = jnp.zeros((2 * B, CI), f32)
    for step in range(N):                    # static unroll: N is a compile-time constant
        t = N - 1 - step                     # backward direction input index
        rows = ([xf[b * N + step: b * N + step + 1, :] for b in range(B)]
                + [xb[b * N + t: b * N + t + 1, :] for b in range(B)])
        x_s = jnp.concatenate(rows, axis=0)                                 # (2*B, 4*CI)
        # block-diagonal state so one matmul applies Whh_f to fwd rows, Whh_b to bwd rows
        hwide = jnp.concatenate([hs, hs], axis=1) * dirmask                 # (2*B, 2*CI)
        g = x_s + jnp.dot(hwide, whh, preferred_element_type=f32)           # (2*B, 4*CI)
        i_g = jax.nn.sigmoid(g[:, 0 * CI:1 * CI])
        f_g = jax.nn.sigmoid(g[:, 1 * CI:2 * CI])
        g_g = jnp.tanh(g[:, 2 * CI:3 * CI])
        o_g = jax.nn.sigmoid(g[:, 3 * CI:4 * CI])
        cs = f_g * cs + i_g * g_g
        hs = o_g * jnp.tanh(cs)
        # store per-direction outputs into VMEM scratch (bounds live ranges)
        for b in range(B):
            fwd_scr[b * N + step: b * N + step + 1, :] = hs[b:b + 1, :]
            bwd_scr[b * N + t: b * N + t + 1, :] = hs[B + b:B + b + 1, :]

    # ---- fc_out([leaky(lstm_fwd) | leaky(lstm_bwd) | att@af]) + ELU -------------
    # fc_out's weight is pre-split so no lane-axis concat is needed.
    h1_all = jnp.concatenate(h1s, axis=0)                                   # (B*N, OUT_F)
    out = (jnp.dot(_leaky(fwd_scr[...]), woutf_ref[...], preferred_element_type=f32)
           + jnp.dot(_leaky(bwd_scr[...]), woutb_ref[...], preferred_element_type=f32)
           + jnp.dot(h1_all, wouth1_ref[...], preferred_element_type=f32)
           + bout_ref[...])                                                 # (B*N, OUT_F)
    o_ref[...] = jnp.where(out > 0, out, jnp.exp(out) - 1.0)                # ELU(alpha=1)


# ----------------------------------------------------------------------------
# Forward pass wrapper (single pallas_call, no grid; everything stays in VMEM)
# ----------------------------------------------------------------------------
def gat_layer_forward(x, adj, p):
    G0, G1, Lm, Rm, dirmask = _selection_constants()

    # cheap wrapper-side weight prep (constant-folded under jit)
    a_top = p["a"][:OUT_F, :]
    a_bot = p["a"][OUT_F:, :]
    whh_stack = jnp.concatenate([p["whh_f"], p["whh_b"]], axis=0)      # (2*CI, 4*CI)
    wout_f = p["wout"][0:CI, :]
    wout_b = p["wout"][CI:2 * CI, :]
    wout_h1 = p["wout"][2 * CI:, :]

    x2d = x.reshape(B * N, IN_F)

    out2d = pl.pallas_call(
        _gat_fused_kernel,
        out_shape=jax.ShapeDtypeStruct((B * N, OUT_F), jnp.float32),
        scratch_shapes=[
            pltpu.VMEM((B * N, CI), jnp.float32),   # forward-direction LSTM outputs
            pltpu.VMEM((B * N, CI), jnp.float32),   # backward-direction LSTM outputs
        ],
    )(x2d, adj,
      p["W"], a_top, a_bot, p["fc_w"], p["fc_b"],
      G0, G1, Lm, Rm,
      p["fcc_w"], p["fcc_b"],
      p["wih_f"], p["wih_b"], whh_stack, p["b_f"], p["b_b"], dirmask,
      wout_f, wout_b, wout_h1, p["bout"])

    return out2d.reshape(B, N, OUT_F)


# ----------------------------------------------------------------------------
# Pure-JAX literal transcription of the torch forward (correctness reference)
# ----------------------------------------------------------------------------
def gat_reference(x, adj, p):
    af = jnp.matmul(x, p["W"])                                             # (B,N,F)
    part1 = jnp.tile(af, (1, 1, N)).reshape(B, N * N, OUT_F)
    part2 = jnp.tile(af, (1, N, 1))
    atom_trans = jnp.concatenate([part1, part2], axis=1).reshape(B, N, N, 2 * OUT_F)
    e = _leaky(jnp.matmul(atom_trans, p["a"]))
    e = (jnp.matmul(e, p["fc_w"]) + p["fc_b"])[..., 0]                     # squeeze(3)
    logits = jnp.where(adj > 0, e, jnp.full_like(e, NEG_BIG))
    att = jax.nn.softmax(logits, axis=-1)
    at_input = att[..., None] * af[:, :, None, :]
    hn = _leaky((jnp.matmul(at_input, p["fcc_w"]) + p["fcc_b"])[..., 0])   # (B,N,N)

    def cell(x_t, h, c, wih, whh, bias):
        g = x_t @ wih + h @ whh + bias
        i = jax.nn.sigmoid(g[:, 0 * CI:1 * CI])
        f = jax.nn.sigmoid(g[:, 1 * CI:2 * CI])
        gg = jnp.tanh(g[:, 2 * CI:3 * CI])
        o = jax.nn.sigmoid(g[:, 3 * CI:4 * CI])
        c = f * c + i * gg
        return o * jnp.tanh(c), c

    hf = jnp.zeros((B, CI), jnp.float32); cf = jnp.zeros((B, CI), jnp.float32)
    hb = jnp.zeros((B, CI), jnp.float32); cb = jnp.zeros((B, CI), jnp.float32)
    fwd = [None] * N
    bwd = [None] * N
    for t in range(N):
        hf, cf = cell(hn[:, t, :], hf, cf, p["wih_f"], p["whh_f"], p["b_f"])
        fwd[t] = hf
        tb = N - 1 - t
        hb, cb = cell(hn[:, tb, :], hb, cb, p["wih_b"], p["whh_b"], p["b_b"])
        bwd[tb] = hb
    lstm_out = jnp.concatenate([jnp.stack(fwd, axis=1), jnp.stack(bwd, axis=1)], axis=-1)
    hn2 = _leaky(lstm_out)                                                 # (B,N,2*CI)
    h1 = jnp.matmul(att, af)                                               # (B,N,F)
    cat = jnp.concatenate([hn2, h1], axis=-1)
    out = jnp.matmul(cat, p["wout"]) + p["bout"]
    return jnp.where(out > 0, out, jnp.exp(out) - 1.0)


def init_params(key):
    ks = jax.random.split(key, 14)
    rnd = lambda k, shape: 0.1 * jax.random.normal(k, shape, jnp.float32)
    return {
        "W": rnd(ks[0], (IN_F, OUT_F)),                 # self.W
        "a": rnd(ks[1], (2 * OUT_F, E_OUT)),            # self.a
        "fc_w": rnd(ks[2], (E_OUT, 1)),                 # fc.weight.T
        "fc_b": rnd(ks[3], (1, 1)),                     # fc.bias
        "fcc_w": rnd(ks[4], (OUT_F, 1)),                # fcc.weight.T
        "fcc_b": rnd(ks[5], (1, 1)),                    # fcc.bias
        "wih_f": rnd(ks[6], (N, 4 * CI)),               # lstm weight_ih_l0.T (gate order i,f,g,o)
        "whh_f": rnd(ks[7], (CI, 4 * CI)),              # lstm weight_hh_l0.T
        "b_f": rnd(ks[8], (1, 4 * CI)),                 # bias_ih_l0 + bias_hh_l0 (folded)
        "wih_b": rnd(ks[9], (N, 4 * CI)),               # reverse direction
        "whh_b": rnd(ks[10], (CI, 4 * CI)),
        "b_b": rnd(ks[11], (1, 4 * CI)),
        "wout": rnd(ks[12], (2 * CI + OUT_F, OUT_F)),   # fc_out.weight.T
        "bout": rnd(ks[13], (1, OUT_F)),                # fc_out.bias
    }


if __name__ == "__main__":
    key = jax.random.PRNGKey(0)
    kx, ka, kp = jax.random.split(key, 3)

    x = jax.random.normal(kx, (B, N, IN_F), jnp.float32)
    adj = (jax.random.uniform(ka, (B, N, N)) > 0.4).astype(jnp.float32)
    adj = jnp.maximum(adj, jnp.eye(N, dtype=jnp.float32)[None, :, :])   # self loops
    params = init_params(kp)

    fwd = jax.jit(lambda xx, aa: gat_layer_forward(xx, aa, params))
    out = jax.block_until_ready(fwd(x, adj))

    assert out.shape == (B, N, OUT_F), out.shape
    assert bool(jnp.all(jnp.isfinite(out)))

    ref = jax.jit(lambda xx, aa: gat_reference(xx, aa, params))(x, adj)
    np.testing.assert_allclose(np.asarray(out), np.asarray(ref), rtol=3e-2, atol=3e-2)

    print("KERNEL_OK")
</pallas_src>

<mosaic_0001>
module attributes {stable_mosaic.version = 11 : i64} {
  func.func @_gat_fused_kernel(%arg0: memref<16x16xf32, #tpu.memory_space<vmem>>, %arg1: memref<2x8x8xf32, #tpu.memory_space<vmem>>, %arg2: memref<16x32xf32, #tpu.memory_space<vmem>>, %arg3: memref<32x16xf32, #tpu.memory_space<vmem>>, %arg4: memref<32x16xf32, #tpu.memory_space<vmem>>, %arg5: memref<16x1xf32, #tpu.memory_space<vmem>>, %arg6: memref<1x1xf32, #tpu.memory_space<vmem>>, %arg7: memref<64x8xf32, #tpu.memory_space<vmem>>, %arg8: memref<64x8xf32, #tpu.memory_space<vmem>>, %arg9: memref<8x64xf32, #tpu.memory_space<vmem>>, %arg10: memref<64x8xf32, #tpu.memory_space<vmem>>, %arg11: memref<32x1xf32, #tpu.memory_space<vmem>>, %arg12: memref<1x1xf32, #tpu.memory_space<vmem>>, %arg13: memref<8x32xf32, #tpu.memory_space<vmem>>, %arg14: memref<8x32xf32, #tpu.memory_space<vmem>>, %arg15: memref<16x32xf32, #tpu.memory_space<vmem>>, %arg16: memref<1x32xf32, #tpu.memory_space<vmem>>, %arg17: memref<1x32xf32, #tpu.memory_space<vmem>>, %arg18: memref<4x16xf32, #tpu.memory_space<vmem>>, %arg19: memref<8x32xf32, #tpu.memory_space<vmem>>, %arg20: memref<8x32xf32, #tpu.memory_space<vmem>>, %arg21: memref<32x32xf32, #tpu.memory_space<vmem>>, %arg22: memref<1x32xf32, #tpu.memory_space<vmem>>, %arg23: memref<16x32xf32, #tpu.memory_space<vmem>>, %arg24: memref<16x8xf32, #tpu.memory_space<vmem>>, %arg25: memref<16x8xf32, #tpu.memory_space<vmem>>) attributes {dimension_semantics = [], scalar_prefetch = 0 : i64, scratch_operands = 2 : i64, tpu.core_type = #tpu.core_type<tc>} {
    %c0 = arith.constant 0 : index
    %c0_0 = arith.constant 0 : index
    %0 = vector.load %arg0[%c0, %c0_0] : memref<16x16xf32, #tpu.memory_space<vmem>>, vector<16x16xf32>
    %c0_1 = arith.constant 0 : index
    %c0_2 = arith.constant 0 : index
    %1 = vector.load %arg2[%c0_1, %c0_2] : memref<16x32xf32, #tpu.memory_space<vmem>>, vector<16x32xf32>
    %cst = arith.constant dense<0.000000e+00> : vector<16x32xf32>
    %2 = tpu.matmul %0, %1, %cst {dimension_numbers = #tpu.dot_dimension_numbers<[1], [0], [0], [1], [0, 0, 1, 1], [], []>} : vector<16x16xf32>, vector<16x32xf32>, vector<16x32xf32> -> vector<16x32xf32>
    %c0_3 = arith.constant 0 : index
    %c0_4 = arith.constant 0 : index
    %3 = vector.load %arg3[%c0_3, %c0_4] : memref<32x16xf32, #tpu.memory_space<vmem>>, vector<32x16xf32>
    %cst_5 = arith.constant dense<0.000000e+00> : vector<16x16xf32>
    %4 = tpu.matmul %2, %3, %cst_5 {dimension_numbers = #tpu.dot_dimension_numbers<[1], [0], [0], [1], [0, 0, 1, 1], [], []>} : vector<16x32xf32>, vector<32x16xf32>, vector<16x16xf32> -> vector<16x16xf32>
    %c0_6 = arith.constant 0 : index
    %c0_7 = arith.constant 0 : index
    %5 = vector.load %arg4[%c0_6, %c0_7] : memref<32x16xf32, #tpu.memory_space<vmem>>, vector<32x16xf32>
    %cst_8 = arith.constant dense<0.000000e+00> : vector<16x16xf32>
    %6 = tpu.matmul %2, %5, %cst_8 {dimension_numbers = #tpu.dot_dimension_numbers<[1], [0], [0], [1], [0, 0, 1, 1], [], []>} : vector<16x32xf32>, vector<32x16xf32>, vector<16x16xf32> -> vector<16x16xf32>
    %c0_9 = arith.constant 0 : index
    %c0_10 = arith.constant 0 : index
    %7 = vector.load %arg11[%c0_9, %c0_10] : memref<32x1xf32, #tpu.memory_space<vmem>>, vector<32x1xf32>
    %cst_11 = arith.constant dense<0.000000e+00> : vector<16x1xf32>
    %8 = tpu.matmul %2, %7, %cst_11 {dimension_numbers = #tpu.dot_dimension_numbers<[1], [0], [0], [1], [0, 0, 1, 1], [], []>} : vector<16x32xf32>, vector<32x1xf32>, vector<16x1xf32> -> vector<16x1xf32>
    %c0_12 = arith.constant 0 : index
    %c0_13 = arith.constant 0 : index
    %9 = vector.load %arg7[%c0_12, %c0_13] : memref<64x8xf32, #tpu.memory_space<vmem>>, vector<64x8xf32>
    %c0_14 = arith.constant 0 : index
    %c0_15 = arith.constant 0 : index
    %10 = vector.load %arg8[%c0_14, %c0_15] : memref<64x8xf32, #tpu.memory_space<vmem>>, vector<64x8xf32>
    %c0_16 = arith.constant 0 : index
    %c0_17 = arith.constant 0 : index
    %11 = vector.load %arg9[%c0_16, %c0_17] : memref<8x64xf32, #tpu.memory_space<vmem>>, vector<8x64xf32>
    %c0_18 = arith.constant 0 : index
    %c0_19 = arith.constant 0 : index
    %12 = vector.load %arg10[%c0_18, %c0_19] : memref<64x8xf32, #tpu.memory_space<vmem>>, vector<64x8xf32>
    %c0_20 = arith.constant 0 : index
    %c0_21 = arith.constant 0 : index
    %13 = vector.load %arg5[%c0_20, %c0_21] : memref<16x1xf32, #tpu.memory_space<vmem>>, vector<16x1xf32>
    %14 = vector.extract_strided_slice %2 {offsets = [0, 0], sizes = [8, 32], strides = [1, 1]} : vector<16x32xf32> to vector<8x32xf32>
    %15 = vector.extract_strided_slice %4 {offsets = [0, 0], sizes = [8, 16], strides = [1, 1]} : vector<16x16xf32> to vector<8x16xf32>
    %16 = vector.extract_strided_slice %6 {offsets = [0, 0], sizes = [8, 16], strides = [1, 1]} : vector<16x16xf32> to vector<8x16xf32>
    %cst_22 = arith.constant dense<0.000000e+00> : vector<64x16xf32>
    %17 = tpu.matmul %9, %15, %cst_22 {dimension_numbers = #tpu.dot_dimension_numbers<[1], [0], [0], [1], [0, 0, 1, 1], [], []>} : vector<64x8xf32>, vector<8x16xf32>, vector<64x16xf32> -> vector<64x16xf32>
    %cst_23 = arith.constant dense<0.000000e+00> : vector<64x16xf32>
    %18 = tpu.matmul %10, %16, %cst_23 {dimension_numbers = #tpu.dot_dimension_numbers<[1], [0], [0], [1], [0, 0, 1, 1], [], []>} : vector<64x8xf32>, vector<8x16xf32>, vector<64x16xf32> -> vector<64x16xf32>
    %19 = arith.addf %17, %18 : vector<64x16xf32>
    %cst_24 = arith.constant 0.000000e+00 : f32
    %20 = vector.broadcast %cst_24 : f32 to vector<64x16xf32>
    %21 = arith.cmpf ogt, %19, %20 : vector<64x16xf32>
    %cst_25 = arith.constant 0.00999999977 : f32
    %22 = vector.broadcast %cst_25 : f32 to vector<64x16xf32>
    %23 = arith.mulf %22, %19 : vector<64x16xf32>
    %24 = arith.select %21, %19, %23 : vector<64x16xi1>, vector<64x16xf32>
    %cst_26 = arith.constant dense<0.000000e+00> : vector<64x1xf32>
    %25 = tpu.matmul %24, %13, %cst_26 {dimension_numbers = #tpu.dot_dimension_numbers<[1], [0], [0], [1], [0, 0, 1, 1], [], []>} : vector<64x16xf32>, vector<16x1xf32>, vector<64x1xf32> -> vector<64x1xf32>
    %26 = vector.broadcast %25 : vector<64x1xf32> to vector<64x8xf32>
    %27 = arith.mulf %26, %12 : vector<64x8xf32>
    %cst_27 = arith.constant dense<0.000000e+00> : vector<8x8xf32>
    %28 = tpu.matmul %11, %27, %cst_27 {dimension_numbers = #tpu.dot_dimension_numbers<[1], [0], [0], [1], [0, 0, 1, 1], [], []>} : vector<8x64xf32>, vector<64x8xf32>, vector<8x8xf32> -> vector<8x8xf32>
    %c0_28 = arith.constant 0 : index
    %c0_29 = arith.constant 0 : index
    %29 = vector.load %arg6[%c0_28, %c0_29] : memref<1x1xf32, #tpu.memory_space<vmem>>, vector<1x1xf32>
    %30 = vector.broadcast %29 : vector<1x1xf32> to vector<8x8xf32>
    %31 = arith.addf %28, %30 : vector<8x8xf32>
    %c0_30 = arith.constant 0 : index
    %c0_31 = arith.constant 0 : index
    %c0_32 = arith.constant 0 : index
    %32 = vector.load %arg1[%c0_30, %c0_31, %c0_32] : memref<2x8x8xf32, #tpu.memory_space<vmem>>, vector<1x8x8xf32>
    %33 = vector.shape_cast %32 : vector<1x8x8xf32> to vector<8x8xf32>
    %cst_33 = arith.constant 0.000000e+00 : f32
    %34 = vector.broadcast %cst_33 : f32 to vector<8x8xf32>
    %35 = arith.cmpf ogt, %33, %34 : vector<8x8xf32>
    %cst_34 = arith.constant -9.000000e+15 : f32
    %36 = vector.broadcast %cst_34 : f32 to vector<8x8xf32>
    %37 = arith.select %35, %31, %36 : vector<8x8xi1>, vector<8x8xf32>
    %cst_35 = arith.constant dense<0xFF800000> : vector<8xf32>
    %38 = vector.multi_reduction <maximumf>, %37, %cst_35 [1] : vector<8x8xf32> to vector<8xf32>
    %39 = vector.shape_cast %38 : vector<8xf32> to vector<8x1xf32>
    %40 = vector.broadcast %39 : vector<8x1xf32> to vector<8x8xf32>
    %41 = arith.subf %37, %40 : vector<8x8xf32>
    %42 = math.exp %41 : vector<8x8xf32>
    %cst_36 = arith.constant dense<0.000000e+00> : vector<8xf32>
    %43 = vector.multi_reduction <add>, %42, %cst_36 [1] : vector<8x8xf32> to vector<8xf32>
    %44 = vector.shape_cast %43 : vector<8xf32> to vector<8x1xf32>
    %45 = vector.broadcast %44 : vector<8x1xf32> to vector<8x8xf32>
    %46 = arith.divf %42, %45 : vector<8x8xf32>
    %47 = vector.extract_strided_slice %8 {offsets = [0, 0], sizes = [8, 1], strides = [1, 1]} : vector<16x1xf32> to vector<8x1xf32>
    %48 = vector.broadcast %47 : vector<8x1xf32> to vector<8x8xf32>
    %49 = arith.mulf %46, %48 : vector<8x8xf32>
    %c0_37 = arith.constant 0 : index
    %c0_38 = arith.constant 0 : index
    %50 = vector.load %arg12[%c0_37, %c0_38] : memref<1x1xf32, #tpu.memory_space<vmem>>, vector<1x1xf32>
    %51 = vector.broadcast %50 : vector<1x1xf32> to vector<8x8xf32>
    %52 = arith.addf %49, %51 : vector<8x8xf32>
    %cst_39 = arith.constant 0.000000e+00 : f32
    %53 = vector.broadcast %cst_39 : f32 to vector<8x8xf32>
    %54 = arith.cmpf ogt, %52, %53 : vector<8x8xf32>
    %cst_40 = arith.constant 0.00999999977 : f32
    %55 = vector.broadcast %cst_40 : f32 to vector<8x8xf32>
    %56 = arith.mulf %55, %52 : vector<8x8xf32>
    %57 = arith.select %54, %52, %56 : vector<8x8xi1>, vector<8x8xf32>
    %cst_41 = arith.constant dense<0.000000e+00> : vector<8x32xf32>
    %58 = tpu.matmul %46, %14, %cst_41 {dimension_numbers = #tpu.dot_dimension_numbers<[1], [0], [0], [1], [0, 0, 1, 1], [], []>} : vector<8x8xf32>, vector<8x32xf32>, vector<8x32xf32> -> vector<8x32xf32>
    %59 = vector.extract_strided_slice %2 {offsets = [8, 0], sizes = [8, 32], strides = [1, 1]} : vector<16x32xf32> to vector<8x32xf32>
    %60 = vector.extract_strided_slice %4 {offsets = [8, 0], sizes = [8, 16], strides = [1, 1]} : vector<16x16xf32> to vector<8x16xf32>
    %61 = vector.extract_strided_slice %6 {offsets = [8, 0], sizes = [8, 16], strides = [1, 1]} : vector<16x16xf32> to vector<8x16xf32>
    %cst_42 = arith.constant dense<0.000000e+00> : vector<64x16xf32>
    %62 = tpu.matmul %9, %60, %cst_42 {dimension_numbers = #tpu.dot_dimension_numbers<[1], [0], [0], [1], [0, 0, 1, 1], [], []>} : vector<64x8xf32>, vector<8x16xf32>, vector<64x16xf32> -> vector<64x16xf32>
    %cst_43 = arith.constant dense<0.000000e+00> : vector<64x16xf32>
    %63 = tpu.matmul %10, %61, %cst_43 {dimension_numbers = #tpu.dot_dimension_numbers<[1], [0], [0], [1], [0, 0, 1, 1], [], []>} : vector<64x8xf32>, vector<8x16xf32>, vector<64x16xf32> -> vector<64x16xf32>
    %64 = arith.addf %62, %63 : vector<64x16xf32>
    %cst_44 = arith.constant 0.000000e+00 : f32
    %65 = vector.broadcast %cst_44 : f32 to vector<64x16xf32>
    %66 = arith.cmpf ogt, %64, %65 : vector<64x16xf32>
    %cst_45 = arith.constant 0.00999999977 : f32
    %67 = vector.broadcast %cst_45 : f32 to vector<64x16xf32>
    %68 = arith.mulf %67, %64 : vector<64x16xf32>
    %69 = arith.select %66, %64, %68 : vector<64x16xi1>, vector<64x16xf32>
    %cst_46 = arith.constant dense<0.000000e+00> : vector<64x1xf32>
    %70 = tpu.matmul %69, %13, %cst_46 {dimension_numbers = #tpu.dot_dimension_numbers<[1], [0], [0], [1], [0, 0, 1, 1], [], []>} : vector<64x16xf32>, vector<16x1xf32>, vector<64x1xf32> -> vector<64x1xf32>
    %71 = vector.broadcast %70 : vector<64x1xf32> to vector<64x8xf32>
    %72 = arith.mulf %71, %12 : vector<64x8xf32>
    %cst_47 = arith.constant dense<0.000000e+00> : vector<8x8xf32>
    %73 = tpu.matmul %11, %72, %cst_47 {dimension_numbers = #tpu.dot_dimension_numbers<[1], [0], [0], [1], [0, 0, 1, 1], [], []>} : vector<8x64xf32>, vector<64x8xf32>, vector<8x8xf32> -> vector<8x8xf32>
    %c0_48 = arith.constant 0 : index
    %c0_49 = arith.constant 0 : index
    %74 = vector.load %arg6[%c0_48, %c0_49] : memref<1x1xf32, #tpu.memory_space<vmem>>, vector<1x1xf32>
    %75 = vector.broadcast %74 : vector<1x1xf32> to vector<8x8xf32>
    %76 = arith.addf %73, %75 : vector<8x8xf32>
    %c1 = arith.constant 1 : index
    %c0_50 = arith.constant 0 : index
    %c0_51 = arith.constant 0 : index
    %77 = vector.load %arg1[%c1, %c0_50, %c0_51] : memref<2x8x8xf32, #tpu.memory_space<vmem>>, vector<1x8x8xf32>
    %78 = vector.shape_cast %77 : vector<1x8x8xf32> to vector<8x8xf32>
    %cst_52 = arith.constant 0.000000e+00 : f32
    %79 = vector.broadcast %cst_52 : f32 to vector<8x8xf32>
    %80 = arith.cmpf ogt, %78, %79 : vector<8x8xf32>
    %cst_53 = arith.constant -9.000000e+15 : f32
    %81 = vector.broadcast %cst_53 : f32 to vector<8x8xf32>
    %82 = arith.select %80, %76, %81 : vector<8x8xi1>, vector<8x8xf32>
    %cst_54 = arith.constant dense<0xFF800000> : vector<8xf32>
    %83 = vector.multi_reduction <maximumf>, %82, %cst_54 [1] : vector<8x8xf32> to vector<8xf32>
    %84 = vector.shape_cast %83 : vector<8xf32> to vector<8x1xf32>
    %85 = vector.broadcast %84 : vector<8x1xf32> to vector<8x8xf32>
    %86 = arith.subf %82, %85 : vector<8x8xf32>
    %87 = math.exp %86 : vector<8x8xf32>
    %cst_55 = arith.constant dense<0.000000e+00> : vector<8xf32>
    %88 = vector.multi_reduction <add>, %87, %cst_55 [1] : vector<8x8xf32> to vector<8xf32>
    %89 = vector.shape_cast %88 : vector<8xf32> to vector<8x1xf32>
    %90 = vector.broadcast %89 : vector<8x1xf32> to vector<8x8xf32>
    %91 = arith.divf %87, %90 : vector<8x8xf32>
    %92 = vector.extract_strided_slice %8 {offsets = [8, 0], sizes = [8, 1], strides = [1, 1]} : vector<16x1xf32> to vector<8x1xf32>
    %93 = vector.broadcast %92 : vector<8x1xf32> to vector<8x8xf32>
    %94 = arith.mulf %91, %93 : vector<8x8xf32>
    %c0_56 = arith.constant 0 : index
    %c0_57 = arith.constant 0 : index
    %95 = vector.load %arg12[%c0_56, %c0_57] : memref<1x1xf32, #tpu.memory_space<vmem>>, vector<1x1xf32>
    %96 = vector.broadcast %95 : vector<1x1xf32> to vector<8x8xf32>
    %97 = arith.addf %94, %96 : vector<8x8xf32>
    %cst_58 = arith.constant 0.000000e+00 : f32
    %98 = vector.broadcast %cst_58 : f32 to vector<8x8xf32>
    %99 = arith.cmpf ogt, %97, %98 : vector<8x8xf32>
    %cst_59 = arith.constant 0.00999999977 : f32
    %100 = vector.broadcast %cst_59 : f32 to vector<8x8xf32>
    %101 = arith.mulf %100, %97 : vector<8x8xf32>
    %102 = arith.select %99, %97, %101 : vector<8x8xi1>, vector<8x8xf32>
    %cst_60 = arith.constant dense<0.000000e+00> : vector<8x32xf32>
    %103 = tpu.matmul %91, %59, %cst_60 {dimension_numbers = #tpu.dot_dimension_numbers<[1], [0], [0], [1], [0, 0, 1, 1], [], []>} : vector<8x8xf32>, vector<8x32xf32>, vector<8x32xf32> -> vector<8x32xf32>
    %104 = tpu.concatenate %57, %102 in 0 : vector<8x8xf32>, vector<8x8xf32> -> vector<16x8xf32>
    %c0_61 = arith.constant 0 : index
    %c0_62 = arith.constant 0 : index
    %105 = vector.load %arg13[%c0_61, %c0_62] : memref<8x32xf32, #tpu.memory_space<vmem>>, vector<8x32xf32>
    %cst_63 = arith.constant dense<0.000000e+00> : vector<16x32xf32>
    %106 = tpu.matmul %104, %105, %cst_63 {dimension_numbers = #tpu.dot_dimension_numbers<[1], [0], [0], [1], [0, 0, 1, 1], [], []>} : vector<16x8xf32>, vector<8x32xf32>, vector<16x32xf32> -> vector<16x32xf32>
    %c0_64 = arith.constant 0 : index
    %c0_65 = arith.constant 0 : index
    %107 = vector.load %arg16[%c0_64, %c0_65] : memref<1x32xf32, #tpu.memory_space<vmem>>, vector<1x32xf32>
    %108 = vector.broadcast %107 : vector<1x32xf32> to vector<16x32xf32>
    %109 = arith.addf %106, %108 : vector<16x32xf32>
    %c0_66 = arith.constant 0 : index
    %c0_67 = arith.constant 0 : index
    %110 = vector.load %arg14[%c0_66, %c0_67] : memref<8x32xf32, #tpu.memory_space<vmem>>, vector<8x32xf32>
    %cst_68 = arith.constant dense<0.000000e+00> : vector<16x32xf32>
    %111 = tpu.matmul %104, %110, %cst_68 {dimension_numbers = #tpu.dot_dimension_numbers<[1], [0], [0], [1], [0, 0, 1, 1], [], []>} : vector<16x8xf32>, vector<8x32xf32>, vector<16x32xf32> -> vector<16x32xf32>
    %c0_69 = arith.constant 0 : index
    %c0_70 = arith.constant 0 : index
    %112 = vector.load %arg17[%c0_69, %c0_70] : memref<1x32xf32, #tpu.memory_space<vmem>>, vector<1x32xf32>
    %113 = vector.broadcast %112 : vector<1x32xf32> to vector<16x32xf32>
    %114 = arith.addf %111, %113 : vector<16x32xf32>
    %c0_71 = arith.constant 0 : index
    %c0_72 = arith.constant 0 : index
    %115 = vector.load %arg15[%c0_71, %c0_72] : memref<16x32xf32, #tpu.memory_space<vmem>>, vector<16x32xf32>
    %c0_73 = arith.constant 0 : index
    %c0_74 = arith.constant 0 : index
    %116 = vector.load %arg18[%c0_73, %c0_74] : memref<4x16xf32, #tpu.memory_space<vmem>>, vector<4x16xf32>
    %cst_75 = arith.constant 0.000000e+00 : f32
    %117 = vector.broadcast %cst_75 : f32 to vector<4x8xf32>
    %cst_76 = arith.constant 0.000000e+00 : f32
    %118 = vector.broadcast %cst_76 : f32 to vector<4x8xf32>
    %119 = vector.extract_strided_slice %109 {offsets = [0, 0], sizes = [1, 32], strides = [1, 1]} : vector<16x32xf32> to vector<1x32xf32>
    %120 = vector.extract_strided_slice %109 {offsets = [8, 0], sizes = [1, 32], strides = [1, 1]} : vector<16x32xf32> to vector<1x32xf32>
    %121 = vector.extract_strided_slice %114 {offsets = [7, 0], sizes = [1, 32], strides = [1, 1]} : vector<16x32xf32> to vector<1x32xf32>
    %122 = vector.extract_strided_slice %114 {offsets = [15, 0], sizes = [1, 32], strides = [1, 1]} : vector<16x32xf32> to vector<1x32xf32>
    %123 = tpu.concatenate %119, %120, %121, %122 in 0 : vector<1x32xf32>, vector<1x32xf32>, vector<1x32xf32>, vector<1x32xf32> -> vector<4x32xf32>
    %124 = tpu.concatenate %117, %117 in 1 : vector<4x8xf32>, vector<4x8xf32> -> vector<4x16xf32>
    %125 = arith.mulf %124, %116 : vector<4x16xf32>
    %cst_77 = arith.constant dense<0.000000e+00> : vector<4x32xf32>
    %126 = tpu.matmul %125, %115, %cst_77 {dimension_numbers = #tpu.dot_dimension_numbers<[1], [0], [0], [1], [0, 0, 1, 1], [], []>} : vector<4x16xf32>, vector<16x32xf32>, vector<4x32xf32> -> vector<4x32xf32>
    %127 = arith.addf %123, %126 : vector<4x32xf32>
    %128 = vector.extract_strided_slice %127 {offsets = [0, 0], sizes = [4, 8], strides = [1, 1]} : vector<4x32xf32> to vector<4x8xf32>
    %129 = arith.negf %128 : vector<4x8xf32>
    %130 = math.exp %129 : vector<4x8xf32>
    %cst_78 = arith.constant 1.000000e+00 : f32
    %131 = vector.broadcast %cst_78 : f32 to vector<4x8xf32>
    %132 = arith.addf %131, %130 : vector<4x8xf32>
    %133 = arith.divf %131, %132 : vector<4x8xf32>
    %134 = vector.extract_strided_slice %127 {offsets = [0, 8], sizes = [4, 8], strides = [1, 1]} : vector<4x32xf32> to vector<4x8xf32>
    %135 = arith.negf %134 : vector<4x8xf32>
    %136 = math.exp %135 : vector<4x8xf32>
    %cst_79 = arith.constant 1.000000e+00 : f32
    %137 = vector.broadcast %cst_79 : f32 to vector<4x8xf32>
    %138 = arith.addf %137, %136 : vector<4x8xf32>
    %139 = arith.divf %137, %138 : vector<4x8xf32>
    %140 = vector.extract_strided_slice %127 {offsets = [0, 16], sizes = [4, 8], strides = [1, 1]} : vector<4x32xf32> to vector<4x8xf32>
    %141 = math.tanh %140 : vector<4x8xf32>
    %142 = vector.extract_strided_slice %127 {offsets = [0, 24], sizes = [4, 8], strides = [1, 1]} : vector<4x32xf32> to vector<4x8xf32>
    %143 = arith.negf %142 : vector<4x8xf32>
    %144 = math.exp %143 : vector<4x8xf32>
    %cst_80 = arith.constant 1.000000e+00 : f32
    %145 = vector.broadcast %cst_80 : f32 to vector<4x8xf32>
    %146 = arith.addf %145, %144 : vector<4x8xf32>
    %147 = arith.divf %145, %146 : vector<4x8xf32>
    %148 = arith.mulf %139, %118 : vector<4x8xf32>
    %149 = arith.mulf %133, %141 : vector<4x8xf32>
    %150 = arith.addf %148, %149 : vector<4x8xf32>
    %151 = math.tanh %150 : vector<4x8xf32>
    %152 = arith.mulf %147, %151 : vector<4x8xf32>
    %153 = vector.extract_strided_slice %152 {offsets = [0, 0], sizes = [1, 8], strides = [1, 1]} : vector<4x8xf32> to vector<1x8xf32>
    %c0_81 = arith.constant 0 : index
    %c0_82 = arith.constant 0 : index
    %154 = vector.load %arg24[%c0_81, %c0_82] : memref<16x8xf32, #tpu.memory_space<vmem>>, vector<1x8xf32>
    tpu.vector_store %arg24[%c0_81, %c0_82], %153 {strides = array<i32>} : memref<16x8xf32, #tpu.memory_space<vmem>>, vector<1x8xf32>,
    %155 = vector.extract_strided_slice %152 {offsets = [2, 0], sizes = [1, 8], strides = [1, 1]} : vector<4x8xf32> to vector<1x8xf32>
    %c7 = arith.constant 7 : index
    %c0_83 = arith.constant 0 : index
    %156 = vector.load %arg25[%c7, %c0_83] : memref<16x8xf32, #tpu.memory_space<vmem>>, vector<1x8xf32>
    tpu.vector_store %arg25[%c7, %c0_83], %155 {strides = array<i32>} : memref<16x8xf32, #tpu.memory_space<vmem>>, vector<1x8xf32>,
    %157 = vector.extract_strided_slice %152 {offsets = [1, 0], sizes = [1, 8], strides = [1, 1]} : vector<4x8xf32> to vector<1x8xf32>
    %c8 = arith.constant 8 : index
    %c0_84 = arith.constant 0 : index
    %158 = vector.load %arg24[%c8, %c0_84] : memref<16x8xf32, #tpu.memory_space<vmem>>, vector<1x8xf32>
    tpu.vector_store %arg24[%c8, %c0_84], %157 {strides = array<i32>} : memref<16x8xf32, #tpu.memory_space<vmem>>, vector<1x8xf32>,
    %159 = vector.extract_strided_slice %152 {offsets = [3, 0], sizes = [1, 8], strides = [1, 1]} : vector<4x8xf32> to vector<1x8xf32>
    %c15 = arith.constant 15 : index
    %c0_85 = arith.constant 0 : index
    %160 = vector.load %arg25[%c15, %c0_85] : memref<16x8xf32, #tpu.memory_space<vmem>>, vector<1x8xf32>
    tpu.vector_store %arg25[%c15, %c0_85], %159 {strides = array<i32>} : memref<16x8xf32, #tpu.memory_space<vmem>>, vector<1x8xf32>,
    %161 = vector.extract_strided_slice %109 {offsets = [1, 0], sizes = [1, 32], strides = [1, 1]} : vector<16x32xf32> to vector<1x32xf32>
    %162 = vector.extract_strided_slice %109 {offsets = [9, 0], sizes = [1, 32], strides = [1, 1]} : vector<16x32xf32> to vector<1x32xf32>
    %163 = vector.extract_strided_slice %114 {offsets = [6, 0], sizes = [1, 32], strides = [1, 1]} : vector<16x32xf32> to vector<1x32xf32>
    %164 = vector.extract_strided_slice %114 {offsets = [14, 0], sizes = [1, 32], strides = [1, 1]} : vector<16x32xf32> to vector<1x32xf32>
    %165 = tpu.concatenate %161, %162, %163, %164 in 0 : vector<1x32xf32>, vector<1x32xf32>, vector<1x32xf32>, vector<1x32xf32> -> vector<4x32xf32>
    %166 = tpu.concatenate %152, %152 in 1 : vector<4x8xf32>, vector<4x8xf32> -> vector<4x16xf32>
    %167 = arith.mulf %166, %116 : vector<4x16xf32>
    %cst_86 = arith.constant dense<0.000000e+00> : vector<4x32xf32>
    %168 = tpu.matmul %167, %115, %cst_86 {dimension_numbers = #tpu.dot_dimension_numbers<[1], [0], [0], [1], [0, 0, 1, 1], [], []>} : vector<4x16xf32>, vector<16x32xf32>, vector<4x32xf32> -> vector<4x32xf32>
    %169 = arith.addf %165, %168 : vector<4x32xf32>
    %170 = vector.extract_strided_slice %169 {offsets = [0, 0], sizes = [4, 8], strides = [1, 1]} : vector<4x32xf32> to vector<4x8xf32>
    %171 = arith.negf %170 : vector<4x8xf32>
    %172 = math.exp %171 : vector<4x8xf32>
    %cst_87 = arith.constant 1.000000e+00 : f32
    %173 = vector.broadcast %cst_87 : f32 to vector<4x8xf32>
    %174 = arith.addf %173, %172 : vector<4x8xf32>
    %175 = arith.divf %173, %174 : vector<4x8xf32>
    %176 = vector.extract_strided_slice %169 {offsets = [0, 8], sizes = [4, 8], strides = [1, 1]} : vector<4x32xf32> to vector<4x8xf32>
    %177 = arith.negf %176 : vector<4x8xf32>
    %178 = math.exp %177 : vector<4x8xf32>
    %cst_88 = arith.constant 1.000000e+00 : f32
    %179 = vector.broadcast %cst_88 : f32 to vector<4x8xf32>
    %180 = arith.addf %179, %178 : vector<4x8xf32>
    %181 = arith.divf %179, %180 : vector<4x8xf32>
    %182 = vector.extract_strided_slice %169 {offsets = [0, 16], sizes = [4, 8], strides = [1, 1]} : vector<4x32xf32> to vector<4x8xf32>
    %183 = math.tanh %182 : vector<4x8xf32>
    %184 = vector.extract_strided_slice %169 {offsets = [0, 24], sizes = [4, 8], strides = [1, 1]} : vector<4x32xf32> to vector<4x8xf32>
    %185 = arith.negf %184 : vector<4x8xf32>
    %186 = math.exp %185 : vector<4x8xf32>
    %cst_89 = arith.constant 1.000000e+00 : f32
    %187 = vector.broadcast %cst_89 : f32 to vector<4x8xf32>
    %188 = arith.addf %187, %186 : vector<4x8xf32>
    %189 = arith.divf %187, %188 : vector<4x8xf32>
    %190 = arith.mulf %181, %150 : vector<4x8xf32>
    %191 = arith.mulf %175, %183 : vector<4x8xf32>
    %192 = arith.addf %190, %191 : vector<4x8xf32>
    %193 = math.tanh %192 : vector<4x8xf32>
    %194 = arith.mulf %189, %193 : vector<4x8xf32>
    %195 = vector.extract_strided_slice %194 {offsets = [0, 0], sizes = [1, 8], strides = [1, 1]} : vector<4x8xf32> to vector<1x8xf32>
    %c1_90 = arith.constant 1 : index
    %c0_91 = arith.constant 0 : index
    %196 = vector.load %arg24[%c1_90, %c0_91] : memref<16x8xf32, #tpu.memory_space<vmem>>, vector<1x8xf32>
    tpu.vector_store %arg24[%c1_90, %c0_91], %195 {strides = array<i32>} : memref<16x8xf32, #tpu.memory_space<vmem>>, vector<1x8xf32>,
    %197 = vector.extract_strided_slice %194 {offsets = [2, 0], sizes = [1, 8], strides = [1, 1]} : vector<4x8xf32> to vector<1x8xf32>
    %c6 = arith.constant 6 : index
    %c0_92 = arith.constant 0 : index
    %198 = vector.load %arg25[%c6, %c0_92] : memref<16x8xf32, #tpu.memory_space<vmem>>, vector<1x8xf32>
    tpu.vector_store %arg25[%c6, %c0_92], %197 {strides = array<i32>} : memref<16x8xf32, #tpu.memory_space<vmem>>, vector<1x8xf32>,
    %199 = vector.extract_strided_slice %194 {offsets = [1, 0], sizes = [1, 8], strides = [1, 1]} : vector<4x8xf32> to vector<1x8xf32>
    %c9 = arith.constant 9 : index
    %c0_93 = arith.constant 0 : index
    %200 = vector.load %arg24[%c9, %c0_93] : memref<16x8xf32, #tpu.memory_space<vmem>>, vector<1x8xf32>
    tpu.vector_store %arg24[%c9, %c0_93], %199 {strides = array<i32>} : memref<16x8xf32, #tpu.memory_space<vmem>>, vector<1x8xf32>,
    %201 = vector.extract_strided_slice %194 {offsets = [3, 0], sizes = [1, 8], strides = [1, 1]} : vector<4x8xf32> to vector<1x8xf32>
    %c14 = arith.constant 14 : index
    %c0_94 = arith.constant 0 : index
    %202 = vector.load %arg25[%c14, %c0_94] : memref<16x8xf32, #tpu.memory_space<vmem>>, vector<1x8xf32>
    tpu.vector_store %arg25[%c14, %c0_94], %201 {strides = array<i32>} : memref<16x8xf32, #tpu.memory_space<vmem>>, vector<1x8xf32>,
    %203 = vector.extract_strided_slice %109 {offsets = [2, 0], sizes = [1, 32], strides = [1, 1]} : vector<16x32xf32> to vector<1x32xf32>
    %204 = vector.extract_strided_slice %109 {offsets = [10, 0], sizes = [1, 32], strides = [1, 1]} : vector<16x32xf32> to vector<1x32xf32>
    %205 = vector.extract_strided_slice %114 {offsets = [5, 0], sizes = [1, 32], strides = [1, 1]} : vector<16x32xf32> to vector<1x32xf32>
    %206 = vector.extract_strided_slice %114 {offsets = [13, 0], sizes = [1, 32], strides = [1, 1]} : vector<16x32xf32> to vector<1x32xf32>
    %207 = tpu.concatenate %203, %204, %205, %206 in 0 : vector<1x32xf32>, vector<1x32xf32>, vector<1x32xf32>, vector<1x32xf32> -> vector<4x32xf32>
    %208 = tpu.concatenate %194, %194 in 1 : vector<4x8xf32>, vector<4x8xf32> -> vector<4x16xf32>
    %209 = arith.mulf %208, %116 : vector<4x16xf32>
    %cst_95 = arith.constant dense<0.000000e+00> : vector<4x32xf32>
    %210 = tpu.matmul %209, %115, %cst_95 {dimension_numbers = #tpu.dot_dimension_numbers<[1], [0], [0], [1], [0, 0, 1, 1], [], []>} : vector<4x16xf32>, vector<16x32xf32>, vector<4x32xf32> -> vector<4x32xf32>
    %211 = arith.addf %207, %210 : vector<4x32xf32>
    %212 = vector.extract_strided_slice %211 {offsets = [0, 0], sizes = [4, 8], strides = [1, 1]} : vector<4x32xf32> to vector<4x8xf32>
    %213 = arith.negf %212 : vector<4x8xf32>
    %214 = math.exp %213 : vector<4x8xf32>
    %cst_96 = arith.constant 1.000000e+00 : f32
    %215 = vector.broadcast %cst_96 : f32 to vector<4x8xf32>
    %216 = arith.addf %215, %214 : vector<4x8xf32>
    %217 = arith.divf %215, %216 : vector<4x8xf32>
    %218 = vector.extract_strided_slice %211 {offsets = [0, 8], sizes = [4, 8], strides = [1, 1]} : vector<4x32xf32> to vector<4x8xf32>
    %219 = arith.negf %218 : vector<4x8xf32>
    %220 = math.exp %219 : vector<4x8xf32>
    %cst_97 = arith.constant 1.000000e+00 : f32
    %221 = vector.broadcast %cst_97 : f32 to vector<4x8xf32>
    %222 = arith.addf %221, %220 : vector<4x8xf32>
    %223 = arith.divf %221, %222 : vector<4x8xf32>
    %224 = vector.extract_strided_slice %211 {offsets = [0, 16], sizes = [4, 8], strides = [1, 1]} : vector<4x32xf32> to vector<4x8xf32>
    %225 = math.tanh %224 : vector<4x8xf32>
    %226 = vector.extract_strided_slice %211 {offsets = [0, 24], sizes = [4, 8], strides = [1, 1]} : vector<4x32xf32> to vector<4x8xf32>
    %227 = arith.negf %226 : vector<4x8xf32>
    %228 = math.exp %227 : vector<4x8xf32>
    %cst_98 = arith.constant 1.000000e+00 : f32
    %229 = vector.broadcast %cst_98 : f32 to vector<4x8xf32>
    %230 = arith.addf %229, %228 : vector<4x8xf32>
    %231 = arith.divf %229, %230 : vector<4x8xf32>
    %232 = arith.mulf %223, %192 : vector<4x8xf32>
    %233 = arith.mulf %217, %225 : vector<4x8xf32>
    %234 = arith.addf %232, %233 : vector<4x8xf32>
    %235 = math.tanh %234 : vector<4x8xf32>
    %236 = arith.mulf %231, %235 : vector<4x8xf32>
    %237 = vector.extract_strided_slice %236 {offsets = [0, 0], sizes = [1, 8], strides = [1, 1]} : vector<4x8xf32> to vector<1x8xf32>
    %c2 = arith.constant 2 : index
    %c0_99 = arith.constant 0 : index
    %238 = vector.load %arg24[%c2, %c0_99] : memref<16x8xf32, #tpu.memory_space<vmem>>, vector<1x8xf32>
    tpu.vector_store %arg24[%c2, %c0_99], %237 {strides = array<i32>} : memref<16x8xf32, #tpu.memory_space<vmem>>, vector<1x8xf32>,
    %239 = vector.extract_strided_slice %236 {offsets = [2, 0], sizes = [1, 8], strides = [1, 1]} : vector<4x8xf32> to vector<1x8xf32>
    %c5 = arith.constant 5 : index
    %c0_100 = arith.constant 0 : index
    %240 = vector.load %arg25[%c5, %c0_100] : memref<16x8xf32, #tpu.memory_space<vmem>>, vector<1x8xf32>
    tpu.vector_store %arg25[%c5, %c0_100], %239 {strides = array<i32>} : memref<16x8xf32, #tpu.memory_space<vmem>>, vector<1x8xf32>,
    %241 = vector.extract_strided_slice %236 {offsets = [1, 0], sizes = [1, 8], strides = [1, 1]} : vector<4x8xf32> to vector<1x8xf32>
    %c10 = arith.constant 10 : index
    %c0_101 = arith.constant 0 : index
    %242 = vector.load %arg24[%c10, %c0_101] : memref<16x8xf32, #tpu.memory_space<vmem>>, vector<1x8xf32>
    tpu.vector_store %arg24[%c10, %c0_101], %241 {strides = array<i32>} : memref<16x8xf32, #tpu.memory_space<vmem>>, vector<1x8xf32>,
    %243 = vector.extract_strided_slice %236 {offsets = [3, 0], sizes = [1, 8], strides = [1, 1]} : vector<4x8xf32> to vector<1x8xf32>
    %c13 = arith.constant 13 : index
    %c0_102 = arith.constant 0 : index
    %244 = vector.load %arg25[%c13, %c0_102] : memref<16x8xf32, #tpu.memory_space<vmem>>, vector<1x8xf32>
    tpu.vector_store %arg25[%c13, %c0_102], %243 {strides = array<i32>} : memref<16x8xf32, #tpu.memory_space<vmem>>, vector<1x8xf32>,
    %245 = vector.extract_strided_slice %109 {offsets = [3, 0], sizes = [1, 32], strides = [1, 1]} : vector<16x32xf32> to vector<1x32xf32>
    %246 = vector.extract_strided_slice %109 {offsets = [11, 0], sizes = [1, 32], strides = [1, 1]} : vector<16x32xf32> to vector<1x32xf32>
    %247 = vector.extract_strided_slice %114 {offsets = [4, 0], sizes = [1, 32], strides = [1, 1]} : vector<16x32xf32> to vector<1x32xf32>
    %248 = vector.extract_strided_slice %114 {offsets = [12, 0], sizes = [1, 32], strides = [1, 1]} : vector<16x32xf32> to vector<1x32xf32>
    %249 = tpu.concatenate %245, %246, %247, %248 in 0 : vector<1x32xf32>, vector<1x32xf32>, vector<1x32xf32>, vector<1x32xf32> -> vector<4x32xf32>
    %250 = tpu.concatenate %236, %236 in 1 : vector<4x8xf32>, vector<4x8xf32> -> vector<4x16xf32>
    %251 = arith.mulf %250, %116 : vector<4x16xf32>
    %cst_103 = arith.constant dense<0.000000e+00> : vector<4x32xf32>
    %252 = tpu.matmul %251, %115, %cst_103 {dimension_numbers = #tpu.dot_dimension_numbers<[1], [0], [0], [1], [0, 0, 1, 1], [], []>} : vector<4x16xf32>, vector<16x32xf32>, vector<4x32xf32> -> vector<4x32xf32>
    %253 = arith.addf %249, %252 : vector<4x32xf32>
    %254 = vector.extract_strided_slice %253 {offsets = [0, 0], sizes = [4, 8], strides = [1, 1]} : vector<4x32xf32> to vector<4x8xf32>
    %255 = arith.negf %254 : vector<4x8xf32>
    %256 = math.exp %255 : vector<4x8xf32>
    %cst_104 = arith.constant 1.000000e+00 : f32
    %257 = vector.broadcast %cst_104 : f32 to vector<4x8xf32>
    %258 = arith.addf %257, %256 : vector<4x8xf32>
    %259 = arith.divf %257, %258 : vector<4x8xf32>
    %260 = vector.extract_strided_slice %253 {offsets = [0, 8], sizes = [4, 8], strides = [1, 1]} : vector<4x32xf32> to vector<4x8xf32>
    %261 = arith.negf %260 : vector<4x8xf32>
    %262 = math.exp %261 : vector<4x8xf32>
    %cst_105 = arith.constant 1.000000e+00 : f32
    %263 = vector.broadcast %cst_105 : f32 to vector<4x8xf32>
    %264 = arith.addf %263, %262 : vector<4x8xf32>
    %265 = arith.divf %263, %264 : vector<4x8xf32>
    %266 = vector.extract_strided_slice %253 {offsets = [0, 16], sizes = [4, 8], strides = [1, 1]} : vector<4x32xf32> to vector<4x8xf32>
    %267 = math.tanh %266 : vector<4x8xf32>
    %268 = vector.extract_strided_slice %253 {offsets = [0, 24], sizes = [4, 8], strides = [1, 1]} : vector<4x32xf32> to vector<4x8xf32>
    %269 = arith.negf %268 : vector<4x8xf32>
    %270 = math.exp %269 : vector<4x8xf32>
    %cst_106 = arith.constant 1.000000e+00 : f32
    %271 = vector.broadcast %cst_106 : f32 to vector<4x8xf32>
    %272 = arith.addf %271, %270 : vector<4x8xf32>
    %273 = arith.divf %271, %272 : vector<4x8xf32>
    %274 = arith.mulf %265, %234 : vector<4x8xf32>
    %275 = arith.mulf %259, %267 : vector<4x8xf32>
    %276 = arith.addf %274, %275 : vector<4x8xf32>
    %277 = math.tanh %276 : vector<4x8xf32>
    %278 = arith.mulf %273, %277 : vector<4x8xf32>
    %279 = vector.extract_strided_slice %278 {offsets = [0, 0], sizes = [1, 8], strides = [1, 1]} : vector<4x8xf32> to vector<1x8xf32>
    %c3 = arith.constant 3 : index
    %c0_107 = arith.constant 0 : index
    %280 = vector.load %arg24[%c3, %c0_107] : memref<16x8xf32, #tpu.memory_space<vmem>>, vector<1x8xf32>
    tpu.vector_store %arg24[%c3, %c0_107], %279 {strides = array<i32>} : memref<16x8xf32, #tpu.memory_space<vmem>>, vector<1x8xf32>,
    %281 = vector.extract_strided_slice %278 {offsets = [2, 0], sizes = [1, 8], strides = [1, 1]} : vector<4x8xf32> to vector<1x8xf32>
    %c4 = arith.constant 4 : index
    %c0_108 = arith.constant 0 : index
    %282 = vector.load %arg25[%c4, %c0_108] : memref<16x8xf32, #tpu.memory_space<vmem>>, vector<1x8xf32>
    tpu.vector_store %arg25[%c4, %c0_108], %281 {strides = array<i32>} : memref<16x8xf32, #tpu.memory_space<vmem>>, vector<1x8xf32>,
    %283 = vector.extract_strided_slice %278 {offsets = [1, 0], sizes = [1, 8], strides = [1, 1]} : vector<4x8xf32> to vector<1x8xf32>
    %c11 = arith.constant 11 : index
    %c0_109 = arith.constant 0 : index
    %284 = vector.load %arg24[%c11, %c0_109] : memref<16x8xf32, #tpu.memory_space<vmem>>, vector<1x8xf32>
    tpu.vector_store %arg24[%c11, %c0_109], %283 {strides = array<i32>} : memref<16x8xf32, #tpu.memory_space<vmem>>, vector<1x8xf32>,
    %285 = vector.extract_strided_slice %278 {offsets = [3, 0], sizes = [1, 8], strides = [1, 1]} : vector<4x8xf32> to vector<1x8xf32>
    %c12 = arith.constant 12 : index
    %c0_110 = arith.constant 0 : index
    %286 = vector.load %arg25[%c12, %c0_110] : memref<16x8xf32, #tpu.memory_space<vmem>>, vector<1x8xf32>
    tpu.vector_store %arg25[%c12, %c0_110], %285 {strides = array<i32>} : memref<16x8xf32, #tpu.memory_space<vmem>>, vector<1x8xf32>,
    %287 = vector.extract_strided_slice %109 {offsets = [4, 0], sizes = [1, 32], strides = [1, 1]} : vector<16x32xf32> to vector<1x32xf32>
    %288 = vector.extract_strided_slice %109 {offsets = [12, 0], sizes = [1, 32], strides = [1, 1]} : vector<16x32xf32> to vector<1x32xf32>
    %289 = vector.extract_strided_slice %114 {offsets = [3, 0], sizes = [1, 32], strides = [1, 1]} : vector<16x32xf32> to vector<1x32xf32>
    %290 = vector.extract_strided_slice %114 {offsets = [11, 0], sizes = [1, 32], strides = [1, 1]} : vector<16x32xf32> to vector<1x32xf32>
    %291 = tpu.concatenate %287, %288, %289, %290 in 0 : vector<1x32xf32>, vector<1x32xf32>, vector<1x32xf32>, vector<1x32xf32> -> vector<4x32xf32>
    %292 = tpu.concatenate %278, %278 in 1 : vector<4x8xf32>, vector<4x8xf32> -> vector<4x16xf32>
    %293 = arith.mulf %292, %116 : vector<4x16xf32>
    %cst_111 = arith.constant dense<0.000000e+00> : vector<4x32xf32>
    %294 = tpu.matmul %293, %115, %cst_111 {dimension_numbers = #tpu.dot_dimension_numbers<[1], [0], [0], [1], [0, 0, 1, 1], [], []>} : vector<4x16xf32>, vector<16x32xf32>, vector<4x32xf32> -> vector<4x32xf32>
    %295 = arith.addf %291, %294 : vector<4x32xf32>
    %296 = vector.extract_strided_slice %295 {offsets = [0, 0], sizes = [4, 8], strides = [1, 1]} : vector<4x32xf32> to vector<4x8xf32>
    %297 = arith.negf %296 : vector<4x8xf32>
    %298 = math.exp %297 : vector<4x8xf32>
    %cst_112 = arith.constant 1.000000e+00 : f32
    %299 = vector.broadcast %cst_112 : f32 to vector<4x8xf32>
    %300 = arith.addf %299, %298 : vector<4x8xf32>
    %301 = arith.divf %299, %300 : vector<4x8xf32>
    %302 = vector.extract_strided_slice %295 {offsets = [0, 8], sizes = [4, 8], strides = [1, 1]} : vector<4x32xf32> to vector<4x8xf32>
    %303 = arith.negf %302 : vector<4x8xf32>
    %304 = math.exp %303 : vector<4x8xf32>
    %cst_113 = arith.constant 1.000000e+00 : f32
    %305 = vector.broadcast %cst_113 : f32 to vector<4x8xf32>
    %306 = arith.addf %305, %304 : vector<4x8xf32>
    %307 = arith.divf %305, %306 : vector<4x8xf32>
    %308 = vector.extract_strided_slice %295 {offsets = [0, 16], sizes = [4, 8], strides = [1, 1]} : vector<4x32xf32> to vector<4x8xf32>
    %309 = math.tanh %308 : vector<4x8xf32>
    %310 = vector.extract_strided_slice %295 {offsets = [0, 24], sizes = [4, 8], strides = [1, 1]} : vector<4x32xf32> to vector<4x8xf32>
    %311 = arith.negf %310 : vector<4x8xf32>
    %312 = math.exp %311 : vector<4x8xf32>
    %cst_114 = arith.constant 1.000000e+00 : f32
    %313 = vector.broadcast %cst_114 : f32 to vector<4x8xf32>
    %314 = arith.addf %313, %312 : vector<4x8xf32>
    %315 = arith.divf %313, %314 : vector<4x8xf32>
    %316 = arith.mulf %307, %276 : vector<4x8xf32>
    %317 = arith.mulf %301, %309 : vector<4x8xf32>
    %318 = arith.addf %316, %317 : vector<4x8xf32>
    %319 = math.tanh %318 : vector<4x8xf32>
    %320 = arith.mulf %315, %319 : vector<4x8xf32>
    %321 = vector.extract_strided_slice %320 {offsets = [0, 0], sizes = [1, 8], strides = [1, 1]} : vector<4x8xf32> to vector<1x8xf32>
    %c4_115 = arith.constant 4 : index
    %c0_116 = arith.constant 0 : index
    %322 = vector.load %arg24[%c4_115, %c0_116] : memref<16x8xf32, #tpu.memory_space<vmem>>, vector<1x8xf32>
    tpu.vector_store %arg24[%c4_115, %c0_116], %321 {strides = array<i32>} : memref<16x8xf32, #tpu.memory_space<vmem>>, vector<1x8xf32>,
    %323 = vector.extract_strided_slice %320 {offsets = [2, 0], sizes = [1, 8], strides = [1, 1]} : vector<4x8xf32> to vector<1x8xf32>
    %c3_117 = arith.constant 3 : index
    %c0_118 = arith.constant 0 : index
    %324 = vector.load %arg25[%c3_117, %c0_118] : memref<16x8xf32, #tpu.memory_space<vmem>>, vector<1x8xf32>
    tpu.vector_store %arg25[%c3_117, %c0_118], %323 {strides = array<i32>} : memref<16x8xf32, #tpu.memory_space<vmem>>, vector<1x8xf32>,
    %325 = vector.extract_strided_slice %320 {offsets = [1, 0], sizes = [1, 8], strides = [1, 1]} : vector<4x8xf32> to vector<1x8xf32>
    %c12_119 = arith.constant 12 : index
    %c0_120 = arith.constant 0 : index
    %326 = vector.load %arg24[%c12_119, %c0_120] : memref<16x8xf32, #tpu.memory_space<vmem>>, vector<1x8xf32>
    tpu.vector_store %arg24[%c12_119, %c0_120], %325 {strides = array<i32>} : memref<16x8xf32, #tpu.memory_space<vmem>>, vector<1x8xf32>,
    %327 = vector.extract_strided_slice %320 {offsets = [3, 0], sizes = [1, 8], strides = [1, 1]} : vector<4x8xf32> to vector<1x8xf32>
    %c11_121 = arith.constant 11 : index
    %c0_122 = arith.constant 0 : index
    %328 = vector.load %arg25[%c11_121, %c0_122] : memref<16x8xf32, #tpu.memory_space<vmem>>, vector<1x8xf32>
    tpu.vector_store %arg25[%c11_121, %c0_122], %327 {strides = array<i32>} : memref<16x8xf32, #tpu.memory_space<vmem>>, vector<1x8xf32>,
    %329 = vector.extract_strided_slice %109 {offsets = [5, 0], sizes = [1, 32], strides = [1, 1]} : vector<16x32xf32> to vector<1x32xf32>
    %330 = vector.extract_strided_slice %109 {offsets = [13, 0], sizes = [1, 32], strides = [1, 1]} : vector<16x32xf32> to vector<1x32xf32>
    %331 = vector.extract_strided_slice %114 {offsets = [2, 0], sizes = [1, 32], strides = [1, 1]} : vector<16x32xf32> to vector<1x32xf32>
    %332 = vector.extract_strided_slice %114 {offsets = [10, 0], sizes = [1, 32], strides = [1, 1]} : vector<16x32xf32> to vector<1x32xf32>
    %333 = tpu.concatenate %329, %330, %331, %332 in 0 : vector<1x32xf32>, vector<1x32xf32>, vector<1x32xf32>, vector<1x32xf32> -> vector<4x32xf32>
    %334 = tpu.concatenate %320, %320 in 1 : vector<4x8xf32>, vector<4x8xf32> -> vector<4x16xf32>
    %335 = arith.mulf %334, %116 : vector<4x16xf32>
    %cst_123 = arith.constant dense<0.000000e+00> : vector<4x32xf32>
    %336 = tpu.matmul %335, %115, %cst_123 {dimension_numbers = #tpu.dot_dimension_numbers<[1], [0], [0], [1], [0, 0, 1, 1], [], []>} : vector<4x16xf32>, vector<16x32xf32>, vector<4x32xf32> -> vector<4x32xf32>
    %337 = arith.addf %333, %336 : vector<4x32xf32>
    %338 = vector.extract_strided_slice %337 {offsets = [0, 0], sizes = [4, 8], strides = [1, 1]} : vector<4x32xf32> to vector<4x8xf32>
    %339 = arith.negf %338 : vector<4x8xf32>
    %340 = math.exp %339 : vector<4x8xf32>
    %cst_124 = arith.constant 1.000000e+00 : f32
    %341 = vector.broadcast %cst_124 : f32 to vector<4x8xf32>
    %342 = arith.addf %341, %340 : vector<4x8xf32>
    %343 = arith.divf %341, %342 : vector<4x8xf32>
    %344 = vector.extract_strided_slice %337 {offsets = [0, 8], sizes = [4, 8], strides = [1, 1]} : vector<4x32xf32> to vector<4x8xf32>
    %345 = arith.negf %344 : vector<4x8xf32>
    %346 = math.exp %345 : vector<4x8xf32>
    %cst_125 = arith.constant 1.000000e+00 : f32
    %347 = vector.broadcast %cst_125 : f32 to vector<4x8xf32>
    %348 = arith.addf %347, %346 : vector<4x8xf32>
    %349 = arith.divf %347, %348 : vector<4x8xf32>
    %350 = vector.extract_strided_slice %337 {offsets = [0, 16], sizes = [4, 8], strides = [1, 1]} : vector<4x32xf32> to vector<4x8xf32>
    %351 = math.tanh %350 : vector<4x8xf32>
    %352 = vector.extract_strided_slice %337 {offsets = [0, 24], sizes = [4, 8], strides = [1, 1]} : vector<4x32xf32> to vector<4x8xf32>
    %353 = arith.negf %352 : vector<4x8xf32>
    %354 = math.exp %353 : vector<4x8xf32>
    %cst_126 = arith.constant 1.000000e+00 : f32
    %355 = vector.broadcast %cst_126 : f32 to vector<4x8xf32>
    %356 = arith.addf %355, %354 : vector<4x8xf32>
    %357 = arith.divf %355, %356 : vector<4x8xf32>
    %358 = arith.mulf %349, %318 : vector<4x8xf32>
    %359 = arith.mulf %343, %351 : vector<4x8xf32>
    %360 = arith.addf %358, %359 : vector<4x8xf32>
    %361 = math.tanh %360 : vector<4x8xf32>
    %362 = arith.mulf %357, %361 : vector<4x8xf32>
    %363 = vector.extract_strided_slice %362 {offsets = [0, 0], sizes = [1, 8], strides = [1, 1]} : vector<4x8xf32> to vector<1x8xf32>
    %c5_127 = arith.constant 5 : index
    %c0_128 = arith.constant 0 : index
    %364 = vector.load %arg24[%c5_127, %c0_128] : memref<16x8xf32, #tpu.memory_space<vmem>>, vector<1x8xf32>
    tpu.vector_store %arg24[%c5_127, %c0_128], %363 {strides = array<i32>} : memref<16x8xf32, #tpu.memory_space<vmem>>, vector<1x8xf32>,
    %365 = vector.extract_strided_slice %362 {offsets = [2, 0], sizes = [1, 8], strides = [1, 1]} : vector<4x8xf32> to vector<1x8xf32>
    %c2_129 = arith.constant 2 : index
    %c0_130 = arith.constant 0 : index
    %366 = vector.load %arg25[%c2_129, %c0_130] : memref<16x8xf32, #tpu.memory_space<vmem>>, vector<1x8xf32>
    tpu.vector_store %arg25[%c2_129, %c0_130], %365 {strides = array<i32>} : memref<16x8xf32, #tpu.memory_space<vmem>>, vector<1x8xf32>,
    %367 = vector.extract_strided_slice %362 {offsets = [1, 0], sizes = [1, 8], strides = [1, 1]} : vector<4x8xf32> to vector<1x8xf32>
    %c13_131 = arith.constant 13 : index
    %c0_132 = arith.constant 0 : index
    %368 = vector.load %arg24[%c13_131, %c0_132] : memref<16x8xf32, #tpu.memory_space<vmem>>, vector<1x8xf32>
    tpu.vector_store %arg24[%c13_131, %c0_132], %367 {strides = array<i32>} : memref<16x8xf32, #tpu.memory_space<vmem>>, vector<1x8xf32>,
    %369 = vector.extract_strided_slice %362 {offsets = [3, 0], sizes = [1, 8], strides = [1, 1]} : vector<4x8xf32> to vector<1x8xf32>
    %c10_133 = arith.constant 10 : index
    %c0_134 = arith.constant 0 : index
    %370 = vector.load %arg25[%c10_133, %c0_134] : memref<16x8xf32, #tpu.memory_space<vmem>>, vector<1x8xf32>
    tpu.vector_store %arg25[%c10_133, %c0_134], %369 {strides = array<i32>} : memref<16x8xf32, #tpu.memory_space<vmem>>, vector<1x8xf32>,
    %371 = vector.extract_strided_slice %109 {offsets = [6, 0], sizes = [1, 32], strides = [1, 1]} : vector<16x32xf32> to vector<1x32xf32>
    %372 = vector.extract_strided_slice %109 {offsets = [14, 0], sizes = [1, 32], strides = [1, 1]} : vector<16x32xf32> to vector<1x32xf32>
    %373 = vector.extract_strided_slice %114 {offsets = [1, 0], sizes = [1, 32], strides = [1, 1]} : vector<16x32xf32> to vector<1x32xf32>
    %374 = vector.extract_strided_slice %114 {offsets = [9, 0], sizes = [1, 32], strides = [1, 1]} : vector<16x32xf32> to vector<1x32xf32>
    %375 = tpu.concatenate %371, %372, %373, %374 in 0 : vector<1x32xf32>, vector<1x32xf32>, vector<1x32xf32>, vector<1x32xf32> -> vector<4x32xf32>
    %376 = tpu.concatenate %362, %362 in 1 : vector<4x8xf32>, vector<4x8xf32> -> vector<4x16xf32>
    %377 = arith.mulf %376, %116 : vector<4x16xf32>
    %cst_135 = arith.constant dense<0.000000e+00> : vector<4x32xf32>
    %378 = tpu.matmul %377, %115, %cst_135 {dimension_numbers = #tpu.dot_dimension_numbers<[1], [0], [0], [1], [0, 0, 1, 1], [], []>} : vector<4x16xf32>, vector<16x32xf32>, vector<4x32xf32> -> vector<4x32xf32>
    %379 = arith.addf %375, %378 : vector<4x32xf32>
    %380 = vector.extract_strided_slice %379 {offsets = [0, 0], sizes = [4, 8], strides = [1, 1]} : vector<4x32xf32> to vector<4x8xf32>
    %381 = arith.negf %380 : vector<4x8xf32>
    %382 = math.exp %381 : vector<4x8xf32>
    %cst_136 = arith.constant 1.000000e+00 : f32
    %383 = vector.broadcast %cst_136 : f32 to vector<4x8xf32>
    %384 = arith.addf %383, %382 : vector<4x8xf32>
    %385 = arith.divf %383, %384 : vector<4x8xf32>
    %386 = vector.extract_strided_slice %379 {offsets = [0, 8], sizes = [4, 8], strides = [1, 1]} : vector<4x32xf32> to vector<4x8xf32>
    %387 = arith.negf %386 : vector<4x8xf32>
    %388 = math.exp %387 : vector<4x8xf32>
    %cst_137 = arith.constant 1.000000e+00 : f32
    %389 = vector.broadcast %cst_137 : f32 to vector<4x8xf32>
    %390 = arith.addf %389, %388 : vector<4x8xf32>
    %391 = arith.divf %389, %390 : vector<4x8xf32>
    %392 = vector.extract_strided_slice %379 {offsets = [0, 16], sizes = [4, 8], strides = [1, 1]} : vector<4x32xf32> to vector<4x8xf32>
    %393 = math.tanh %392 : vector<4x8xf32>
    %394 = vector.extract_strided_slice %379 {offsets = [0, 24], sizes = [4, 8], strides = [1, 1]} : vector<4x32xf32> to vector<4x8xf32>
    %395 = arith.negf %394 : vector<4x8xf32>
    %396 = math.exp %395 : vector<4x8xf32>
    %cst_138 = arith.constant 1.000000e+00 : f32
    %397 = vector.broadcast %cst_138 : f32 to vector<4x8xf32>
    %398 = arith.addf %397, %396 : vector<4x8xf32>
    %399 = arith.divf %397, %398 : vector<4x8xf32>
    %400 = arith.mulf %391, %360 : vector<4x8xf32>
    %401 = arith.mulf %385, %393 : vector<4x8xf32>
    %402 = arith.addf %400, %401 : vector<4x8xf32>
    %403 = math.tanh %402 : vector<4x8xf32>
    %404 = arith.mulf %399, %403 : vector<4x8xf32>
    %405 = vector.extract_strided_slice %404 {offsets = [0, 0], sizes = [1, 8], strides = [1, 1]} : vector<4x8xf32> to vector<1x8xf32>
    %c6_139 = arith.constant 6 : index
    %c0_140 = arith.constant 0 : index
    %406 = vector.load %arg24[%c6_139, %c0_140] : memref<16x8xf32, #tpu.memory_space<vmem>>, vector<1x8xf32>
    tpu.vector_store %arg24[%c6_139, %c0_140], %405 {strides = array<i32>} : memref<16x8xf32, #tpu.memory_space<vmem>>, vector<1x8xf32>,
    %407 = vector.extract_strided_slice %404 {offsets = [2, 0], sizes = [1, 8], strides = [1, 1]} : vector<4x8xf32> to vector<1x8xf32>
    %c1_141 = arith.constant 1 : index
    %c0_142 = arith.constant 0 : index
    %408 = vector.load %arg25[%c1_141, %c0_142] : memref<16x8xf32, #tpu.memory_space<vmem>>, vector<1x8xf32>
    tpu.vector_store %arg25[%c1_141, %c0_142], %407 {strides = array<i32>} : memref<16x8xf32, #tpu.memory_space<vmem>>, vector<1x8xf32>,
    %409 = vector.extract_strided_slice %404 {offsets = [1, 0], sizes = [1, 8], strides = [1, 1]} : vector<4x8xf32> to vector<1x8xf32>
    %c14_143 = arith.constant 14 : index
    %c0_144 = arith.constant 0 : index
    %410 = vector.load %arg24[%c14_143, %c0_144] : memref<16x8xf32, #tpu.memory_space<vmem>>, vector<1x8xf32>
    tpu.vector_store %arg24[%c14_143, %c0_144], %409 {strides = array<i32>} : memref<16x8xf32, #tpu.memory_space<vmem>>, vector<1x8xf32>,
    %411 = vector.extract_strided_slice %404 {offsets = [3, 0], sizes = [1, 8], strides = [1, 1]} : vector<4x8xf32> to vector<1x8xf32>
    %c9_145 = arith.constant 9 : index
    %c0_146 = arith.constant 0 : index
    %412 = vector.load %arg25[%c9_145, %c0_146] : memref<16x8xf32, #tpu.memory_space<vmem>>, vector<1x8xf32>
    tpu.vector_store %arg25[%c9_145, %c0_146], %411 {strides = array<i32>} : memref<16x8xf32, #tpu.memory_space<vmem>>, vector<1x8xf32>,
    %413 = vector.extract_strided_slice %109 {offsets = [7, 0], sizes = [1, 32], strides = [1, 1]} : vector<16x32xf32> to vector<1x32xf32>
    %414 = vector.extract_strided_slice %109 {offsets = [15, 0], sizes = [1, 32], strides = [1, 1]} : vector<16x32xf32> to vector<1x32xf32>
    %415 = vector.extract_strided_slice %114 {offsets = [0, 0], sizes = [1, 32], strides = [1, 1]} : vector<16x32xf32> to vector<1x32xf32>
    %416 = vector.extract_strided_slice %114 {offsets = [8, 0], sizes = [1, 32], strides = [1, 1]} : vector<16x32xf32> to vector<1x32xf32>
    %417 = tpu.concatenate %413, %414, %415, %416 in 0 : vector<1x32xf32>, vector<1x32xf32>, vector<1x32xf32>, vector<1x32xf32> -> vector<4x32xf32>
    %418 = tpu.concatenate %404, %404 in 1 : vector<4x8xf32>, vector<4x8xf32> -> vector<4x16xf32>
    %419 = arith.mulf %418, %116 : vector<4x16xf32>
    %cst_147 = arith.constant dense<0.000000e+00> : vector<4x32xf32>
    %420 = tpu.matmul %419, %115, %cst_147 {dimension_numbers = #tpu.dot_dimension_numbers<[1], [0], [0], [1], [0, 0, 1, 1], [], []>} : vector<4x16xf32>, vector<16x32xf32>, vector<4x32xf32> -> vector<4x32xf32>
    %421 = arith.addf %417, %420 : vector<4x32xf32>
    %422 = vector.extract_strided_slice %421 {offsets = [0, 0], sizes = [4, 8], strides = [1, 1]} : vector<4x32xf32> to vector<4x8xf32>
    %423 = arith.negf %422 : vector<4x8xf32>
    %424 = math.exp %423 : vector<4x8xf32>
    %cst_148 = arith.constant 1.000000e+00 : f32
    %425 = vector.broadcast %cst_148 : f32 to vector<4x8xf32>
    %426 = arith.addf %425, %424 : vector<4x8xf32>
    %427 = arith.divf %425, %426 : vector<4x8xf32>
    %428 = vector.extract_strided_slice %421 {offsets = [0, 8], sizes = [4, 8], strides = [1, 1]} : vector<4x32xf32> to vector<4x8xf32>
    %429 = arith.negf %428 : vector<4x8xf32>
    %430 = math.exp %429 : vector<4x8xf32>
    %cst_149 = arith.constant 1.000000e+00 : f32
    %431 = vector.broadcast %cst_149 : f32 to vector<4x8xf32>
    %432 = arith.addf %431, %430 : vector<4x8xf32>
    %433 = arith.divf %431, %432 : vector<4x8xf32>
    %434 = vector.extract_strided_slice %421 {offsets = [0, 16], sizes = [4, 8], strides = [1, 1]} : vector<4x32xf32> to vector<4x8xf32>
    %435 = math.tanh %434 : vector<4x8xf32>
    %436 = vector.extract_strided_slice %421 {offsets = [0, 24], sizes = [4, 8], strides = [1, 1]} : vector<4x32xf32> to vector<4x8xf32>
    %437 = arith.negf %436 : vector<4x8xf32>
    %438 = math.exp %437 : vector<4x8xf32>
    %cst_150 = arith.constant 1.000000e+00 : f32
    %439 = vector.broadcast %cst_150 : f32 to vector<4x8xf32>
    %440 = arith.addf %439, %438 : vector<4x8xf32>
    %441 = arith.divf %439, %440 : vector<4x8xf32>
    %442 = arith.mulf %433, %402 : vector<4x8xf32>
    %443 = arith.mulf %427, %435 : vector<4x8xf32>
    %444 = arith.addf %442, %443 : vector<4x8xf32>
    %445 = math.tanh %444 : vector<4x8xf32>
    %446 = arith.mulf %441, %445 : vector<4x8xf32>
    %447 = vector.extract_strided_slice %446 {offsets = [0, 0], sizes = [1, 8], strides = [1, 1]} : vector<4x8xf32> to vector<1x8xf32>
    %c7_151 = arith.constant 7 : index
    %c0_152 = arith.constant 0 : index
    %448 = vector.load %arg24[%c7_151, %c0_152] : memref<16x8xf32, #tpu.memory_space<vmem>>, vector<1x8xf32>
    tpu.vector_store %arg24[%c7_151, %c0_152], %447 {strides = array<i32>} : memref<16x8xf32, #tpu.memory_space<vmem>>, vector<1x8xf32>,
    %449 = vector.extract_strided_slice %446 {offsets = [2, 0], sizes = [1, 8], strides = [1, 1]} : vector<4x8xf32> to vector<1x8xf32>
    %c0_153 = arith.constant 0 : index
    %c0_154 = arith.constant 0 : index
    %450 = vector.load %arg25[%c0_153, %c0_154] : memref<16x8xf32, #tpu.memory_space<vmem>>, vector<1x8xf32>
    tpu.vector_store %arg25[%c0_153, %c0_154], %449 {strides = array<i32>} : memref<16x8xf32, #tpu.memory_space<vmem>>, vector<1x8xf32>,
    %451 = vector.extract_strided_slice %446 {offsets = [1, 0], sizes = [1, 8], strides = [1, 1]} : vector<4x8xf32> to vector<1x8xf32>
    %c15_155 = arith.constant 15 : index
    %c0_156 = arith.constant 0 : index
    %452 = vector.load %arg24[%c15_155, %c0_156] : memref<16x8xf32, #tpu.memory_space<vmem>>, vector<1x8xf32>
    tpu.vector_store %arg24[%c15_155, %c0_156], %451 {strides = array<i32>} : memref<16x8xf32, #tpu.memory_space<vmem>>, vector<1x8xf32>,
    %453 = vector.extract_strided_slice %446 {offsets = [3, 0], sizes = [1, 8], strides = [1, 1]} : vector<4x8xf32> to vector<1x8xf32>
    %c8_157 = arith.constant 8 : index
    %c0_158 = arith.constant 0 : index
    %454 = vector.load %arg25[%c8_157, %c0_158] : memref<16x8xf32, #tpu.memory_space<vmem>>, vector<1x8xf32>
    tpu.vector_store %arg25[%c8_157, %c0_158], %453 {strides = array<i32>} : memref<16x8xf32, #tpu.memory_space<vmem>>, vector<1x8xf32>,
    %455 = tpu.concatenate %58, %103 in 0 : vector<8x32xf32>, vector<8x32xf32> -> vector<16x32xf32>
    %c0_159 = arith.constant 0 : index
    %c0_160 = arith.constant 0 : index
    %456 = vector.load %arg24[%c0_159, %c0_160] : memref<16x8xf32, #tpu.memory_space<vmem>>, vector<16x8xf32>
    %cst_161 = arith.constant 0.000000e+00 : f32
    %457 = vector.broadcast %cst_161 : f32 to vector<16x8xf32>
    %458 = arith.cmpf ogt, %456, %457 : vector<16x8xf32>
    %cst_162 = arith.constant 0.00999999977 : f32
    %459 = vector.broadcast %cst_162 : f32 to vector<16x8xf32>
    %460 = arith.mulf %459, %456 : vector<16x8xf32>
    %461 = arith.select %458, %456, %460 : vector<16x8xi1>, vector<16x8xf32>
    %c0_163 = arith.constant 0 : index
    %c0_164 = arith.constant 0 : index
    %462 = vector.load %arg19[%c0_163, %c0_164] : memref<8x32xf32, #tpu.memory_space<vmem>>, vector<8x32xf32>
    %cst_165 = arith.constant dense<0.000000e+00> : vector<16x32xf32>
    %463 = tpu.matmul %461, %462, %cst_165 {dimension_numbers = #tpu.dot_dimension_numbers<[1], [0], [0], [1], [0, 0, 1, 1], [], []>} : vector<16x8xf32>, vector<8x32xf32>, vector<16x32xf32> -> vector<16x32xf32>
    %c0_166 = arith.constant 0 : index
    %c0_167 = arith.constant 0 : index
    %464 = vector.load %arg25[%c0_166, %c0_167] : memref<16x8xf32, #tpu.memory_space<vmem>>, vector<16x8xf32>
    %cst_168 = arith.constant 0.000000e+00 : f32
    %465 = vector.broadcast %cst_168 : f32 to vector<16x8xf32>
    %466 = arith.cmpf ogt, %464, %465 : vector<16x8xf32>
    %cst_169 = arith.constant 0.00999999977 : f32
    %467 = vector.broadcast %cst_169 : f32 to vector<16x8xf32>
    %468 = arith.mulf %467, %464 : vector<16x8xf32>
    %469 = arith.select %466, %464, %468 : vector<16x8xi1>, vector<16x8xf32>
    %c0_170 = arith.constant 0 : index
    %c0_171 = arith.constant 0 : index
    %470 = vector.load %arg20[%c0_170, %c0_171] : memref<8x32xf32, #tpu.memory_space<vmem>>, vector<8x32xf32>
    %cst_172 = arith.constant dense<0.000000e+00> : vector<16x32xf32>
    %471 = tpu.matmul %469, %470, %cst_172 {dimension_numbers = #tpu.dot_dimension_numbers<[1], [0], [0], [1], [0, 0, 1, 1], [], []>} : vector<16x8xf32>, vector<8x32xf32>, vector<16x32xf32> -> vector<16x32xf32>
    %472 = arith.addf %463, %471 : vector<16x32xf32>
    %c0_173 = arith.constant 0 : index
    %c0_174 = arith.constant 0 : index
    %473 = vector.load %arg21[%c0_173, %c0_174] : memref<32x32xf32, #tpu.memory_space<vmem>>, vector<32x32xf32>
    %cst_175 = arith.constant dense<0.000000e+00> : vector<16x32xf32>
    %474 = tpu.matmul %455, %473, %cst_175 {dimension_numbers = #tpu.dot_dimension_numbers<[1], [0], [0], [1], [0, 0, 1, 1], [], []>} : vector<16x32xf32>, vector<32x32xf32>, vector<16x32xf32> -> vector<16x32xf32>
    %475 = arith.addf %472, %474 : vector<16x32xf32>
    %c0_176 = arith.constant 0 : index
    %c0_177 = arith.constant 0 : index
    %476 = vector.load %arg22[%c0_176, %c0_177] : memref<1x32xf32, #tpu.memory_space<vmem>>, vector<1x32xf32>
    %477 = vector.broadcast %476 : vector<1x32xf32> to vector<16x32xf32>
    %478 = arith.addf %475, %477 : vector<16x32xf32>
    %cst_178 = arith.constant 0.000000e+00 : f32
    %479 = vector.broadcast %cst_178 : f32 to vector<16x32xf32>
    %480 = arith.cmpf ogt, %478, %479 : vector<16x32xf32>
    %481 = math.exp %478 : vector<16x32xf32>
    %cst_179 = arith.constant 1.000000e+00 : f32
    %482 = vector.broadcast %cst_179 : f32 to vector<16x32xf32>
    %483 = arith.subf %481, %482 : vector<16x32xf32>
    %484 = arith.select %480, %478, %483 : vector<16x32xi1>, vector<16x32xf32>
    %c0_180 = arith.constant 0 : index
    %c0_181 = arith.constant 0 : index
    %485 = vector.load %arg23[%c0_180, %c0_181] : memref<16x32xf32, #tpu.memory_space<vmem>>, vector<16x32xf32>
    tpu.vector_store %arg23[%c0_180, %c0_181], %484 {strides = array<i32>} : memref<16x32xf32, #tpu.memory_space<vmem>>, vector<16x32xf32>,
    return
  }
}

</mosaic_0001>

<llo_original>
// kernel: _lambda_.1
$region0: #{_lambda_.1}
  #allocation0 [shape = 'u32[]', space=smem, size = 0x4, offset = 0x4, fixed_abs, tag = 'smem constant byte address 0x4 - core index']
  #allocation1 [shape = 'u32[144,128]{1,0:T(1,128)}', space=vmem, size = 0x12000, scoped, tag = 'internal scratch']
  #allocation2 [shape = 'f32[16,8]{1,0:T(8,128)}', space=vmem, size = 0x2000, scoped, tag = 'scratch operand']
  #allocation3 [shape = 'f32[16,8]{1,0:T(8,128)}', space=vmem, size = 0x2000, scoped, tag = 'scratch operand']
  #allocation4 [shape = 'f32[1,1]{1,0:T(1,128)S(1)}', space=vmem, size = 0x200, scoped, tag = 'scoped memory for _lambda_.1']
  #allocation5 [shape = 'f32[1,1]{1,0:T(1,128)S(1)}', space=vmem, size = 0x200, scoped, tag = 'scoped memory for _lambda_.1']
  %s0 = inlined_call_operand.hbm [shape: f32[16,16], index: 0, kind: input, shape index: {}]
  %s1 = inlined_call_operand.hbm [shape: f32[2,8,8], index: 1, kind: input, shape index: {}]
  %s2 = inlined_call_operand.hbm [shape: f32[16,32], index: 2, kind: input, shape index: {}]
  %s3 = inlined_call_operand.hbm [shape: f32[32,16], index: 3, kind: input, shape index: {}]
  %s4 = inlined_call_operand.hbm [shape: f32[32,16], index: 4, kind: input, shape index: {}]
  %s5 = inlined_call_operand.hbm [shape: f32[16,1], index: 5, kind: input, shape index: {}]
  %s6 = inlined_call_operand.<no memory space> [shape: f32[1,1], index: 6, kind: input, shape index: {}]
  %s7 = inlined_call_operand.hbm [shape: f32[64,8], index: 7, kind: input, shape index: {}]
  %s8 = inlined_call_operand.hbm [shape: f32[64,8], index: 8, kind: input, shape index: {}]
  %s9 = inlined_call_operand.hbm [shape: f32[8,64], index: 9, kind: input, shape index: {}]
  %s10 = inlined_call_operand.hbm [shape: f32[64,8], index: 10, kind: input, shape index: {}]
  %s11 = inlined_call_operand.hbm [shape: f32[32,1], index: 11, kind: input, shape index: {}]
  %s12 = inlined_call_operand.<no memory space> [shape: f32[1,1], index: 12, kind: input, shape index: {}]
  %s13 = inlined_call_operand.hbm [shape: f32[8,32], index: 13, kind: input, shape index: {}]
  %s14 = inlined_call_operand.hbm [shape: f32[8,32], index: 14, kind: input, shape index: {}]
  %s15 = inlined_call_operand.hbm [shape: f32[16,32], index: 15, kind: input, shape index: {}]
  %s16 = inlined_call_operand.hbm [shape: f32[1,32], index: 16, kind: input, shape index: {}]
  %s17 = inlined_call_operand.vmem [shape: f32[1,32], index: 17, kind: input, shape index: {}]
  %s18 = inlined_call_operand.vmem [shape: f32[4,16], index: 18, kind: input, shape index: {}]
  %s19 = inlined_call_operand.hbm [shape: f32[8,32], index: 19, kind: input, shape index: {}]
  %s20 = inlined_call_operand.hbm [shape: f32[8,32], index: 20, kind: input, shape index: {}]
  %s21 = inlined_call_operand.vmem [shape: f32[32,32], index: 21, kind: input, shape index: {}]
  %s22 = inlined_call_operand.vmem [shape: f32[1,32], index: 22, kind: input, shape index: {}]
  %s23 = inlined_call_operand.hbm [shape: f32[16,32], index: 23, kind: output, shape index: {}]
  %s24 = sld [smem:[#allocation0]]
  $region170: #{_lambda_.1} parent=0
    _
  %s26 = ssub.s32 1, %s24
  %s27 = scalar_select 0, %s26, %s24
  %v28 = vstv %s6
  %29 = vst [vmem:[#allocation4] sm:$0x1] %v28
  %v30 = vstv %s12
  %31 = vst [vmem:[#allocation5] sm:$0x1] %v30
  $region1: #{_lambda_.1} parent=0
    #allocation6 [shape = 'u8[8192]{0}', space=vmem, size = 0x2000, scoped, tag = 'input window, operand 0, single buffered']
    #allocation7 [shape = 's32[1]{0}', space=sflag, size = 0x4, scoped, tag = 'scoped memory for _lambda_.1']
    #allocation8 [shape = 's32[1]{0}', space=sflag, size = 0x4, scoped, tag = 'scoped memory for _lambda_.1']
    #allocation9 [shape = 'u8[8192]{0}', space=vmem, size = 0x2000, scoped, tag = 'input window, operand 1, single buffered']
    #allocation10 [shape = 's32[1]{0}', space=sflag, size = 0x4, scoped, tag = 'scoped memory for _lambda_.1']
    #allocation11 [shape = 'u8[8192]{0}', space=vmem, size = 0x2000, scoped, tag = 'input window, operand 2, single buffered']
    #allocation12 [shape = 'u8[16384]{0}', space=vmem, size = 0x4000, scoped, tag = 'input window, operand 3, single buffered']
    #allocation13 [shape = 's32[1]{0}', space=sflag, size = 0x4, scoped, tag = 'scoped memory for _lambda_.1']
    #allocation14 [shape = 'u8[16384]{0}', space=vmem, size = 0x4000, scoped, tag = 'input window, operand 4, single buffered']
    #allocation15 [shape = 'u8[8192]{0}', space=vmem, size = 0x2000, scoped, tag = 'input window, operand 5, single buffered']
    #allocation16 [shape = 's32[1]{0}', space=sflag, size = 0x4, scoped, tag = 'scoped memory for _lambda_.1']
    #allocation17 [shape = 'u8[32768]{0}', space=vmem, size = 0x8000, scoped, tag = 'input window, operand 7, single buffered']
    #allocation18 [shape = 'u8[32768]{0}', space=vmem, size = 0x8000, scoped, tag = 'input window, operand 8, single buffered']
    #allocation19 [shape = 's32[1]{0}', space=sflag, size = 0x4, scoped, tag = 'scoped memory for _lambda_.1']
    #allocation20 [shape = 'u8[4096]{0}', space=vmem, size = 0x1000, scoped, tag = 'input window, operand 9, single buffered']
    #allocation21 [shape = 'u8[32768]{0}', space=vmem, size = 0x8000, scoped, tag = 'input window, operand 10, single buffered']
    #allocation22 [shape = 's32[1]{0}', space=sflag, size = 0x4, scoped, tag = 'scoped memory for _lambda_.1']
    #allocation23 [shape = 'u8[16384]{0}', space=vmem, size = 0x4000, scoped, tag = 'input window, operand 11, single buffered']
    #allocation24 [shape = 'u8[4096]{0}', space=vmem, size = 0x1000, scoped, tag = 'input window, operand 13, single buffered']
    #allocation25 [shape = 's32[1]{0}', space=sflag, size = 0x4, scoped, tag = 'scoped memory for _lambda_.1']
    #allocation26 [shape = 'u8[4096]{0}', space=vmem, size = 0x1000, scoped, tag = 'input window, operand 14, single buffered']
    #allocation27 [shape = 'u8[8192]{0}', space=vmem, size = 0x2000, scoped, tag = 'input window, operand 15, single buffered']
    #allocation28 [shape = 's32[1]{0}', space=sflag, size = 0x4, scoped, tag = 'scoped memory for _lambda_.1']
    #allocation29 [shape = 'u8[512]{0}', space=vmem, size = 0x400, scoped, tag = 'input window, operand 16, single buffered']
    #allocation30 [shape = 'u8[4096]{0}', space=vmem, size = 0x1000, scoped, tag = 'input window, operand 19, single buffered']
    #allocation31 [shape = 's32[1]{0}', space=sflag, size = 0x4, scoped, tag = 'scoped memory for _lambda_.1']
    #allocation32 [shape = 'u8[4096]{0}', space=vmem, size = 0x1000, scoped, tag = 'input window, operand 20, single buffered']
    #allocation33 [shape = 'u8[8192]{0}', space=vmem, size = 0x2000, scoped, tag = 'output window, operand 0, single buffered']
    %32 = vsyncpa [#allocation7], 0
    %33 = vsyncpa [#allocation10], 0
    %34 = vsyncpa [#allocation13], 0
    %35 = vsyncpa [#allocation16], 0
    %36 = vsyncpa [#allocation19], 0
    %37 = vsyncpa [#allocation22], 0
    %38 = vsyncpa [#allocation25], 0
    %39 = vsyncpa [#allocation28], 0
    %40 = vsyncpa [#allocation31], 0
    %41 = vsyncpa [#allocation8], 0
    // Predicated region
    $region2: #{_lambda_.1} parent=1 // pred_check
      _
    $region3: #{_lambda_.1} parent=1 // pred_check_branch
      %43 = sbr.rel (0) target = $region5
    $region4: #{_lambda_.1} parent=1 // pred_region
      %s45 = ssub.s32 256, 256
      %46 = vsyncadd [#allocation7], %s45
      %s47 = sshll.u32 [#allocation6], 4
      %s48 = int_to_ptr.vmem [resolvable:$true] %s47
      %53 = dma.hbm_to_vmem [thread:$0]  %s0, 256, %s48, [#allocation7], 128, 128, 8
    $region5: #{_lambda_.1} parent=1 // pred_fallthru
      _
    // Predicated region
    $region6: #{_lambda_.1} parent=1 // pred_check
      _
    $region7: #{_lambda_.1} parent=1 // pred_check_branch
      %55 = sbr.rel (0) target = $region9
    $region8: #{_lambda_.1} parent=1 // pred_region
      %s57 = ssub.s32 256, 256
      %58 = vsyncadd [#allocation10], %s57
      %s59 = sshll.u32 [#allocation9], 4
      %s60 = int_to_ptr.vmem [resolvable:$true] %s59
      %65 = dma.hbm_to_vmem [thread:$0]  %s1, 256, %s60, [#allocation10], 128, 128, 8
    $region9: #{_lambda_.1} parent=1 // pred_fallthru
      _
    // Predicated region
    $region10: #{_lambda_.1} parent=1 // pred_check
      _
    $region11: #{_lambda_.1} parent=1 // pred_check_branch
      %67 = sbr.rel (0) target = $region13
    $region12: #{_lambda_.1} parent=1 // pred_region
      %s69 = ssub.s32 256, 256
      %70 = vsyncadd [#allocation10], %s69
      %s71 = sshll.u32 [#allocation11], 4
      %s72 = int_to_ptr.vmem [resolvable:$true] %s71
      %77 = dma.hbm_to_vmem [thread:$0]  %s2, 256, %s72, [#allocation10], 128, 128, 8
    $region13: #{_lambda_.1} parent=1 // pred_fallthru
      _
    // Predicated region
    $region14: #{_lambda_.1} parent=1 // pred_check
      _
    $region15: #{_lambda_.1} parent=1 // pred_check_branch
      %79 = sbr.rel (0) target = $region17
    $region16: #{_lambda_.1} parent=1 // pred_region
      %s81 = ssub.s32 512, 512
      %82 = vsyncadd [#allocation13], %s81
      %s83 = sshll.u32 [#allocation12], 4
      %s84 = int_to_ptr.vmem [resolvable:$true] %s83
      %89 = dma.hbm_to_vmem [thread:$0]  %s3, 512, %s84, [#allocation13], 128, 128, 8
    $region17: #{_lambda_.1} parent=1 // pred_fallthru
      _
    // Predicated region
    $region18: #{_lambda_.1} parent=1 // pred_check
      _
    $region19: #{_lambda_.1} parent=1 // pred_check_branch
      %91 = sbr.rel (0) target = $region21
    $region20: #{_lambda_.1} parent=1 // pred_region
      %s93 = ssub.s32 512, 512
      %94 = vsyncadd [#allocation13], %s93
      %s95 = sshll.u32 [#allocation14], 4
      %s96 = int_to_ptr.vmem [resolvable:$true] %s95
      %101 = dma.hbm_to_vmem [thread:$0]  %s4, 512, %s96, [#allocation13], 128, 128, 8
    $region21: #{_lambda_.1} parent=1 // pred_fallthru
      _
    // Predicated region
    $region22: #{_lambda_.1} parent=1 // pred_check
      _
    $region23: #{_lambda_.1} parent=1 // pred_check_branch
      %103 = sbr.rel (0) target = $region25
    $region24: #{_lambda_.1} parent=1 // pred_region
      %s105 = ssub.s32 256, 256
      %106 = vsyncadd [#allocation16], %s105
      %s107 = sshll.u32 [#allocation15], 4
      %s108 = int_to_ptr.vmem [resolvable:$true] %s107
      %113 = dma.hbm_to_vmem [thread:$0]  %s5, 256, %s108, [#allocation16], 128, 128, 8
    $region25: #{_lambda_.1} parent=1 // pred_fallthru
      _
    // Predicated region
    $region26: #{_lambda_.1} parent=1 // pred_check
      _
    $region27: #{_lambda_.1} parent=1 // pred_check_branch
      %115 = sbr.rel (0) target = $region29
    $region28: #{_lambda_.1} parent=1 // pred_region
      _
    $region29: #{_lambda_.1} parent=1 // pred_fallthru
      _
    // Predicated region
    $region30: #{_lambda_.1} parent=1 // pred_check
      _
    $region31: #{_lambda_.1} parent=1 // pred_check_branch
      %117 = sbr.rel (0) target = $region33
    $region32: #{_lambda_.1} parent=1 // pred_region
      %s119 = ssub.s32 1024, 1024
      %120 = vsyncadd [#allocation16], %s119
      %s121 = sshll.u32 [#allocation17], 4
      %s122 = int_to_ptr.vmem [resolvable:$true] %s121
      %127 = dma.hbm_to_vmem [thread:$0]  %s7, 1024, %s122, [#allocation16], 128, 128, 8
    $region33: #{_lambda_.1} parent=1 // pred_fallthru
      _
    // Predicated region
    $region34: #{_lambda_.1} parent=1 // pred_check
      _
    $region35: #{_lambda_.1} parent=1 // pred_check_branch
      %129 = sbr.rel (0) target = $region37
    $region36: #{_lambda_.1} parent=1 // pred_region
      %s131 = ssub.s32 1024, 1024
      %132 = vsyncadd [#allocation19], %s131
      %s133 = sshll.u32 [#allocation18], 4
      %s134 = int_to_ptr.vmem [resolvable:$true] %s133
      %139 = dma.hbm_to_vmem [thread:$0]  %s8, 1024, %s134, [#allocation19], 128, 128, 8
    $region37: #{_lambda_.1} parent=1 // pred_fallthru
      _
    // Predicated region
    $region38: #{_lambda_.1} parent=1 // pred_check
      _
    $region39: #{_lambda_.1} parent=1 // pred_check_branch
      %141 = sbr.rel (0) target = $region41
    $region40: #{_lambda_.1} parent=1 // pred_region
      %s143 = ssub.s32 128, 128
      %144 = vsyncadd [#allocation19], %s143
      %s146 = sshll.u32 [#allocation20], 4
      %s147 = int_to_ptr.vmem [resolvable:$true] %s146
      %149 = dma.hbm_to_vmem [thread:$0]  %s9, 128, %s147, [#allocation19]
    $region41: #{_lambda_.1} parent=1 // pred_fallthru
      _
    // Predicated region
    $region42: #{_lambda_.1} parent=1 // pred_check
      _
    $region43: #{_lambda_.1} parent=1 // pred_check_branch
      %151 = sbr.rel (0) target = $region45
    $region44: #{_lambda_.1} parent=1 // pred_region
      %s153 = ssub.s32 1024, 1024
      %154 = vsyncadd [#allocation22], %s153
      %s155 = sshll.u32 [#allocation21], 4
      %s156 = int_to_ptr.vmem [resolvable:$true] %s155
      %161 = dma.hbm_to_vmem [thread:$0]  %s10, 1024, %s156, [#allocation22], 128, 128, 8
    $region45: #{_lambda_.1} parent=1 // pred_fallthru
      _
    // Predicated region
    $region46: #{_lambda_.1} parent=1 // pred_check
      _
    $region47: #{_lambda_.1} parent=1 // pred_check_branch
      %163 = sbr.rel (0) target = $region49
    $region48: #{_lambda_.1} parent=1 // pred_region
      %s165 = ssub.s32 512, 512
      %166 = vsyncadd [#allocation22], %s165
      %s167 = sshll.u32 [#allocation23], 4
      %s168 = int_to_ptr.vmem [resolvable:$true] %s167
      %173 = dma.hbm_to_vmem [thread:$0]  %s11, 512, %s168, [#allocation22], 128, 128, 8
    $region49: #{_lambda_.1} parent=1 // pred_fallthru
      _
    // Predicated region
    $region50: #{_lambda_.1} parent=1 // pred_check
      _
    $region51: #{_lambda_.1} parent=1 // pred_check_branch
      %175 = sbr.rel (0) target = $region53
    $region52: #{_lambda_.1} parent=1 // pred_region
      _
    $region53: #{_lambda_.1} parent=1 // pred_fallthru
      _
    // Predicated region
    $region54: #{_lambda_.1} parent=1 // pred_check
      _
    $region55: #{_lambda_.1} parent=1 // pred_check_branch
      %177 = sbr.rel (0) target = $region57
    $region56: #{_lambda_.1} parent=1 // pred_region
      %s179 = ssub.s32 128, 128
      %180 = vsyncadd [#allocation25], %s179
      %s182 = sshll.u32 [#allocation24], 4
      %s183 = int_to_ptr.vmem [resolvable:$true] %s182
      %185 = dma.hbm_to_vmem [thread:$0]  %s13, 128, %s183, [#allocation25]
    $region57: #{_lambda_.1} parent=1 // pred_fallthru
      _
    // Predicated region
    $region58: #{_lambda_.1} parent=1 // pred_check
      _
    $region59: #{_lambda_.1} parent=1 // pred_check_branch
      %187 = sbr.rel (0) target = $region61
    $region60: #{_lambda_.1} parent=1 // pred_region
      %s189 = ssub.s32 128, 128
      %190 = vsyncadd [#allocation25], %s189
      %s192 = sshll.u32 [#allocation26], 4
      %s193 = int_to_ptr.vmem [resolvable:$true] %s192
      %195 = dma.hbm_to_vmem [thread:$0]  %s14, 128, %s193, [#allocation25]
    $region61: #{_lambda_.1} parent=1 // pred_fallthru
      _
    // Predicated region
    $region62: #{_lambda_.1} parent=1 // pred_check
      _
    $region63: #{_lambda_.1} parent=1 // pred_check_branch
      %197 = sbr.rel (0) target = $region65
    $region64: #{_lambda_.1} parent=1 // pred_region
      %s199 = ssub.s32 256, 256
      %200 = vsyncadd [#allocation28], %s199
      %s201 = sshll.u32 [#allocation27], 4
      %s202 = int_to_ptr.vmem [resolvable:$true] %s201
      %207 = dma.hbm_to_vmem [thread:$0]  %s15, 256, %s202, [#allocation28], 128, 128, 8
    $region65: #{_lambda_.1} parent=1 // pred_fallthru
      _
    // Predicated region
    $region66: #{_lambda_.1} parent=1 // pred_check
      _
    $region67: #{_lambda_.1} parent=1 // pred_check_branch
      %209 = sbr.rel (0) target = $region69
    $region68: #{_lambda_.1} parent=1 // pred_region
      %s211 = ssub.s32 16, 16
      %212 = vsyncadd [#allocation28], %s211
      %s214 = sshll.u32 [#allocation29], 4
      %s215 = int_to_ptr.vmem [resolvable:$true] %s214
      %217 = dma.hbm_to_vmem [thread:$0]  %s16, 16, %s215, [#allocation28]
    $region69: #{_lambda_.1} parent=1 // pred_fallthru
      _
    // Predicated region
    $region70: #{_lambda_.1} parent=1 // pred_check
      _
    $region71: #{_lambda_.1} parent=1 // pred_check_branch
      %219 = sbr.rel (0) target = $region73
    $region72: #{_lambda_.1} parent=1 // pred_region
      _
    $region73: #{_lambda_.1} parent=1 // pred_fallthru
      _
    // Predicated region
    $region74: #{_lambda_.1} parent=1 // pred_check
      _
    $region75: #{_lambda_.1} parent=1 // pred_check_branch
      %221 = sbr.rel (0) target = $region77
    $region76: #{_lambda_.1} parent=1 // pred_region
      _
    $region77: #{_lambda_.1} parent=1 // pred_fallthru
      _
    // Predicated region
    $region78: #{_lambda_.1} parent=1 // pred_check
      _
    $region79: #{_lambda_.1} parent=1 // pred_check_branch
      %223 = sbr.rel (0) target = $region81
    $region80: #{_lambda_.1} parent=1 // pred_region
      %s225 = ssub.s32 128, 128
      %226 = vsyncadd [#allocation31], %s225
      %s228 = sshll.u32 [#allocation30], 4
      %s229 = int_to_ptr.vmem [resolvable:$true] %s228
      %231 = dma.hbm_to_vmem [thread:$0]  %s19, 128, %s229, [#allocation31]
    $region81: #{_lambda_.1} parent=1 // pred_fallthru
      _
    // Predicated region
    $region82: #{_lambda_.1} parent=1 // pred_check
      _
    $region83: #{_lambda_.1} parent=1 // pred_check_branch
      %233 = sbr.rel (0) target = $region85
    $region84: #{_lambda_.1} parent=1 // pred_region
      %s235 = ssub.s32 128, 128
      %236 = vsyncadd [#allocation31], %s235
      %s238 = sshll.u32 [#allocation32], 4
      %s239 = int_to_ptr.vmem [resolvable:$true] %s238
      %241 = dma.hbm_to_vmem [thread:$0]  %s20, 128, %s239, [#allocation31]
    $region85: #{_lambda_.1} parent=1 // pred_fallthru
      _
    // Predicated region
    $region86: #{_lambda_.1} parent=1 // pred_check
      _
    $region87: #{_lambda_.1} parent=1 // pred_check_branch
      %243 = sbr.rel (0) target = $region89
    $region88: #{_lambda_.1} parent=1 // pred_region
      _
    $region89: #{_lambda_.1} parent=1 // pred_fallthru
      _
    // Predicated region
    $region90: #{_lambda_.1} parent=1 // pred_check
      _
    $region91: #{_lambda_.1} parent=1 // pred_check_branch
      %245 = sbr.rel (0) target = $region93
    $region92: #{_lambda_.1} parent=1 // pred_region
      _
    $region93: #{_lambda_.1} parent=1 // pred_fallthru
      _
    // Predicated region
    $region94: #{_lambda_.1} parent=1 // pred_check
      _
    $region95: #{_lambda_.1} parent=1 // pred_check_branch
      %247 = sbr.rel (0) target = $region97
    $region96: #{_lambda_.1} parent=1 // pred_region
      %248 = dma.done [#allocation7], 256
    $region97: #{_lambda_.1} parent=1 // pred_fallthru
      _
    // Predicated region
    $region98: #{_lambda_.1} parent=1 // pred_check
      _
    $region99: #{_lambda_.1} parent=1 // pred_check_branch
      %250 = sbr.rel (0) target = $region101
    $region100: #{_lambda_.1} parent=1 // pred_region
      %251 = dma.done [#allocation10], 256
    $region101: #{_lambda_.1} parent=1 // pred_fallthru
      _
    // Predicated region
    $region102: #{_lambda_.1} parent=1 // pred_check
      _
    $region103: #{_lambda_.1} parent=1 // pred_check_branch
      %253 = sbr.rel (0) target = $region105
    $region104: #{_lambda_.1} parent=1 // pred_region
      %254 = dma.done [#allocation10], 256
    $region105: #{_lambda_.1} parent=1 // pred_fallthru
      _
    // Predicated region
    $region106: #{_lambda_.1} parent=1 // pred_check
      _
    $region107: #{_lambda_.1} parent=1 // pred_check_branch
      %256 = sbr.rel (0) target = $region109
    $region108: #{_lambda_.1} parent=1 // pred_region
      %257 = dma.done [#allocation13], 512
    $region109: #{_lambda_.1} parent=1 // pred_fallthru
      _
    // Predicated region
    $region110: #{_lambda_.1} parent=1 // pred_check
      _
    $region111: #{_lambda_.1} parent=1 // pred_check_branch
      %259 = sbr.rel (0) target = $region113
    $region112: #{_lambda_.1} parent=1 // pred_region
      %260 = dma.done [#allocation13], 512
    $region113: #{_lambda_.1} parent=1 // pred_fallthru
      _
    // Predicated region
    $region114: #{_lambda_.1} parent=1 // pred_check
      _
    $region115: #{_lambda_.1} parent=1 // pred_check_branch
      %262 = sbr.rel (0) target = $region117
    $region116: #{_lambda_.1} parent=1 // pred_region
      %263 = dma.done [#allocation16], 256
    $region117: #{_lambda_.1} parent=1 // pred_fallthru
      _
    // Predicated region
    $region118: #{_lambda_.1} parent=1 // pred_check
      _
    $region119: #{_lambda_.1} parent=1 // pred_check_branch
      %265 = sbr.rel (0) target = $region121
    $region120: #{_lambda_.1} parent=1 // pred_region
      %266 = dma.done [#allocation16], 1024
    $region121: #{_lambda_.1} parent=1 // pred_fallthru
      _
    // Predicated region
    $region122: #{_lambda_.1} parent=1 // pred_check
      _
    $region123: #{_lambda_.1} parent=1 // pred_check_branch
      %268 = sbr.rel (0) target = $region125
    $region124: #{_lambda_.1} parent=1 // pred_region
      %269 = dma.done [#allocation19], 1024
    $region125: #{_lambda_.1} parent=1 // pred_fallthru
      _
    // Predicated region
    $region126: #{_lambda_.1} parent=1 // pred_check
      _
    $region127: #{_lambda_.1} parent=1 // pred_check_branch
      %271 = sbr.rel (0) target = $region129
    $region128: #{_lambda_.1} parent=1 // pred_region
      %272 = dma.done [#allocation19], 128
    $region129: #{_lambda_.1} parent=1 // pred_fallthru
      _
    // Predicated region
    $region130: #{_lambda_.1} parent=1 // pred_check
      _
    $region131: #{_lambda_.1} parent=1 // pred_check_branch
      %274 = sbr.rel (0) target = $region133
    $region132: #{_lambda_.1} parent=1 // pred_region
      %275 = dma.done [#allocation22], 1024
    $region133: #{_lambda_.1} parent=1 // pred_fallthru
      _
    // Predicated region
    $region134: #{_lambda_.1} parent=1 // pred_check
      _
    $region135: #{_lambda_.1} parent=1 // pred_check_branch
      %277 = sbr.rel (0) target = $region137
    $region136: #{_lambda_.1} parent=1 // pred_region
      %278 = dma.done [#allocation22], 512
    $region137: #{_lambda_.1} parent=1 // pred_fallthru
      _
    // Predicated region
    $region138: #{_lambda_.1} parent=1 // pred_check
      _
    $region139: #{_lambda_.1} parent=1 // pred_check_branch
      %280 = sbr.rel (0) target = $region141
    $region140: #{_lambda_.1} parent=1 // pred_region
      %281 = dma.done [#allocation25], 128
    $region141: #{_lambda_.1} parent=1 // pred_fallthru
      _
    // Predicated region
    $region142: #{_lambda_.1} parent=1 // pred_check
      _
    $region143: #{_lambda_.1} parent=1 // pred_check_branch
      %283 = sbr.rel (0) target = $region145
    $region144: #{_lambda_.1} parent=1 // pred_region
      %284 = dma.done [#allocation25], 128
    $region145: #{_lambda_.1} parent=1 // pred_fallthru
      _
    // Predicated region
    $region146: #{_lambda_.1} parent=1 // pred_check
      _
    $region147: #{_lambda_.1} parent=1 // pred_check_branch
      %286 = sbr.rel (0) target = $region149
    $region148: #{_lambda_.1} parent=1 // pred_region
      %287 = dma.done [#allocation28], 256
    $region149: #{_lambda_.1} parent=1 // pred_fallthru
      _
    // Predicated region
    $region150: #{_lambda_.1} parent=1 // pred_check
      _
    $region151: #{_lambda_.1} parent=1 // pred_check_branch
      %289 = sbr.rel (0) target = $region153
    $region152: #{_lambda_.1} parent=1 // pred_region
      %290 = dma.done [#allocation28], 16
    $region153: #{_lambda_.1} parent=1 // pred_fallthru
      _
    // Predicated region
    $region154: #{_lambda_.1} parent=1 // pred_check
      _
    $region155: #{_lambda_.1} parent=1 // pred_check_branch
      %292 = sbr.rel (0) target = $region157
    $region156: #{_lambda_.1} parent=1 // pred_region
      %293 = dma.done [#allocation31], 128
    $region157: #{_lambda_.1} parent=1 // pred_fallthru
      _
    // Predicated region
    $region158: #{_lambda_.1} parent=1 // pred_check
      _
    $region159: #{_lambda_.1} parent=1 // pred_check_branch
      %295 = sbr.rel (0) target = $region161
    $region160: #{_lambda_.1} parent=1 // pred_region
      %296 = dma.done [#allocation31], 128
    $region161: #{_lambda_.1} parent=1 // pred_fallthru
      _
    %v297 = vld [vmem:[#allocation6] sm:$0xff]
    %v298 = vld [vmem:[#allocation6 + $0x8] sm:$0xff]
    %v299 = vld [vmem:[#allocation11] sm:$0xff]
    %v300 = vld [vmem:[#allocation11 + $0x8] sm:$0xff]
    %vm301 = vcmask 130048
    %v303 = vsel %vm301, %v297, 0
    %v306 = vsel %vm301, %v298, 0
    %308 = vmatprep.subr.mxu0 0.0
    %309 = vmatpush1.msra.mxu0 0.0
    %310 = vmatprep.subr.mxu0 0.0
    %311 = vmatpush1.msra.mxu0 0.0
    %312 = vmatprep.subr.mxu0 0.0
    %313 = vmatpush1.msra.mxu0 0.0
    %314 = vmatprep.subr.mxu0 0.0
    %315 = vmatpush1.msra.mxu0 0.0
    %316 = vmatprep.subr.mxu0 0.0
    %317 = vmatpush1.msra.mxu0 0.0
    %318 = vmatprep.subr.mxu0 0.0
    %319 = vmatpush1.msra.mxu0 0.0
    %320 = vmatprep.subr.mxu0 0.0
    %321 = vmatpush1.msra.mxu0 0.0
    %322 = vmatprep.subr.mxu0 0.0
    %323 = vmatpush1.msra.mxu0 0.0
    %324 = vmatprep.subr.mxu0 0.0
    %325 = vmatpush1.msra.mxu0 0.0
    %326 = vmatprep.subr.mxu0 0.0
    %327 = vmatpush1.msra.mxu0 0.0
    %328 = vmatprep.subr.mxu0 0.0
    %329 = vmatpush1.msra.mxu0 0.0
    %330 = vmatprep.subr.mxu0 0.0
    %331 = vmatpush1.msra.mxu0 0.0
    %332 = vmatprep.subr.mxu0 0.0
    %333 = vmatpush1.msra.mxu0 0.0
    %334 = vmatprep.subr.mxu0 0.0
    %335 = vmatpush1.msra.mxu0 0.0
    %336 = vmatprep.subr.mxu0 0.0
    %337 = vmatpush1.msra.mxu0 %v300
    %338 = vmatprep.subr.mxu0 0.0
    %339 = vmatpush1.msra.mxu0 %v299
    %340 = vmatprep.subr.mxu0 0.0
    %341 = vmatpush2.msra.mxu0 0.0
    %342 = vmatprep.subr.mxu0 0.0
    %343 = vmatpush2.msra.mxu0 0.0
    %344 = vmatprep.subr.mxu0 0.0
    %345 = vmatpush2.msra.mxu0 0.0
    %346 = vmatprep.subr.mxu0 0.0
    %347 = vmatpush2.msra.mxu0 0.0
    %348 = vmatprep.subr.mxu0 0.0
    %349 = vmatpush2.msra.mxu0 0.0
    %350 = vmatprep.subr.mxu0 0.0
    %351 = vmatpush2.msra.mxu0 0.0
    %352 = vmatprep.subr.mxu0 0.0
    %353 = vmatpush2.msra.mxu0 0.0
    %354 = vmatprep.subr.mxu0 0.0
    %355 = vmatpush2.msra.mxu0 0.0
    %356 = vmatprep.subr.mxu0 0.0
    %357 = vmatpush2.msra.mxu0 0.0
    %358 = vmatprep.subr.mxu0 0.0
    %359 = vmatpush2.msra.mxu0 0.0
    %360 = vmatprep.subr.mxu0 0.0
    %361 = vmatpush2.msra.mxu0 0.0
    %362 = vmatprep.subr.mxu0 0.0
    %363 = vmatpush2.msra.mxu0 0.0
    %364 = vmatprep.subr.mxu0 0.0
    %365 = vmatpush2.msra.mxu0 0.0
    %366 = vmatprep.subr.mxu0 0.0
    %367 = vmatpush2.msra.mxu0 0.0
    %368 = vmatprep.subr.mxu0 0.0
    %369 = vmatpush2.msra.mxu0 0.0
    %370 = vmatprep.subr.mxu0 0.0
    %371 = vmatpush2.msra.mxu0 0.0
    %372 = vmatprep.mubr.f32.mxu0 0.0
    %373 = vmatmul.mubr.f32.gmra.mxu0 %v303
    %v374 = vpop.f32.mrf.mxu0
    %v375 = vadd.f32 0.0, %v374
    %v376 = vpop.f32.mrf.mxu0
    %377 = vmatprep.mubr.f32.mxu0 0.0
    %378 = vmatmul.mubr.f32.gmra.mxu0 %v306
    %v379 = vpop.f32.mrf.mxu0
    %v380 = vadd.f32 0.0, %v379
    %v381 = vpop.f32.mrf.mxu0
    %382 = vdwg.mxu0
    %v383 = vld [vmem:[#allocation12] sm:$0xff]
    %v384 = vld [vmem:[#allocation12 + $0x8] sm:$0xff]
    %v385 = vld [vmem:[#allocation12 + $0x10] sm:$0xff]
    %v386 = vld [vmem:[#allocation12 + $0x18] sm:$0xff]
    %vm387 = vcmask 261120
    %v389 = vsel %vm387, %v375, 0
    %v392 = vsel %vm387, %v380, 0
    %394 = vmatprep.subr.mxu0 0.0
    %395 = vmatpush1.msra.mxu0 0.0
    %396 = vmatprep.subr.mxu0 0.0
    %397 = vmatpush1.msra.mxu0 0.0
    %398 = vmatprep.subr.mxu0 0.0
    %399 = vmatpush1.msra.mxu0 0.0
    %400 = vmatprep.subr.mxu0 0.0
    %401 = vmatpush1.msra.mxu0 0.0
    %402 = vmatprep.subr.mxu0 0.0
    %403 = vmatpush1.msra.mxu0 0.0
    %404 = vmatprep.subr.mxu0 0.0
    %405 = vmatpush1.msra.mxu0 0.0
    %406 = vmatprep.subr.mxu0 0.0
    %407 = vmatpush1.msra.mxu0 0.0
    %408 = vmatprep.subr.mxu0 0.0
    %409 = vmatpush1.msra.mxu0 0.0
    %410 = vmatprep.subr.mxu0 0.0
    %411 = vmatpush1.msra.mxu0 0.0
    %412 = vmatprep.subr.mxu0 0.0
    %413 = vmatpush1.msra.mxu0 0.0
    %414 = vmatprep.subr.mxu0 0.0
    %415 = vmatpush1.msra.mxu0 0.0
    %416 = vmatprep.subr.mxu0 0.0
    %417 = vmatpush1.msra.mxu0 0.0
    %418 = vmatprep.subr.mxu0 0.0
    %419 = vmatpush1.msra.mxu0 %v386
    %420 = vmatprep.subr.mxu0 0.0
    %421 = vmatpush1.msra.mxu0 %v385
    %422 = vmatprep.subr.mxu0 0.0
    %423 = vmatpush1.msra.mxu0 %v384
    %424 = vmatprep.subr.mxu0 0.0
    %425 = vmatpush1.msra.mxu0 %v383
    %426 = vmatprep.subr.mxu0 0.0
    %427 = vmatpush2.msra.mxu0 0.0
    %428 = vmatprep.subr.mxu0 0.0
    %429 = vmatpush2.msra.mxu0 0.0
    %430 = vmatprep.subr.mxu0 0.0
    %431 = vmatpush2.msra.mxu0 0.0
    %432 = vmatprep.subr.mxu0 0.0
    %433 = vmatpush2.msra.mxu0 0.0
    %434 = vmatprep.subr.mxu0 0.0
    %435 = vmatpush2.msra.mxu0 0.0
    %436 = vmatprep.subr.mxu0 0.0
    %437 = vmatpush2.msra.mxu0 0.0
    %438 = vmatprep.subr.mxu0 0.0
    %439 = vmatpush2.msra.mxu0 0.0
    %440 = vmatprep.subr.mxu0 0.0
    %441 = vmatpush2.msra.mxu0 0.0
    %442 = vmatprep.subr.mxu0 0.0
    %443 = vmatpush2.msra.mxu0 0.0
    %444 = vmatprep.subr.mxu0 0.0
    %445 = vmatpush2.msra.mxu0 0.0
    %446 = vmatprep.subr.mxu0 0.0
    %447 = vmatpush2.msra.mxu0 0.0
    %448 = vmatprep.subr.mxu0 0.0
    %449 = vmatpush2.msra.mxu0 0.0
    %450 = vmatprep.subr.mxu0 0.0
    %451 = vmatpush2.msra.mxu0 0.0
    %452 = vmatprep.subr.mxu0 0.0
    %453 = vmatpush2.msra.mxu0 0.0
    %454 = vmatprep.subr.mxu0 0.0
    %455 = vmatpush2.msra.mxu0 0.0
    %456 = vmatprep.subr.mxu0 0.0
    %457 = vmatpush2.msra.mxu0 0.0
    %458 = vmatprep.mubr.f32.mxu0 0.0
    %459 = vmatmul.mubr.f32.gmra.mxu0 %v389
    %v460 = vpop.f32.mrf.mxu0
    %v461 = vadd.f32 0.0, %v460
    %v462 = vpop.f32.mrf.mxu0
    %463 = vmatprep.mubr.f32.mxu0 0.0
    %464 = vmatmul.mubr.f32.gmra.mxu0 %v392
    %v465 = vpop.f32.mrf.mxu0
    %v466 = vadd.f32 0.0, %v465
    %v467 = vpop.f32.mrf.mxu0
    %468 = vdwg.mxu0
    %v469 = vld [vmem:[#allocation14] sm:$0xff]
    %v470 = vld [vmem:[#allocation14 + $0x8] sm:$0xff]
    %v471 = vld [vmem:[#allocation14 + $0x10] sm:$0xff]
    %v472 = vld [vmem:[#allocation14 + $0x18] sm:$0xff]
    %473 = vmatprep.subr.mxu0 0.0
    %474 = vmatpush1.msra.mxu0 0.0
    %475 = vmatprep.subr.mxu0 0.0
    %476 = vmatpush1.msra.mxu0 0.0
    %477 = vmatprep.subr.mxu0 0.0
    %478 = vmatpush1.msra.mxu0 0.0
    %479 = vmatprep.subr.mxu0 0.0
    %480 = vmatpush1.msra.mxu0 0.0
    %481 = vmatprep.subr.mxu0 0.0
    %482 = vmatpush1.msra.mxu0 0.0
    %483 = vmatprep.subr.mxu0 0.0
    %484 = vmatpush1.msra.mxu0 0.0
    %485 = vmatprep.subr.mxu0 0.0
    %486 = vmatpush1.msra.mxu0 0.0
    %487 = vmatprep.subr.mxu0 0.0
    %488 = vmatpush1.msra.mxu0 0.0
    %489 = vmatprep.subr.mxu0 0.0
    %490 = vmatpush1.msra.mxu0 0.0
    %491 = vmatprep.subr.mxu0 0.0
    %492 = vmatpush1.msra.mxu0 0.0
    %493 = vmatprep.subr.mxu0 0.0
    %494 = vmatpush1.msra.mxu0 0.0
    %495 = vmatprep.subr.mxu0 0.0
    %496 = vmatpush1.msra.mxu0 0.0
    %497 = vmatprep.subr.mxu0 0.0
    %498 = vmatpush1.msra.mxu0 %v472
    %499 = vmatprep.subr.mxu0 0.0
    %500 = vmatpush1.msra.mxu0 %v471
    %501 = vmatprep.subr.mxu0 0.0
    %502 = vmatpush1.msra.mxu0 %v470
    %503 = vmatprep.subr.mxu0 0.0
    %504 = vmatpush1.msra.mxu0 %v469
    %505 = vmatprep.subr.mxu0 0.0
    %506 = vmatpush2.msra.mxu0 0.0
    %507 = vmatprep.subr.mxu0 0.0
    %508 = vmatpush2.msra.mxu0 0.0
    %509 = vmatprep.subr.mxu0 0.0
    %510 = vmatpush2.msra.mxu0 0.0
    %511 = vmatprep.subr.mxu0 0.0
    %512 = vmatpush2.msra.mxu0 0.0
    %513 = vmatprep.subr.mxu0 0.0
    %514 = vmatpush2.msra.mxu0 0.0
    %515 = vmatprep.subr.mxu0 0.0
    %516 = vmatpush2.msra.mxu0 0.0
    %517 = vmatprep.subr.mxu0 0.0
    %518 = vmatpush2.msra.mxu0 0.0
    %519 = vmatprep.subr.mxu0 0.0
    %520 = vmatpush2.msra.mxu0 0.0
    %521 = vmatprep.subr.mxu0 0.0
    %522 = vmatpush2.msra.mxu0 0.0
    %523 = vmatprep.subr.mxu0 0.0
    %524 = vmatpush2.msra.mxu0 0.0
    %525 = vmatprep.subr.mxu0 0.0
    %526 = vmatpush2.msra.mxu0 0.0
    %527 = vmatprep.subr.mxu0 0.0
    %528 = vmatpush2.msra.mxu0 0.0
    %529 = vmatprep.subr.mxu0 0.0
    %530 = vmatpush2.msra.mxu0 0.0
    %531 = vmatprep.subr.mxu0 0.0
    %532 = vmatpush2.msra.mxu0 0.0
    %533 = vmatprep.subr.mxu0 0.0
    %534 = vmatpush2.msra.mxu0 0.0
    %535 = vmatprep.subr.mxu0 0.0
    %536 = vmatpush2.msra.mxu0 0.0
    %537 = vmatprep.mubr.f32.mxu0 0.0
    %538 = vmatmul.mubr.f32.gmra.mxu0 %v389
    %v539 = vpop.f32.mrf.mxu0
    %v540 = vadd.f32 0.0, %v539
    %v541 = vpop.f32.mrf.mxu0
    %542 = vmatprep.mubr.f32.mxu0 0.0
    %543 = vmatmul.mubr.f32.gmra.mxu0 %v392
    %v544 = vpop.f32.mrf.mxu0
    %v545 = vadd.f32 0.0, %v544
    %v546 = vpop.f32.mrf.mxu0
    %547 = vdwg.mxu0
    %v548 = vld [vmem:[#allocation23] sm:$0xff]
    %v549 = vld [vmem:[#allocation23 + $0x8] sm:$0xff]
    %v550 = vld [vmem:[#allocation23 + $0x10] sm:$0xff]
    %v551 = vld [vmem:[#allocation23 + $0x18] sm:$0xff]
    %552 = vmatprep.subr.mxu0 0.0
    %553 = vmatpush1.msra.mxu0 0.0
    %554 = vmatprep.subr.mxu0 0.0
    %555 = vmatpush1.msra.mxu0 0.0
    %556 = vmatprep.subr.mxu0 0.0
    %557 = vmatpush1.msra.mxu0 0.0
    %558 = vmatprep.subr.mxu0 0.0
    %559 = vmatpush1.msra.mxu0 0.0
    %560 = vmatprep.subr.mxu0 0.0
    %561 = vmatpush1.msra.mxu0 0.0
    %562 = vmatprep.subr.mxu0 0.0
    %563 = vmatpush1.msra.mxu0 0.0
    %564 = vmatprep.subr.mxu0 0.0
    %565 = vmatpush1.msra.mxu0 0.0
    %566 = vmatprep.subr.mxu0 0.0
    %567 = vmatpush1.msra.mxu0 0.0
    %568 = vmatprep.subr.mxu0 0.0
    %569 = vmatpush1.msra.mxu0 0.0
    %570 = vmatprep.subr.mxu0 0.0
    %571 = vmatpush1.msra.mxu0 0.0
    %572 = vmatprep.subr.mxu0 0.0
    %573 = vmatpush1.msra.mxu0 0.0
    %574 = vmatprep.subr.mxu0 0.0
    %575 = vmatpush1.msra.mxu0 0.0
    %576 = vmatprep.subr.mxu0 0.0
    %577 = vmatpush1.msra.mxu0 %v551
    %578 = vmatprep.subr.mxu0 0.0
    %579 = vmatpush1.msra.mxu0 %v550
    %580 = vmatprep.subr.mxu0 0.0
    %581 = vmatpush1.msra.mxu0 %v549
    %582 = vmatprep.subr.mxu0 0.0
    %583 = vmatpush1.msra.mxu0 %v548
    %584 = vmatprep.subr.mxu0 0.0
    %585 = vmatpush2.msra.mxu0 0.0
    %586 = vmatprep.subr.mxu0 0.0
    %587 = vmatpush2.msra.mxu0 0.0
    %588 = vmatprep.subr.mxu0 0.0
    %589 = vmatpush2.msra.mxu0 0.0
    %590 = vmatprep.subr.mxu0 0.0
    %591 = vmatpush2.msra.mxu0 0.0
    %592 = vmatprep.subr.mxu0 0.0
    %593 = vmatpush2.msra.mxu0 0.0
    %594 = vmatprep.subr.mxu0 0.0
    %595 = vmatpush2.msra.mxu0 0.0
    %596 = vmatprep.subr.mxu0 0.0
    %597 = vmatpush2.msra.mxu0 0.0
    %598 = vmatprep.subr.mxu0 0.0
    %599 = vmatpush2.msra.mxu0 0.0
    %600 = vmatprep.subr.mxu0 0.0
    %601 = vmatpush2.msra.mxu0 0.0
    %602 = vmatprep.subr.mxu0 0.0
    %603 = vmatpush2.msra.mxu0 0.0
    %604 = vmatprep.subr.mxu0 0.0
    %605 = vmatpush2.msra.mxu0 0.0
    %606 = vmatprep.subr.mxu0 0.0
    %607 = vmatpush2.msra.mxu0 0.0
    %608 = vmatprep.subr.mxu0 0.0
    %609 = vmatpush2.msra.mxu0 0.0
    %610 = vmatprep.subr.mxu0 0.0
    %611 = vmatpush2.msra.mxu0 0.0
    %612 = vmatprep.subr.mxu0 0.0
    %613 = vmatpush2.msra.mxu0 0.0
    %614 = vmatprep.subr.mxu0 0.0
    %615 = vmatpush2.msra.mxu0 0.0
    %616 = vmatprep.mubr.f32.mxu0 0.0
    %617 = vmatmul.mubr.f32.gmra.mxu0 %v389
    %v618 = vpop.f32.mrf.mxu0
    %v619 = vadd.f32 0.0, %v618
    %v620 = vpop.f32.mrf.mxu0
    %621 = vmatprep.mubr.f32.mxu0 0.0
    %622 = vmatmul.mubr.f32.gmra.mxu0 %v392
    %v623 = vpop.f32.mrf.mxu0
    %v624 = vadd.f32 0.0, %v623
    %v625 = vpop.f32.mrf.mxu0
    %626 = vdwg.mxu0
    %v627 = vld [vmem:[#allocation17] sm:$0xff]
    %v628 = vld [vmem:[#allocation17 + $0x8] sm:$0xff]
    %v629 = vld [vmem:[#allocation17 + $0x10] sm:$0xff]
    %v630 = vld [vmem:[#allocation17 + $0x18] sm:$0xff]
    %v631 = vld [vmem:[#allocation17 + $0x20] sm:$0xff]
    %v632 = vld [vmem:[#allocation17 + $0x28] sm:$0xff]
    %v633 = vld [vmem:[#allocation17 + $0x30] sm:$0xff]
    %v634 = vld [vmem:[#allocation17 + $0x38] sm:$0xff]
    %v635 = vld [vmem:[#allocation18] sm:$0xff]
    %v636 = vld [vmem:[#allocation18 + $0x8] sm:$0xff]
    %v637 = vld [vmem:[#allocation18 + $0x10] sm:$0xff]
    %v638 = vld [vmem:[#allocation18 + $0x18] sm:$0xff]
    %v639 = vld [vmem:[#allocation18 + $0x20] sm:$0xff]
    %v640 = vld [vmem:[#allocation18 + $0x28] sm:$0xff]
    %v641 = vld [vmem:[#allocation18 + $0x30] sm:$0xff]
    %v642 = vld [vmem:[#allocation18 + $0x38] sm:$0xff]
    %v643 = vld [vmem:[#allocation20] sm:$0xff]
    %v644 = vld [vmem:[#allocation21] sm:$0xff]
    %v645 = vld [vmem:[#allocation21 + $0x8] sm:$0xff]
    %v646 = vld [vmem:[#allocation21 + $0x10] sm:$0xff]
    %v647 = vld [vmem:[#allocation21 + $0x18] sm:$0xff]
    %v648 = vld [vmem:[#allocation21 + $0x20] sm:$0xff]
    %v649 = vld [vmem:[#allocation21 + $0x28] sm:$0xff]
    %v650 = vld [vmem:[#allocation21 + $0x30] sm:$0xff]
    %v651 = vld [vmem:[#allocation21 + $0x38] sm:$0xff]
    %v652 = vld [vmem:[#allocation15] sm:$0xff]
    %v653 = vld [vmem:[#allocation15 + $0x8] sm:$0xff]
    %vm654 = vcmask 64512
    %v656 = vsel %vm654, %v635, 0
    %v659 = vsel %vm654, %v636, 0
    %v662 = vsel %vm654, %v637, 0
    %v665 = vsel %vm654, %v638, 0
    %v668 = vsel %vm654, %v639, 0
    %v671 = vsel %vm654, %v640, 0
    %v674 = vsel %vm654, %v641, 0
    %v677 = vsel %vm654, %v642, 0
    %679 = vmatprep.subr.mxu0 0.0
    %680 = vmatpush1.msra.mxu0 0.0
    %681 = vmatprep.subr.mxu0 0.0
    %682 = vmatpush1.msra.mxu0 0.0
    %683 = vmatprep.subr.mxu0 0.0
    %684 = vmatpush1.msra.mxu0 0.0
    %685 = vmatprep.subr.mxu0 0.0
    %686 = vmatpush1.msra.mxu0 0.0
    %687 = vmatprep.subr.mxu0 0.0
    %688 = vmatpush1.msra.mxu0 0.0
    %689 = vmatprep.subr.mxu0 0.0
    %690 = vmatpush1.msra.mxu0 0.0
    %691 = vmatprep.subr.mxu0 0.0
    %692 = vmatpush1.msra.mxu0 0.0
    %693 = vmatprep.subr.mxu0 0.0
    %694 = vmatpush1.msra.mxu0 0.0
    %695 = vmatprep.subr.mxu0 0.0
    %696 = vmatpush1.msra.mxu0 0.0
    %697 = vmatprep.subr.mxu0 0.0
    %698 = vmatpush1.msra.mxu0 0.0
    %699 = vmatprep.subr.mxu0 0.0
    %700 = vmatpush1.msra.mxu0 0.0
    %701 = vmatprep.subr.mxu0 0.0
    %702 = vmatpush1.msra.mxu0 0.0
    %703 = vmatprep.subr.mxu0 0.0
    %704 = vmatpush1.msra.mxu0 0.0
    %705 = vmatprep.subr.mxu0 0.0
    %706 = vmatpush1.msra.mxu0 0.0
    %707 = vmatprep.subr.mxu0 0.0
    %708 = vmatpush1.msra.mxu0 0.0
    %709 = vmatprep.subr.mxu0 0.0
    %710 = vmatpush1.msra.mxu0 %v540
    %711 = vmatprep.subr.mxu0 0.0
    %712 = vmatpush2.msra.mxu0 0.0
    %713 = vmatprep.subr.mxu0 0.0
    %714 = vmatpush2.msra.mxu0 0.0
    %715 = vmatprep.subr.mxu0 0.0
    %716 = vmatpush2.msra.mxu0 0.0
    %717 = vmatprep.subr.mxu0 0.0
    %718 = vmatpush2.msra.mxu0 0.0
    %719 = vmatprep.subr.mxu0 0.0
    %720 = vmatpush2.msra.mxu0 0.0
    %721 = vmatprep.subr.mxu0 0.0
    %722 = vmatpush2.msra.mxu0 0.0
    %723 = vmatprep.subr.mxu0 0.0
    %724 = vmatpush2.msra.mxu0 0.0
    %725 = vmatprep.subr.mxu0 0.0
    %726 = vmatpush2.msra.mxu0 0.0
    %727 = vmatprep.subr.mxu0 0.0
    %728 = vmatpush2.msra.mxu0 0.0
    %729 = vmatprep.subr.mxu0 0.0
    %730 = vmatpush2.msra.mxu0 0.0
    %731 = vmatprep.subr.mxu0 0.0
    %732 = vmatpush2.msra.mxu0 0.0
    %733 = vmatprep.subr.mxu0 0.0
    %734 = vmatpush2.msra.mxu0 0.0
    %735 = vmatprep.subr.mxu0 0.0
    %736 = vmatpush2.msra.mxu0 0.0
    %737 = vmatprep.subr.mxu0 0.0
    %738 = vmatpush2.msra.mxu0 0.0
    %739 = vmatprep.subr.mxu0 0.0
    %740 = vmatpush2.msra.mxu0 0.0
    %741 = vmatprep.subr.mxu0 0.0
    %742 = vmatpush2.msra.mxu0 0.0
    %743 = vmatprep.mubr.f32.mxu0 0.0
    %744 = vmatmul.mubr.f32.gmra.mxu0 %v656
    %v745 = vpop.f32.mrf.mxu0
    %v746 = vadd.f32 0.0, %v745
    %v747 = vpop.f32.mrf.mxu0
    %748 = vmatprep.mubr.f32.mxu0 0.0
    %749 = vmatmul.mubr.f32.gmra.mxu0 %v659
    %v750 = vpop.f32.mrf.mxu0
    %v751 = vadd.f32 0.0, %v750
    %v752 = vpop.f32.mrf.mxu0
    %753 = vmatprep.mubr.f32.mxu0 0.0
    %754 = vmatmul.mubr.f32.gmra.mxu0 %v662
    %v755 = vpop.f32.mrf.mxu0
    %v756 = vadd.f32 0.0, %v755
    %v757 = vpop.f32.mrf.mxu0
    %758 = vmatprep.mubr.f32.mxu0 0.0
    %759 = vmatmul.mubr.f32.gmra.mxu0 %v665
    %v760 = vpop.f32.mrf.mxu0
    %v761 = vadd.f32 0.0, %v760
    %v762 = vpop.f32.mrf.mxu0
    %763 = vmatprep.mubr.f32.mxu0 0.0
    %764 = vmatmul.mubr.f32.gmra.mxu0 %v668
    %v765 = vpop.f32.mrf.mxu0
    %v766 = vadd.f32 0.0, %v765
    %v767 = vpop.f32.mrf.mxu0
    %768 = vmatprep.mubr.f32.mxu0 0.0
    %769 = vmatmul.mubr.f32.gmra.mxu0 %v671
    %v770 = vpop.f32.mrf.mxu0
    %v771 = vadd.f32 0.0, %v770
    %v772 = vpop.f32.mrf.mxu0
    %773 = vmatprep.mubr.f32.mxu0 0.0
    %774 = vmatmul.mubr.f32.gmra.mxu0 %v674
    %v775 = vpop.f32.mrf.mxu0
    %v776 = vadd.f32 0.0, %v775
    %v777 = vpop.f32.mrf.mxu0
    %778 = vmatprep.mubr.f32.mxu0 0.0
    %779 = vmatmul.mubr.f32.gmra.mxu0 %v677
    %v780 = vpop.f32.mrf.mxu0
    %v781 = vadd.f32 0.0, %v780
    %v782 = vpop.f32.mrf.mxu0
    %783 = vdwg.mxu0
    %v785 = vsel %vm654, %v627, 0
    %v788 = vsel %vm654, %v628, 0
    %v791 = vsel %vm654, %v629, 0
    %v794 = vsel %vm654, %v630, 0
    %v797 = vsel %vm654, %v631, 0
    %v800 = vsel %vm654, %v632, 0
    %v803 = vsel %vm654, %v633, 0
    %v806 = vsel %vm654, %v634, 0
    %808 = vmatprep.subr.mxu0 0.0
    %809 = vmatpush1.msra.mxu0 0.0
    %810 = vmatprep.subr.mxu0 0.0
    %811 = vmatpush1.msra.mxu0 0.0
    %812 = vmatprep.subr.mxu0 0.0
    %813 = vmatpush1.msra.mxu0 0.0
    %814 = vmatprep.subr.mxu0 0.0
    %815 = vmatpush1.msra.mxu0 0.0
    %816 = vmatprep.subr.mxu0 0.0
    %817 = vmatpush1.msra.mxu0 0.0
    %818 = vmatprep.subr.mxu0 0.0
    %819 = vmatpush1.msra.mxu0 0.0
    %820 = vmatprep.subr.mxu0 0.0
    %821 = vmatpush1.msra.mxu0 0.0
    %822 = vmatprep.subr.mxu0 0.0
    %823 = vmatpush1.msra.mxu0 0.0
    %824 = vmatprep.subr.mxu0 0.0
    %825 = vmatpush1.msra.mxu0 0.0
    %826 = vmatprep.subr.mxu0 0.0
    %827 = vmatpush1.msra.mxu0 0.0
    %828 = vmatprep.subr.mxu0 0.0
    %829 = vmatpush1.msra.mxu0 0.0
    %830 = vmatprep.subr.mxu0 0.0
    %831 = vmatpush1.msra.mxu0 0.0
    %832 = vmatprep.subr.mxu0 0.0
    %833 = vmatpush1.msra.mxu0 0.0
    %834 = vmatprep.subr.mxu0 0.0
    %835 = vmatpush1.msra.mxu0 0.0
    %836 = vmatprep.subr.mxu0 0.0
    %837 = vmatpush1.msra.mxu0 0.0
    %838 = vmatprep.subr.mxu0 0.0
    %839 = vmatpush1.msra.mxu0 %v461
    %840 = vmatprep.subr.mxu0 0.0
    %841 = vmatpush2.msra.mxu0 0.0
    %842 = vmatprep.subr.mxu0 0.0
    %843 = vmatpush2.msra.mxu0 0.0
    %844 = vmatprep.subr.mxu0 0.0
    %845 = vmatpush2.msra.mxu0 0.0
    %846 = vmatprep.subr.mxu0 0.0
    %847 = vmatpush2.msra.mxu0 0.0
    %848 = vmatprep.subr.mxu0 0.0
    %849 = vmatpush2.msra.mxu0 0.0
    %850 = vmatprep.subr.mxu0 0.0
    %851 = vmatpush2.msra.mxu0 0.0
    %852 = vmatprep.subr.mxu0 0.0
    %853 = vmatpush2.msra.mxu0 0.0
    %854 = vmatprep.subr.mxu0 0.0
    %855 = vmatpush2.msra.mxu0 0.0
    %856 = vmatprep.subr.mxu0 0.0
    %857 = vmatpush2.msra.mxu0 0.0
    %858 = vmatprep.subr.mxu0 0.0
    %859 = vmatpush2.msra.mxu0 0.0
    %860 = vmatprep.subr.mxu0 0.0
    %861 = vmatpush2.msra.mxu0 0.0
    %862 = vmatprep.subr.mxu0 0.0
    %863 = vmatpush2.msra.mxu0 0.0
    %864 = vmatprep.subr.mxu0 0.0
    %865 = vmatpush2.msra.mxu0 0.0
    %866 = vmatprep.subr.mxu0 0.0
    %867 = vmatpush2.msra.mxu0 0.0
    %868 = vmatprep.subr.mxu0 0.0
    %869 = vmatpush2.msra.mxu0 0.0
    %870 = vmatprep.subr.mxu0 0.0
    %871 = vmatpush2.msra.mxu0 0.0
    %872 = vmatprep.mubr.f32.mxu0 0.0
    %873 = vmatmul.mubr.f32.gmra.mxu0 %v785
    %v874 = vpop.f32.mrf.mxu0
    %v875 = vadd.f32 %v746, %v874
    %v876 = vpop.f32.mrf.mxu0
    %877 = vmatprep.mubr.f32.mxu0 0.0
    %878 = vmatmul.mubr.f32.gmra.mxu0 %v788
    %v879 = vpop.f32.mrf.mxu0
    %v880 = vadd.f32 %v751, %v879
    %v881 = vpop.f32.mrf.mxu0
    %882 = vmatprep.mubr.f32.mxu0 0.0
    %883 = vmatmul.mubr.f32.gmra.mxu0 %v791
    %v884 = vpop.f32.mrf.mxu0
    %v885 = vadd.f32 %v756, %v884
    %v886 = vpop.f32.mrf.mxu0
    %887 = vmatprep.mubr.f32.mxu0 0.0
    %888 = vmatmul.mubr.f32.gmra.mxu0 %v794
    %v889 = vpop.f32.mrf.mxu0
    %v890 = vadd.f32 %v761, %v889
    %v891 = vpop.f32.mrf.mxu0
    %892 = vmatprep.mubr.f32.mxu0 0.0
    %893 = vmatmul.mubr.f32.gmra.mxu0 %v797
    %v894 = vpop.f32.mrf.mxu0
    %v895 = vadd.f32 %v766, %v894
    %v896 = vpop.f32.mrf.mxu0
    %897 = vmatprep.mubr.f32.mxu0 0.0
    %898 = vmatmul.mubr.f32.gmra.mxu0 %v800
    %v899 = vpop.f32.mrf.mxu0
    %v900 = vadd.f32 %v771, %v899
    %v901 = vpop.f32.mrf.mxu0
    %902 = vmatprep.mubr.f32.mxu0 0.0
    %903 = vmatmul.mubr.f32.gmra.mxu0 %v803
    %v904 = vpop.f32.mrf.mxu0
    %v905 = vadd.f32 %v776, %v904
    %v906 = vpop.f32.mrf.mxu0
    %907 = vmatprep.mubr.f32.mxu0 0.0
    %908 = vmatmul.mubr.f32.gmra.mxu0 %v806
    %v909 = vpop.f32.mrf.mxu0
    %v910 = vadd.f32 %v781, %v909
    %v911 = vpop.f32.mrf.mxu0
    %912 = vdwg.mxu0
    %vm913 = vcmp.gt.f32.partialorder %v875, 0.0
    %vm914 = vcmp.gt.f32.partialorder %v880, 0.0
    %vm915 = vcmp.gt.f32.partialorder %v885, 0.0
    %vm916 = vcmp.gt.f32.partialorder %v890, 0.0
    %vm917 = vcmp.gt.f32.partialorder %v895, 0.0
    %vm918 = vcmp.gt.f32.partialorder %v900, 0.0
    %vm919 = vcmp.gt.f32.partialorder %v905, 0.0
    %vm920 = vcmp.gt.f32.partialorder %v910, 0.0
    %v921 = vmul.f32 %v875, 0.01
    %v922 = vmul.f32 %v880, 0.01
    %v923 = vmul.f32 %v885, 0.01
    %v924 = vmul.f32 %v890, 0.01
    %v925 = vmul.f32 %v895, 0.01
    %v926 = vmul.f32 %v900, 0.01
    %v927 = vmul.f32 %v905, 0.01
    %v928 = vmul.f32 %v910, 0.01
    %v929 = vsel %vm913, %v875, %v921
    %v930 = vsel %vm914, %v880, %v922
    %v931 = vsel %vm915, %v885, %v923
    %v932 = vsel %vm916, %v890, %v924
    %v933 = vsel %vm917, %v895, %v925
    %v934 = vsel %vm918, %v900, %v926
    %v935 = vsel %vm919, %v905, %v927
    %v936 = vsel %vm920, %v910, %v928
    %v938 = vsel %vm301, %v929, 0
    %v941 = vsel %vm301, %v930, 0
    %v944 = vsel %vm301, %v931, 0
    %v947 = vsel %vm301, %v932, 0
    %v950 = vsel %vm301, %v933, 0
    %v953 = vsel %vm301, %v934, 0
    %v956 = vsel %vm301, %v935, 0
    %v959 = vsel %vm301, %v936, 0
    %961 = vmatprep.subr.mxu0 0.0
    %962 = vmatpush1.msra.mxu0 0.0
    %963 = vmatprep.subr.mxu0 0.0
    %964 = vmatpush1.msra.mxu0 0.0
    %965 = vmatprep.subr.mxu0 0.0
    %966 = vmatpush1.msra.mxu0 0.0
    %967 = vmatprep.subr.mxu0 0.0
    %968 = vmatpush1.msra.mxu0 0.0
    %969 = vmatprep.subr.mxu0 0.0
    %970 = vmatpush1.msra.mxu0 0.0
    %971 = vmatprep.subr.mxu0 0.0
    %972 = vmatpush1.msra.mxu0 0.0
    %973 = vmatprep.subr.mxu0 0.0
    %974 = vmatpush1.msra.mxu0 0.0
    %975 = vmatprep.subr.mxu0 0.0
    %976 = vmatpush1.msra.mxu0 0.0
    %977 = vmatprep.subr.mxu0 0.0
    %978 = vmatpush1.msra.mxu0 0.0
    %979 = vmatprep.subr.mxu0 0.0
    %980 = vmatpush1.msra.mxu0 0.0
    %981 = vmatprep.subr.mxu0 0.0
    %982 = vmatpush1.msra.mxu0 0.0
    %983 = vmatprep.subr.mxu0 0.0
    %984 = vmatpush1.msra.mxu0 0.0
    %985 = vmatprep.subr.mxu0 0.0
    %986 = vmatpush1.msra.mxu0 0.0
    %987 = vmatprep.subr.mxu0 0.0
    %988 = vmatpush1.msra.mxu0 0.0
    %989 = vmatprep.subr.mxu0 0.0
    %990 = vmatpush1.msra.mxu0 %v653
    %991 = vmatprep.subr.mxu0 0.0
    %992 = vmatpush1.msra.mxu0 %v652
    %993 = vmatprep.subr.mxu0 0.0
    %994 = vmatpush2.msra.mxu0 0.0
    %995 = vmatprep.subr.mxu0 0.0
    %996 = vmatpush2.msra.mxu0 0.0
    %997 = vmatprep.subr.mxu0 0.0
    %998 = vmatpush2.msra.mxu0 0.0
    %999 = vmatprep.subr.mxu0 0.0
    %1000 = vmatpush2.msra.mxu0 0.0
    %1001 = vmatprep.subr.mxu0 0.0
    %1002 = vmatpush2.msra.mxu0 0.0
    %1003 = vmatprep.subr.mxu0 0.0
    %1004 = vmatpush2.msra.mxu0 0.0
    %1005 = vmatprep.subr.mxu0 0.0
    %1006 = vmatpush2.msra.mxu0 0.0
    %1007 = vmatprep.subr.mxu0 0.0
    %1008 = vmatpush2.msra.mxu0 0.0
    %1009 = vmatprep.subr.mxu0 0.0
    %1010 = vmatpush2.msra.mxu0 0.0
    %1011 = vmatprep.subr.mxu0 0.0
    %1012 = vmatpush2.msra.mxu0 0.0
    %1013 = vmatprep.subr.mxu0 0.0
    %1014 = vmatpush2.msra.mxu0 0.0
    %1015 = vmatprep.subr.mxu0 0.0
    %1016 = vmatpush2.msra.mxu0 0.0
    %1017 = vmatprep.subr.mxu0 0.0
    %1018 = vmatpush2.msra.mxu0 0.0
    %1019 = vmatprep.subr.mxu0 0.0
    %1020 = vmatpush2.msra.mxu0 0.0
    %1021 = vmatprep.subr.mxu0 0.0
    %1022 = vmatpush2.msra.mxu0 0.0
    %1023 = vmatprep.subr.mxu0 0.0
    %1024 = vmatpush2.msra.mxu0 0.0
    %1025 = vmatprep.mubr.f32.mxu0 0.0
    %1026 = vmatmul.mubr.f32.gmra.mxu0 %v938
    %v1027 = vpop.f32.mrf.mxu0
    %v1028 = vadd.f32 0.0, %v1027
    %v1029 = vpop.f32.mrf.mxu0
    %1030 = vmatprep.mubr.f32.mxu0 0.0
    %1031 = vmatmul.mubr.f32.gmra.mxu0 %v941
    %v1032 = vpop.f32.mrf.mxu0
    %v1033 = vadd.f32 0.0, %v1032
    %v1034 = vpop.f32.mrf.mxu0
    %1035 = vmatprep.mubr.f32.mxu0 0.0
    %1036 = vmatmul.mubr.f32.gmra.mxu0 %v944
    %v1037 = vpop.f32.mrf.mxu0
    %v1038 = vadd.f32 0.0, %v1037
    %v1039 = vpop.f32.mrf.mxu0
    %1040 = vmatprep.mubr.f32.mxu0 0.0
    %1041 = vmatmul.mubr.f32.gmra.mxu0 %v947
    %v1042 = vpop.f32.mrf.mxu0
    %v1043 = vadd.f32 0.0, %v1042
    %v1044 = vpop.f32.mrf.mxu0
    %1045 = vmatprep.mubr.f32.mxu0 0.0
    %1046 = vmatmul.mubr.f32.gmra.mxu0 %v950
    %v1047 = vpop.f32.mrf.mxu0
    %v1048 = vadd.f32 0.0, %v1047
    %v1049 = vpop.f32.mrf.mxu0
    %1050 = vmatprep.mubr.f32.mxu0 0.0
    %1051 = vmatmul.mubr.f32.gmra.mxu0 %v953
    %v1052 = vpop.f32.mrf.mxu0
    %v1053 = vadd.f32 0.0, %v1052
    %v1054 = vpop.f32.mrf.mxu0
    %1055 = vmatprep.mubr.f32.mxu0 0.0
    %1056 = vmatmul.mubr.f32.gmra.mxu0 %v956
    %v1057 = vpop.f32.mrf.mxu0
    %v1058 = vadd.f32 0.0, %v1057
    %v1059 = vpop.f32.mrf.mxu0
    %1060 = vmatprep.mubr.f32.mxu0 0.0
    %1061 = vmatmul.mubr.f32.gmra.mxu0 %v959
    %v1062 = vpop.f32.mrf.mxu0
    %v1063 = vadd.f32 0.0, %v1062
    %v1064 = vpop.f32.mrf.mxu0
    %1065 = vdwg.mxu0
    %1067 = vset.pattern.permute.xlu0 0
    %1068 = vperm.xlu0 %1067, %v1028
    %v1069 = vpop.permute.xlu0 %1068
    %1072 = vset.pattern.permute.xlu0 0
    %1073 = vperm.xlu0 %1072, %v1033
    %v1074 = vpop.permute.xlu0 %1073
    %1077 = vset.pattern.permute.xlu0 0
    %1078 = vperm.xlu0 %1077, %v1038
    %v1079 = vpop.permute.xlu0 %1078
    %1082 = vset.pattern.permute.xlu0 0
    %1083 = vperm.xlu0 %1082, %v1043
    %v1084 = vpop.permute.xlu0 %1083
    %1087 = vset.pattern.permute.xlu0 0
    %1088 = vperm.xlu0 %1087, %v1048
    %v1089 = vpop.permute.xlu0 %1088
    %1092 = vset.pattern.permute.xlu0 0
    %1093 = vperm.xlu0 %1092, %v1053
    %v1094 = vpop.permute.xlu0 %1093
    %1097 = vset.pattern.permute.xlu0 0
    %1098 = vperm.xlu0 %1097, %v1058
    %v1099 = vpop.permute.xlu0 %1098
    %1102 = vset.pattern.permute.xlu0 0
    %1103 = vperm.xlu0 %1102, %v1063
    %v1104 = vpop.permute.xlu0 %1103
    %v1106 = vmul.f32 %v1069, %v644
    %v1107 = vmul.f32 %v1074, %v645
    %v1108 = vmul.f32 %v1079, %v646
    %v1109 = vmul.f32 %v1084, %v647
    %v1110 = vmul.f32 %v1089, %v648
    %v1111 = vmul.f32 %v1094, %v649
    %v1112 = vmul.f32 %v1099, %v650
    %v1113 = vmul.f32 %v1104, %v651
    %v1114 = vld [vmem:[#allocation4] sm:$0x1]
    %v1116 = vlaneseq
    %v1117 = vshrl.u32 %v1116, 7
    %v1118 = vsub.s32 0, %v1117
    %v1119 = vrot.slane %v1114, %v1118
    %1120 = vset.pattern.permute.xlu0 0
    %1121 = vperm.xlu0 %1120, %v1119
    %v1122 = vpop.permute.xlu0 %1121
    %vm1124 = vcmask 523264
    %v1126 = vsel %vm1124, %v643, 0
    %1128 = vmatprep.subr.mxu0 0.0
    %1129 = vmatpush1.msra.mxu0 0.0
    %1130 = vmatprep.subr.mxu0 0.0
    %1131 = vmatpush1.msra.mxu0 0.0
    %1132 = vmatprep.subr.mxu0 0.0
    %1133 = vmatpush1.msra.mxu0 0.0
    %1134 = vmatprep.subr.mxu0 0.0
    %1135 = vmatpush1.msra.mxu0 0.0
    %1136 = vmatprep.subr.mxu0 0.0
    %1137 = vmatpush1.msra.mxu0 0.0
    %1138 = vmatprep.subr.mxu0 0.0
    %1139 = vmatpush1.msra.mxu0 0.0
    %1140 = vmatprep.subr.mxu0 0.0
    %1141 = vmatpush1.msra.mxu0 0.0
    %1142 = vmatprep.subr.mxu0 0.0
    %1143 = vmatpush1.msra.mxu0 0.0
    %1144 = vmatprep.subr.mxu0 0.0
    %1145 = vmatpush1.msra.mxu0 %v1113
    %1146 = vmatprep.subr.mxu0 0.0
    %1147 = vmatpush1.msra.mxu0 %v1112
    %1148 = vmatprep.subr.mxu0 0.0
    %1149 = vmatpush1.msra.mxu0 %v1111
    %1150 = vmatprep.subr.mxu0 0.0
    %1151 = vmatpush1.msra.mxu0 %v1110
    %1152 = vmatprep.subr.mxu0 0.0
    %1153 = vmatpush1.msra.mxu0 %v1109
    %1154 = vmatprep.subr.mxu0 0.0
    %1155 = vmatpush1.msra.mxu0 %v1108
    %1156 = vmatprep.subr.mxu0 0.0
    %1157 = vmatpush1.msra.mxu0 %v1107
    %1158 = vmatprep.subr.mxu0 0.0
    %1159 = vmatpush1.msra.mxu0 %v1106
    %1160 = vmatprep.subr.mxu0 0.0
    %1161 = vmatpush2.msra.mxu0 0.0
    %1162 = vmatprep.subr.mxu0 0.0
    %1163 = vmatpush2.msra.mxu0 0.0
    %1164 = vmatprep.subr.mxu0 0.0
    %1165 = vmatpush2.msra.mxu0 0.0
    %1166 = vmatprep.subr.mxu0 0.0
    %1167 = vmatpush2.msra.mxu0 0.0
    %1168 = vmatprep.subr.mxu0 0.0
    %1169 = vmatpush2.msra.mxu0 0.0
    %1170 = vmatprep.subr.mxu0 0.0
    %1171 = vmatpush2.msra.mxu0 0.0
    %1172 = vmatprep.subr.mxu0 0.0
    %1173 = vmatpush2.msra.mxu0 0.0
    %1174 = vmatprep.subr.mxu0 0.0
    %1175 = vmatpush2.msra.mxu0 0.0
    %1176 = vmatprep.subr.mxu0 0.0
    %1177 = vmatpush2.msra.mxu0 0.0
    %1178 = vmatprep.subr.mxu0 0.0
    %1179 = vmatpush2.msra.mxu0 0.0
    %1180 = vmatprep.subr.mxu0 0.0
    %1181 = vmatpush2.msra.mxu0 0.0
    %1182 = vmatprep.subr.mxu0 0.0
    %1183 = vmatpush2.msra.mxu0 0.0
    %1184 = vmatprep.subr.mxu0 0.0
    %1185 = vmatpush2.msra.mxu0 0.0
    %1186 = vmatprep.subr.mxu0 0.0
    %1187 = vmatpush2.msra.mxu0 0.0
    %1188 = vmatprep.subr.mxu0 0.0
    %1189 = vmatpush2.msra.mxu0 0.0
    %1190 = vmatprep.subr.mxu0 0.0
    %1191 = vmatpush2.msra.mxu0 0.0
    %1192 = vmatprep.mubr.f32.mxu0 0.0
    %1193 = vmatmul.mubr.f32.gmra.mxu0 %v1126
    %v1194 = vpop.f32.mrf.mxu0
    %v1195 = vadd.f32 %v1122, %v1194
    %v1196 = vpop.f32.mrf.mxu0
    %1197 = vdwg.mxu0
    %v1198 = vld [vmem:[#allocation9] sm:$0xff]
    %vm1199 = vcmp.gt.f32.partialorder %v1198, 0.0
    %v1200 = vsel %vm1199, %v1195, -9e+15
    %v1201 = vsel %vm654, %v1200, -inf
    %1202 = vmax.xlane.f32.xlu0 %v1201
    %v1203 = vpop.xlane.xlu0 %1202
    %v1204 = vsub.f32 %v1200, %v1203
    %v1205 = vmul.f32 %v1204, 1.442695
    %v1206 = vpow.pop %v1205
    %v1207 = vsel %vm654, %v1206, 0.0
    %1208 = vadd.xlane.f32.xlu0 %v1207
    %v1209 = vpop.xlane.xlu0 %1208
    %v1210 = vrcp.pop %v1209
    %v1211 = vmul.f32 %v1206, %v1210
    %1213 = vset.pattern.permute.xlu0 0
    %1214 = vperm.xlu0 %1213, %v619
    %v1215 = vpop.permute.xlu0 %1214
    %v1217 = vmul.f32 %v1211, %v1215
    %v1218 = vld [vmem:[#allocation5] sm:$0x1]
    %v1220 = vlaneseq
    %v1221 = vshrl.u32 %v1220, 7
    %v1222 = vsub.s32 0, %v1221
    %v1223 = vrot.slane %v1218, %v1222
    %1224 = vset.pattern.permute.xlu0 0
    %1225 = vperm.xlu0 %1224, %v1223
    %v1226 = vpop.permute.xlu0 %1225
    %v1228 = vadd.f32 %v1217, %v1226
    %vm1229 = vcmp.gt.f32.partialorder %v1228, 0.0
    %v1230 = vmul.f32 %v1228, 0.01
    %v1231 = vsel %vm1229, %v1228, %v1230
    %v1233 = vsel %vm654, %v1211, 0
    %1235 = vmatprep.subr.mxu0 0.0
    %1236 = vmatpush1.msra.mxu0 0.0
    %1237 = vmatprep.subr.mxu0 0.0
    %1238 = vmatpush1.msra.mxu0 0.0
    %1239 = vmatprep.subr.mxu0 0.0
    %1240 = vmatpush1.msra.mxu0 0.0
    %1241 = vmatprep.subr.mxu0 0.0
    %1242 = vmatpush1.msra.mxu0 0.0
    %1243 = vmatprep.subr.mxu0 0.0
    %1244 = vmatpush1.msra.mxu0 0.0
    %1245 = vmatprep.subr.mxu0 0.0
    %1246 = vmatpush1.msra.mxu0 0.0
    %1247 = vmatprep.subr.mxu0 0.0
    %1248 = vmatpush1.msra.mxu0 0.0
    %1249 = vmatprep.subr.mxu0 0.0
    %1250 = vmatpush1.msra.mxu0 0.0
    %1251 = vmatprep.subr.mxu0 0.0
    %1252 = vmatpush1.msra.mxu0 0.0
    %1253 = vmatprep.subr.mxu0 0.0
    %1254 = vmatpush1.msra.mxu0 0.0
    %1255 = vmatprep.subr.mxu0 0.0
    %1256 = vmatpush1.msra.mxu0 0.0
    %1257 = vmatprep.subr.mxu0 0.0
    %1258 = vmatpush1.msra.mxu0 0.0
    %1259 = vmatprep.subr.mxu0 0.0
    %1260 = vmatpush1.msra.mxu0 0.0
    %1261 = vmatprep.subr.mxu0 0.0
    %1262 = vmatpush1.msra.mxu0 0.0
    %1263 = vmatprep.subr.mxu0 0.0
    %1264 = vmatpush1.msra.mxu0 0.0
    %1265 = vmatprep.subr.mxu0 0.0
    %1266 = vmatpush1.msra.mxu0 %v375
    %1267 = vmatprep.subr.mxu0 0.0
    %1268 = vmatpush2.msra.mxu0 0.0
    %1269 = vmatprep.subr.mxu0 0.0
    %1270 = vmatpush2.msra.mxu0 0.0
    %1271 = vmatprep.subr.mxu0 0.0
    %1272 = vmatpush2.msra.mxu0 0.0
    %1273 = vmatprep.subr.mxu0 0.0
    %1274 = vmatpush2.msra.mxu0 0.0
    %1275 = vmatprep.subr.mxu0 0.0
    %1276 = vmatpush2.msra.mxu0 0.0
    %1277 = vmatprep.subr.mxu0 0.0
    %1278 = vmatpush2.msra.mxu0 0.0
    %1279 = vmatprep.subr.mxu0 0.0
    %1280 = vmatpush2.msra.mxu0 0.0
    %1281 = vmatprep.subr.mxu0 0.0
    %1282 = vmatpush2.msra.mxu0 0.0
    %1283 = vmatprep.subr.mxu0 0.0
    %1284 = vmatpush2.msra.mxu0 0.0
    %1285 = vmatprep.subr.mxu0 0.0
    %1286 = vmatpush2.msra.mxu0 0.0
    %1287 = vmatprep.subr.mxu0 0.0
    %1288 = vmatpush2.msra.mxu0 0.0
    %1289 = vmatprep.subr.mxu0 0.0
    %1290 = vmatpush2.msra.mxu0 0.0
    %1291 = vmatprep.subr.mxu0 0.0
    %1292 = vmatpush2.msra.mxu0 0.0
    %1293 = vmatprep.subr.mxu0 0.0
    %1294 = vmatpush2.msra.mxu0 0.0
    %1295 = vmatprep.subr.mxu0 0.0
    %1296 = vmatpush2.msra.mxu0 0.0
    %1297 = vmatprep.subr.mxu0 0.0
    %1298 = vmatpush2.msra.mxu0 0.0
    %1299 = vmatprep.mubr.f32.mxu0 0.0
    %1300 = vmatmul.mubr.f32.gmra.mxu0 %v1233
    %v1301 = vpop.f32.mrf.mxu0
    %v1302 = vadd.f32 0.0, %v1301
    %v1303 = vpop.f32.mrf.mxu0
    %1304 = vdwg.mxu0
    %1305 = vmatprep.subr.mxu0 0.0
    %1306 = vmatpush1.msra.mxu0 0.0
    %1307 = vmatprep.subr.mxu0 0.0
    %1308 = vmatpush1.msra.mxu0 0.0
    %1309 = vmatprep.subr.mxu0 0.0
    %1310 = vmatpush1.msra.mxu0 0.0
    %1311 = vmatprep.subr.mxu0 0.0
    %1312 = vmatpush1.msra.mxu0 0.0
    %1313 = vmatprep.subr.mxu0 0.0
    %1314 = vmatpush1.msra.mxu0 0.0
    %1315 = vmatprep.subr.mxu0 0.0
    %1316 = vmatpush1.msra.mxu0 0.0
    %1317 = vmatprep.subr.mxu0 0.0
    %1318 = vmatpush1.msra.mxu0 0.0
    %1319 = vmatprep.subr.mxu0 0.0
    %1320 = vmatpush1.msra.mxu0 0.0
    %1321 = vmatprep.subr.mxu0 0.0
    %1322 = vmatpush1.msra.mxu0 0.0
    %1323 = vmatprep.subr.mxu0 0.0
    %1324 = vmatpush1.msra.mxu0 0.0
    %1325 = vmatprep.subr.mxu0 0.0
    %1326 = vmatpush1.msra.mxu0 0.0
    %1327 = vmatprep.subr.mxu0 0.0
    %1328 = vmatpush1.msra.mxu0 0.0
    %1329 = vmatprep.subr.mxu0 0.0
    %1330 = vmatpush1.msra.mxu0 0.0
    %1331 = vmatprep.subr.mxu0 0.0
    %1332 = vmatpush1.msra.mxu0 0.0
    %1333 = vmatprep.subr.mxu0 0.0
    %1334 = vmatpush1.msra.mxu0 0.0
    %1335 = vmatprep.subr.mxu0 0.0
    %1336 = vmatpush1.msra.mxu0 %v545
    %1337 = vmatprep.subr.mxu0 0.0
    %1338 = vmatpush2.msra.mxu0 0.0
    %1339 = vmatprep.subr.mxu0 0.0
    %1340 = vmatpush2.msra.mxu0 0.0
    %1341 = vmatprep.subr.mxu0 0.0
    %1342 = vmatpush2.msra.mxu0 0.0
    %1343 = vmatprep.subr.mxu0 0.0
    %1344 = vmatpush2.msra.mxu0 0.0
    %1345 = vmatprep.subr.mxu0 0.0
    %1346 = vmatpush2.msra.mxu0 0.0
    %1347 = vmatprep.subr.mxu0 0.0
    %1348 = vmatpush2.msra.mxu0 0.0
    %1349 = vmatprep.subr.mxu0 0.0
    %1350 = vmatpush2.msra.mxu0 0.0
    %1351 = vmatprep.subr.mxu0 0.0
    %1352 = vmatpush2.msra.mxu0 0.0
    %1353 = vmatprep.subr.mxu0 0.0
    %1354 = vmatpush2.msra.mxu0 0.0
    %1355 = vmatprep.subr.mxu0 0.0
    %1356 = vmatpush2.msra.mxu0 0.0
    %1357 = vmatprep.subr.mxu0 0.0
    %1358 = vmatpush2.msra.mxu0 0.0
    %1359 = vmatprep.subr.mxu0 0.0
    %1360 = vmatpush2.msra.mxu0 0.0
    %1361 = vmatprep.subr.mxu0 0.0
    %1362 = vmatpush2.msra.mxu0 0.0
    %1363 = vmatprep.subr.mxu0 0.0
    %1364 = vmatpush2.msra.mxu0 0.0
    %1365 = vmatprep.subr.mxu0 0.0
    %1366 = vmatpush2.msra.mxu0 0.0
    %1367 = vmatprep.subr.mxu0 0.0
    %1368 = vmatpush2.msra.mxu0 0.0
    %1369 = vmatprep.mubr.f32.mxu0 0.0
    %1370 = vmatmul.mubr.f32.gmra.mxu0 %v656
    %v1371 = vpop.f32.mrf.mxu0
    %v1372 = vadd.f32 0.0, %v1371
    %v1373 = vpop.f32.mrf.mxu0
    %1374 = vmatprep.mubr.f32.mxu0 0.0
    %1375 = vmatmul.mubr.f32.gmra.mxu0 %v659
    %v1376 = vpop.f32.mrf.mxu0
    %v1377 = vadd.f32 0.0, %v1376
    %v1378 = vpop.f32.mrf.mxu0
    %1379 = vmatprep.mubr.f32.mxu0 0.0
    %1380 = vmatmul.mubr.f32.gmra.mxu0 %v662
    %v1381 = vpop.f32.mrf.mxu0
    %v1382 = vadd.f32 0.0, %v1381
    %v1383 = vpop.f32.mrf.mxu0
    %1384 = vmatprep.mubr.f32.mxu0 0.0
    %1385 = vmatmul.mubr.f32.gmra.mxu0 %v665
    %v1386 = vpop.f32.mrf.mxu0
    %v1387 = vadd.f32 0.0, %v1386
    %v1388 = vpop.f32.mrf.mxu0
    %1389 = vmatprep.mubr.f32.mxu0 0.0
    %1390 = vmatmul.mubr.f32.gmra.mxu0 %v668
    %v1391 = vpop.f32.mrf.mxu0
    %v1392 = vadd.f32 0.0, %v1391
    %v1393 = vpop.f32.mrf.mxu0
    %1394 = vmatprep.mubr.f32.mxu0 0.0
    %1395 = vmatmul.mubr.f32.gmra.mxu0 %v671
    %v1396 = vpop.f32.mrf.mxu0
    %v1397 = vadd.f32 0.0, %v1396
    %v1398 = vpop.f32.mrf.mxu0
    %1399 = vmatprep.mubr.f32.mxu0 0.0
    %1400 = vmatmul.mubr.f32.gmra.mxu0 %v674
    %v1401 = vpop.f32.mrf.mxu0
    %v1402 = vadd.f32 0.0, %v1401
    %v1403 = vpop.f32.mrf.mxu0
    %1404 = vmatprep.mubr.f32.mxu0 0.0
    %1405 = vmatmul.mubr.f32.gmra.mxu0 %v677
    %v1406 = vpop.f32.mrf.mxu0
    %v1407 = vadd.f32 0.0, %v1406
    %v1408 = vpop.f32.mrf.mxu0
    %1409 = vdwg.mxu0
    %1410 = vmatprep.subr.mxu0 0.0
    %1411 = vmatpush1.msra.mxu0 0.0
    %1412 = vmatprep.subr.mxu0 0.0
    %1413 = vmatpush1.msra.mxu0 0.0
    %1414 = vmatprep.subr.mxu0 0.0
    %1415 = vmatpush1.msra.mxu0 0.0
    %1416 = vmatprep.subr.mxu0 0.0
    %1417 = vmatpush1.msra.mxu0 0.0
    %1418 = vmatprep.subr.mxu0 0.0
    %1419 = vmatpush1.msra.mxu0 0.0
    %1420 = vmatprep.subr.mxu0 0.0
    %1421 = vmatpush1.msra.mxu0 0.0
    %1422 = vmatprep.subr.mxu0 0.0
    %1423 = vmatpush1.msra.mxu0 0.0
    %1424 = vmatprep.subr.mxu0 0.0
    %1425 = vmatpush1.msra.mxu0 0.0
    %1426 = vmatprep.subr.mxu0 0.0
    %1427 = vmatpush1.msra.mxu0 0.0
    %1428 = vmatprep.subr.mxu0 0.0
    %1429 = vmatpush1.msra.mxu0 0.0
    %1430 = vmatprep.subr.mxu0 0.0
    %1431 = vmatpush1.msra.mxu0 0.0
    %1432 = vmatprep.subr.mxu0 0.0
    %1433 = vmatpush1.msra.mxu0 0.0
    %1434 = vmatprep.subr.mxu0 0.0
    %1435 = vmatpush1.msra.mxu0 0.0
    %1436 = vmatprep.subr.mxu0 0.0
    %1437 = vmatpush1.msra.mxu0 0.0
    %1438 = vmatprep.subr.mxu0 0.0
    %1439 = vmatpush1.msra.mxu0 0.0
    %1440 = vmatprep.subr.mxu0 0.0
    %1441 = vmatpush1.msra.mxu0 %v466
    %1442 = vmatprep.subr.mxu0 0.0
    %1443 = vmatpush2.msra.mxu0 0.0
    %1444 = vmatprep.subr.mxu0 0.0
    %1445 = vmatpush2.msra.mxu0 0.0
    %1446 = vmatprep.subr.mxu0 0.0
    %1447 = vmatpush2.msra.mxu0 0.0
    %1448 = vmatprep.subr.mxu0 0.0
    %1449 = vmatpush2.msra.mxu0 0.0
    %1450 = vmatprep.subr.mxu0 0.0
    %1451 = vmatpush2.msra.mxu0 0.0
    %1452 = vmatprep.subr.mxu0 0.0
    %1453 = vmatpush2.msra.mxu0 0.0
    %1454 = vmatprep.subr.mxu0 0.0
    %1455 = vmatpush2.msra.mxu0 0.0
    %1456 = vmatprep.subr.mxu0 0.0
    %1457 = vmatpush2.msra.mxu0 0.0
    %1458 = vmatprep.subr.mxu0 0.0
    %1459 = vmatpush2.msra.mxu0 0.0
    %1460 = vmatprep.subr.mxu0 0.0
    %1461 = vmatpush2.msra.mxu0 0.0
    %1462 = vmatprep.subr.mxu0 0.0
    %1463 = vmatpush2.msra.mxu0 0.0
    %1464 = vmatprep.subr.mxu0 0.0
    %1465 = vmatpush2.msra.mxu0 0.0
    %1466 = vmatprep.subr.mxu0 0.0
    %1467 = vmatpush2.msra.mxu0 0.0
    %1468 = vmatprep.subr.mxu0 0.0
    %1469 = vmatpush2.msra.mxu0 0.0
    %1470 = vmatprep.subr.mxu0 0.0
    %1471 = vmatpush2.msra.mxu0 0.0
    %1472 = vmatprep.subr.mxu0 0.0
    %1473 = vmatpush2.msra.mxu0 0.0
    %1474 = vmatprep.mubr.f32.mxu0 0.0
    %1475 = vmatmul.mubr.f32.gmra.mxu0 %v785
    %v1476 = vpop.f32.mrf.mxu0
    %v1477 = vadd.f32 %v1372, %v1476
    %v1478 = vpop.f32.mrf.mxu0
    %1479 = vmatprep.mubr.f32.mxu0 0.0
    %1480 = vmatmul.mubr.f32.gmra.mxu0 %v788
    %v1481 = vpop.f32.mrf.mxu0
    %v1482 = vadd.f32 %v1377, %v1481
    %v1483 = vpop.f32.mrf.mxu0
    %1484 = vmatprep.mubr.f32.mxu0 0.0
    %1485 = vmatmul.mubr.f32.gmra.mxu0 %v791
    %v1486 = vpop.f32.mrf.mxu0
    %v1487 = vadd.f32 %v1382, %v1486
    %v1488 = vpop.f32.mrf.mxu0
    %1489 = vmatprep.mubr.f32.mxu0 0.0
    %1490 = vmatmul.mubr.f32.gmra.mxu0 %v794
    %v1491 = vpop.f32.mrf.mxu0
    %v1492 = vadd.f32 %v1387, %v1491
    %v1493 = vpop.f32.mrf.mxu0
    %1494 = vmatprep.mubr.f32.mxu0 0.0
    %1495 = vmatmul.mubr.f32.gmra.mxu0 %v797
    %v1496 = vpop.f32.mrf.mxu0
    %v1497 = vadd.f32 %v1392, %v1496
    %v1498 = vpop.f32.mrf.mxu0
    %1499 = vmatprep.mubr.f32.mxu0 0.0
    %1500 = vmatmul.mubr.f32.gmra.mxu0 %v800
    %v1501 = vpop.f32.mrf.mxu0
    %v1502 = vadd.f32 %v1397, %v1501
    %v1503 = vpop.f32.mrf.mxu0
    %1504 = vmatprep.mubr.f32.mxu0 0.0
    %1505 = vmatmul.mubr.f32.gmra.mxu0 %v803
    %v1506 = vpop.f32.mrf.mxu0
    %v1507 = vadd.f32 %v1402, %v1506
    %v1508 = vpop.f32.mrf.mxu0
    %1509 = vmatprep.mubr.f32.mxu0 0.0
    %1510 = vmatmul.mubr.f32.gmra.mxu0 %v806
    %v1511 = vpop.f32.mrf.mxu0
    %v1512 = vadd.f32 %v1407, %v1511
    %v1513 = vpop.f32.mrf.mxu0
    %1514 = vdwg.mxu0
    %vm1515 = vcmp.gt.f32.partialorder %v1477, 0.0
    %vm1516 = vcmp.gt.f32.partialorder %v1482, 0.0
    %vm1517 = vcmp.gt.f32.partialorder %v1487, 0.0
    %vm1518 = vcmp.gt.f32.partialorder %v1492, 0.0
    %vm1519 = vcmp.gt.f32.partialorder %v1497, 0.0
    %vm1520 = vcmp.gt.f32.partialorder %v1502, 0.0
    %vm1521 = vcmp.gt.f32.partialorder %v1507, 0.0
    %vm1522 = vcmp.gt.f32.partialorder %v1512, 0.0
    %v1523 = vmul.f32 %v1477, 0.01
    %v1524 = vmul.f32 %v1482, 0.01
    %v1525 = vmul.f32 %v1487, 0.01
    %v1526 = vmul.f32 %v1492, 0.01
    %v1527 = vmul.f32 %v1497, 0.01
    %v1528 = vmul.f32 %v1502, 0.01
    %v1529 = vmul.f32 %v1507, 0.01
    %v1530 = vmul.f32 %v1512, 0.01
    %v1531 = vsel %vm1515, %v1477, %v1523
    %v1532 = vsel %vm1516, %v1482, %v1524
    %v1533 = vsel %vm1517, %v1487, %v1525
    %v1534 = vsel %vm1518, %v1492, %v1526
    %v1535 = vsel %vm1519, %v1497, %v1527
    %v1536 = vsel %vm1520, %v1502, %v1528
    %v1537 = vsel %vm1521, %v1507, %v1529
    %v1538 = vsel %vm1522, %v1512, %v1530
    %v1540 = vsel %vm301, %v1531, 0
    %v1543 = vsel %vm301, %v1532, 0
    %v1546 = vsel %vm301, %v1533, 0
    %v1549 = vsel %vm301, %v1534, 0
    %v1552 = vsel %vm301, %v1535, 0
    %v1555 = vsel %vm301, %v1536, 0
    %v1558 = vsel %vm301, %v1537, 0
    %v1561 = vsel %vm301, %v1538, 0
    %1563 = vmatprep.subr.mxu0 0.0
    %1564 = vmatpush1.msra.mxu0 0.0
    %1565 = vmatprep.subr.mxu0 0.0
    %1566 = vmatpush1.msra.mxu0 0.0
    %1567 = vmatprep.subr.mxu0 0.0
    %1568 = vmatpush1.msra.mxu0 0.0
    %1569 = vmatprep.subr.mxu0 0.0
    %1570 = vmatpush1.msra.mxu0 0.0
    %1571 = vmatprep.subr.mxu0 0.0
    %1572 = vmatpush1.msra.mxu0 0.0
    %1573 = vmatprep.subr.mxu0 0.0
    %1574 = vmatpush1.msra.mxu0 0.0
    %1575 = vmatprep.subr.mxu0 0.0
    %1576 = vmatpush1.msra.mxu0 0.0
    %1577 = vmatprep.subr.mxu0 0.0
    %1578 = vmatpush1.msra.mxu0 0.0
    %1579 = vmatprep.subr.mxu0 0.0
    %1580 = vmatpush1.msra.mxu0 0.0
    %1581 = vmatprep.subr.mxu0 0.0
    %1582 = vmatpush1.msra.mxu0 0.0
    %1583 = vmatprep.subr.mxu0 0.0
    %1584 = vmatpush1.msra.mxu0 0.0
    %1585 = vmatprep.subr.mxu0 0.0
    %1586 = vmatpush1.msra.mxu0 0.0
    %1587 = vmatprep.subr.mxu0 0.0
    %1588 = vmatpush1.msra.mxu0 0.0
    %1589 = vmatprep.subr.mxu0 0.0
    %1590 = vmatpush1.msra.mxu0 0.0
    %1591 = vmatprep.subr.mxu0 0.0
    %1592 = vmatpush1.msra.mxu0 %v653
    %1593 = vmatprep.subr.mxu0 0.0
    %1594 = vmatpush1.msra.mxu0 %v652
    %1595 = vmatprep.subr.mxu0 0.0
    %1596 = vmatpush2.msra.mxu0 0.0
    %1597 = vmatprep.subr.mxu0 0.0
    %1598 = vmatpush2.msra.mxu0 0.0
    %1599 = vmatprep.subr.mxu0 0.0
    %1600 = vmatpush2.msra.mxu0 0.0
    %1601 = vmatprep.subr.mxu0 0.0
    %1602 = vmatpush2.msra.mxu0 0.0
    %1603 = vmatprep.subr.mxu0 0.0
    %1604 = vmatpush2.msra.mxu0 0.0
    %1605 = vmatprep.subr.mxu0 0.0
    %1606 = vmatpush2.msra.mxu0 0.0
    %1607 = vmatprep.subr.mxu0 0.0
    %1608 = vmatpush2.msra.mxu0 0.0
    %1609 = vmatprep.subr.mxu0 0.0
    %1610 = vmatpush2.msra.mxu0 0.0
    %1611 = vmatprep.subr.mxu0 0.0
    %1612 = vmatpush2.msra.mxu0 0.0
    %1613 = vmatprep.subr.mxu0 0.0
    %1614 = vmatpush2.msra.mxu0 0.0
    %1615 = vmatprep.subr.mxu0 0.0
    %1616 = vmatpush2.msra.mxu0 0.0
    %1617 = vmatprep.subr.mxu0 0.0
    %1618 = vmatpush2.msra.mxu0 0.0
    %1619 = vmatprep.subr.mxu0 0.0
    %1620 = vmatpush2.msra.mxu0 0.0
    %1621 = vmatprep.subr.mxu0 0.0
    %1622 = vmatpush2.msra.mxu0 0.0
    %1623 = vmatprep.subr.mxu0 0.0
    %1624 = vmatpush2.msra.mxu0 0.0
    %1625 = vmatprep.subr.mxu0 0.0
    %1626 = vmatpush2.msra.mxu0 0.0
    %1627 = vmatprep.mubr.f32.mxu0 0.0
    %1628 = vmatmul.mubr.f32.gmra.mxu0 %v1540
    %v1629 = vpop.f32.mrf.mxu0
    %v1630 = vadd.f32 0.0, %v1629
    %v1631 = vpop.f32.mrf.mxu0
    %1632 = vmatprep.mubr.f32.mxu0 0.0
    %1633 = vmatmul.mubr.f32.gmra.mxu0 %v1543
    %v1634 = vpop.f32.mrf.mxu0
    %v1635 = vadd.f32 0.0, %v1634
    %v1636 = vpop.f32.mrf.mxu0
    %1637 = vmatprep.mubr.f32.mxu0 0.0
    %1638 = vmatmul.mubr.f32.gmra.mxu0 %v1546
    %v1639 = vpop.f32.mrf.mxu0
    %v1640 = vadd.f32 0.0, %v1639
    %v1641 = vpop.f32.mrf.mxu0
    %1642 = vmatprep.mubr.f32.mxu0 0.0
    %1643 = vmatmul.mubr.f32.gmra.mxu0 %v1549
    %v1644 = vpop.f32.mrf.mxu0
    %v1645 = vadd.f32 0.0, %v1644
    %v1646 = vpop.f32.mrf.mxu0
    %1647 = vmatprep.mubr.f32.mxu0 0.0
    %1648 = vmatmul.mubr.f32.gmra.mxu0 %v1552
    %v1649 = vpop.f32.mrf.mxu0
    %v1650 = vadd.f32 0.0, %v1649
    %v1651 = vpop.f32.mrf.mxu0
    %1652 = vmatprep.mubr.f32.mxu0 0.0
    %1653 = vmatmul.mubr.f32.gmra.mxu0 %v1555
    %v1654 = vpop.f32.mrf.mxu0
    %v1655 = vadd.f32 0.0, %v1654
    %v1656 = vpop.f32.mrf.mxu0
    %1657 = vmatprep.mubr.f32.mxu0 0.0
    %1658 = vmatmul.mubr.f32.gmra.mxu0 %v1558
    %v1659 = vpop.f32.mrf.mxu0
    %v1660 = vadd.f32 0.0, %v1659
    %v1661 = vpop.f32.mrf.mxu0
    %1662 = vmatprep.mubr.f32.mxu0 0.0
    %1663 = vmatmul.mubr.f32.gmra.mxu0 %v1561
    %v1664 = vpop.f32.mrf.mxu0
    %v1665 = vadd.f32 0.0, %v1664
    %v1666 = vpop.f32.mrf.mxu0
    %1667 = vdwg.mxu0
    %1669 = vset.pattern.permute.xlu0 0
    %1670 = vperm.xlu0 %1669, %v1630
    %v1671 = vpop.permute.xlu0 %1670
    %1674 = vset.pattern.permute.xlu0 0
    %1675 = vperm.xlu0 %1674, %v1635
    %v1676 = vpop.permute.xlu0 %1675
    %1679 = vset.pattern.permute.xlu0 0
    %1680 = vperm.xlu0 %1679, %v1640
    %v1681 = vpop.permute.xlu0 %1680
    %1684 = vset.pattern.permute.xlu0 0
    %1685 = vperm.xlu0 %1684, %v1645
    %v1686 = vpop.permute.xlu0 %1685
    %1689 = vset.pattern.permute.xlu0 0
    %1690 = vperm.xlu0 %1689, %v1650
    %v1691 = vpop.permute.xlu0 %1690
    %1694 = vset.pattern.permute.xlu0 0
    %1695 = vperm.xlu0 %1694, %v1655
    %v1696 = vpop.permute.xlu0 %1695
    %1699 = vset.pattern.permute.xlu0 0
    %1700 = vperm.xlu0 %1699, %v1660
    %v1701 = vpop.permute.xlu0 %1700
    %1704 = vset.pattern.permute.xlu0 0
    %1705 = vperm.xlu0 %1704, %v1665
    %v1706 = vpop.permute.xlu0 %1705
    %v1708 = vmul.f32 %v1671, %v644
    %v1709 = vmul.f32 %v1676, %v645
    %v1710 = vmul.f32 %v1681, %v646
    %v1711 = vmul.f32 %v1686, %v647
    %v1712 = vmul.f32 %v1691, %v648
    %v1713 = vmul.f32 %v1696, %v649
    %v1714 = vmul.f32 %v1701, %v650
    %v1715 = vmul.f32 %v1706, %v651
    %1716 = vmatprep.subr.mxu0 0.0
    %1717 = vmatpush1.msra.mxu0 0.0
    %1718 = vmatprep.subr.mxu0 0.0
    %1719 = vmatpush1.msra.mxu0 0.0
    %1720 = vmatprep.subr.mxu0 0.0
    %1721 = vmatpush1.msra.mxu0 0.0
    %1722 = vmatprep.subr.mxu0 0.0
    %1723 = vmatpush1.msra.mxu0 0.0
    %1724 = vmatprep.subr.mxu0 0.0
    %1725 = vmatpush1.msra.mxu0 0.0
    %1726 = vmatprep.subr.mxu0 0.0
    %1727 = vmatpush1.msra.mxu0 0.0
    %1728 = vmatprep.subr.mxu0 0.0
    %1729 = vmatpush1.msra.mxu0 0.0
    %1730 = vmatprep.subr.mxu0 0.0
    %1731 = vmatpush1.msra.mxu0 0.0
    %1732 = vmatprep.subr.mxu0 0.0
    %1733 = vmatpush1.msra.mxu0 %v1715
    %1734 = vmatprep.subr.mxu0 0.0
    %1735 = vmatpush1.msra.mxu0 %v1714
    %1736 = vmatprep.subr.mxu0 0.0
    %1737 = vmatpush1.msra.mxu0 %v1713
    %1738 = vmatprep.subr.mxu0 0.0
    %1739 = vmatpush1.msra.mxu0 %v1712
    %1740 = vmatprep.subr.mxu0 0.0
    %1741 = vmatpush1.msra.mxu0 %v1711
    %1742 = vmatprep.subr.mxu0 0.0
    %1743 = vmatpush1.msra.mxu0 %v1710
    %1744 = vmatprep.subr.mxu0 0.0
    %1745 = vmatpush1.msra.mxu0 %v1709
    %1746 = vmatprep.subr.mxu0 0.0
    %1747 = vmatpush1.msra.mxu0 %v1708
    %1748 = vmatprep.subr.mxu0 0.0
    %1749 = vmatpush2.msra.mxu0 0.0
    %1750 = vmatprep.subr.mxu0 0.0
    %1751 = vmatpush2.msra.mxu0 0.0
    %1752 = vmatprep.subr.mxu0 0.0
    %1753 = vmatpush2.msra.mxu0 0.0
    %1754 = vmatprep.subr.mxu0 0.0
    %1755 = vmatpush2.msra.mxu0 0.0
    %1756 = vmatprep.subr.mxu0 0.0
    %1757 = vmatpush2.msra.mxu0 0.0
    %1758 = vmatprep.subr.mxu0 0.0
    %1759 = vmatpush2.msra.mxu0 0.0
    %1760 = vmatprep.subr.mxu0 0.0
    %1761 = vmatpush2.msra.mxu0 0.0
    %1762 = vmatprep.subr.mxu0 0.0
    %1763 = vmatpush2.msra.mxu0 0.0
    %1764 = vmatprep.subr.mxu0 0.0
    %1765 = vmatpush2.msra.mxu0 0.0
    %1766 = vmatprep.subr.mxu0 0.0
    %1767 = vmatpush2.msra.mxu0 0.0
    %1768 = vmatprep.subr.mxu0 0.0
    %1769 = vmatpush2.msra.mxu0 0.0
    %1770 = vmatprep.subr.mxu0 0.0
    %1771 = vmatpush2.msra.mxu0 0.0
    %1772 = vmatprep.subr.mxu0 0.0
    %1773 = vmatpush2.msra.mxu0 0.0
    %1774 = vmatprep.subr.mxu0 0.0
    %1775 = vmatpush2.msra.mxu0 0.0
    %1776 = vmatprep.subr.mxu0 0.0
    %1777 = vmatpush2.msra.mxu0 0.0
    %1778 = vmatprep.subr.mxu0 0.0
    %1779 = vmatpush2.msra.mxu0 0.0
    %1780 = vmatprep.mubr.f32.mxu0 0.0
    %1781 = vmatmul.mubr.f32.gmra.mxu0 %v1126
    %v1782 = vpop.f32.mrf.mxu0
    %v1783 = vadd.f32 %v1122, %v1782
    %v1784 = vpop.f32.mrf.mxu0
    %1785 = vdwg.mxu0
    %s1786 = scalar_lea.vmem [#allocation9], 8
    %v1787 = vld [vmem:[%s1786] sm:$0xff]
    %vm1788 = vcmp.gt.f32.partialorder %v1787, 0.0
    %v1789 = vsel %vm1788, %v1783, -9e+15
    %v1790 = vsel %vm654, %v1789, -inf
    %1791 = vmax.xlane.f32.xlu0 %v1790
    %v1792 = vpop.xlane.xlu0 %1791
    %v1793 = vsub.f32 %v1789, %v1792
    %v1794 = vmul.f32 %v1793, 1.442695
    %v1795 = vpow.pop %v1794
    %v1796 = vsel %vm654, %v1795, 0.0
    %1797 = vadd.xlane.f32.xlu0 %v1796
    %v1798 = vpop.xlane.xlu0 %1797
    %v1799 = vrcp.pop %v1798
    %v1800 = vmul.f32 %v1795, %v1799
    %1802 = vset.pattern.permute.xlu0 0
    %1803 = vperm.xlu0 %1802, %v624
    %v1804 = vpop.permute.xlu0 %1803
    %v1806 = vmul.f32 %v1800, %v1804
    %v1807 = vadd.f32 %v1806, %v1226
    %vm1808 = vcmp.gt.f32.partialorder %v1807, 0.0
    %v1809 = vmul.f32 %v1807, 0.01
    %v1810 = vsel %vm1808, %v1807, %v1809
    %v1812 = vsel %vm654, %v1800, 0
    %1814 = vmatprep.subr.mxu0 0.0
    %1815 = vmatpush1.msra.mxu0 0.0
    %1816 = vmatprep.subr.mxu0 0.0
    %1817 = vmatpush1.msra.mxu0 0.0
    %1818 = vmatprep.subr.mxu0 0.0
    %1819 = vmatpush1.msra.mxu0 0.0
    %1820 = vmatprep.subr.mxu0 0.0
    %1821 = vmatpush1.msra.mxu0 0.0
    %1822 = vmatprep.subr.mxu0 0.0
    %1823 = vmatpush1.msra.mxu0 0.0
    %1824 = vmatprep.subr.mxu0 0.0
    %1825 = vmatpush1.msra.mxu0 0.0
    %1826 = vmatprep.subr.mxu0 0.0
    %1827 = vmatpush1.msra.mxu0 0.0
    %1828 = vmatprep.subr.mxu0 0.0
    %1829 = vmatpush1.msra.mxu0 0.0
    %1830 = vmatprep.subr.mxu0 0.0
    %1831 = vmatpush1.msra.mxu0 0.0
    %1832 = vmatprep.subr.mxu0 0.0
    %1833 = vmatpush1.msra.mxu0 0.0
    %1834 = vmatprep.subr.mxu0 0.0
    %1835 = vmatpush1.msra.mxu0 0.0
    %1836 = vmatprep.subr.mxu0 0.0
    %1837 = vmatpush1.msra.mxu0 0.0
    %1838 = vmatprep.subr.mxu0 0.0
    %1839 = vmatpush1.msra.mxu0 0.0
    %1840 = vmatprep.subr.mxu0 0.0
    %1841 = vmatpush1.msra.mxu0 0.0
    %1842 = vmatprep.subr.mxu0 0.0
    %1843 = vmatpush1.msra.mxu0 0.0
    %1844 = vmatprep.subr.mxu0 0.0
    %1845 = vmatpush1.msra.mxu0 %v380
    %1846 = vmatprep.subr.mxu0 0.0
    %1847 = vmatpush2.msra.mxu0 0.0
    %1848 = vmatprep.subr.mxu0 0.0
    %1849 = vmatpush2.msra.mxu0 0.0
    %1850 = vmatprep.subr.mxu0 0.0
    %1851 = vmatpush2.msra.mxu0 0.0
    %1852 = vmatprep.subr.mxu0 0.0
    %1853 = vmatpush2.msra.mxu0 0.0
    %1854 = vmatprep.subr.mxu0 0.0
    %1855 = vmatpush2.msra.mxu0 0.0
    %1856 = vmatprep.subr.mxu0 0.0
    %1857 = vmatpush2.msra.mxu0 0.0
    %1858 = vmatprep.subr.mxu0 0.0
    %1859 = vmatpush2.msra.mxu0 0.0
    %1860 = vmatprep.subr.mxu0 0.0
    %1861 = vmatpush2.msra.mxu0 0.0
    %1862 = vmatprep.subr.mxu0 0.0
    %1863 = vmatpush2.msra.mxu0 0.0
    %1864 = vmatprep.subr.mxu0 0.0
    %1865 = vmatpush2.msra.mxu0 0.0
    %1866 = vmatprep.subr.mxu0 0.0
    %1867 = vmatpush2.msra.mxu0 0.0
    %1868 = vmatprep.subr.mxu0 0.0
    %1869 = vmatpush2.msra.mxu0 0.0
    %1870 = vmatprep.subr.mxu0 0.0
    %1871 = vmatpush2.msra.mxu0 0.0
    %1872 = vmatprep.subr.mxu0 0.0
    %1873 = vmatpush2.msra.mxu0 0.0
    %1874 = vmatprep.subr.mxu0 0.0
    %1875 = vmatpush2.msra.mxu0 0.0
    %1876 = vmatprep.subr.mxu0 0.0
    %1877 = vmatpush2.msra.mxu0 0.0
    %1878 = vmatprep.mubr.f32.mxu0 0.0
    %1879 = vmatmul.mubr.f32.gmra.mxu0 %v1812
    %v1880 = vpop.f32.mrf.mxu0
    %v1881 = vadd.f32 0.0, %v1880
    %v1882 = vpop.f32.mrf.mxu0
    %1883 = vdwg.mxu0
    %v1884 = vld [vmem:[#allocation24] sm:$0xff]
    %v1885 = vld [vmem:[#allocation29] sm:$0x1]
    %v1887 = vlaneseq
    %v1888 = vshrl.u32 %v1887, 7
    %v1889 = vsub.s32 0, %v1888
    %v1890 = vrot.slane %v1885, %v1889
    %v1893 = vsel %vm654, %v1231, 0
    %v1896 = vsel %vm654, %v1810, 0
    %1898 = vmatprep.subr.mxu0 0.0
    %1899 = vmatpush1.msra.mxu0 0.0
    %1900 = vmatprep.subr.mxu0 0.0
    %1901 = vmatpush1.msra.mxu0 0.0
    %1902 = vmatprep.subr.mxu0 0.0
    %1903 = vmatpush1.msra.mxu0 0.0
    %1904 = vmatprep.subr.mxu0 0.0
    %1905 = vmatpush1.msra.mxu0 0.0
    %1906 = vmatprep.subr.mxu0 0.0
    %1907 = vmatpush1.msra.mxu0 0.0
    %1908 = vmatprep.subr.mxu0 0.0
    %1909 = vmatpush1.msra.mxu0 0.0
    %1910 = vmatprep.subr.mxu0 0.0
    %1911 = vmatpush1.msra.mxu0 0.0
    %1912 = vmatprep.subr.mxu0 0.0
    %1913 = vmatpush1.msra.mxu0 0.0
    %1914 = vmatprep.subr.mxu0 0.0
    %1915 = vmatpush1.msra.mxu0 0.0
    %1916 = vmatprep.subr.mxu0 0.0
    %1917 = vmatpush1.msra.mxu0 0.0
    %1918 = vmatprep.subr.mxu0 0.0
    %1919 = vmatpush1.msra.mxu0 0.0
    %1920 = vmatprep.subr.mxu0 0.0
    %1921 = vmatpush1.msra.mxu0 0.0
    %1922 = vmatprep.subr.mxu0 0.0
    %1923 = vmatpush1.msra.mxu0 0.0
    %1924 = vmatprep.subr.mxu0 0.0
    %1925 = vmatpush1.msra.mxu0 0.0
    %1926 = vmatprep.subr.mxu0 0.0
    %1927 = vmatpush1.msra.mxu0 0.0
    %1928 = vmatprep.subr.mxu0 0.0
    %1929 = vmatpush1.msra.mxu0 %v1884
    %1930 = vmatprep.subr.mxu0 0.0
    %1931 = vmatpush2.msra.mxu0 0.0
    %1932 = vmatprep.subr.mxu0 0.0
    %1933 = vmatpush2.msra.mxu0 0.0
    %1934 = vmatprep.subr.mxu0 0.0
    %1935 = vmatpush2.msra.mxu0 0.0
    %1936 = vmatprep.subr.mxu0 0.0
    %1937 = vmatpush2.msra.mxu0 0.0
    %1938 = vmatprep.subr.mxu0 0.0
    %1939 = vmatpush2.msra.mxu0 0.0
    %1940 = vmatprep.subr.mxu0 0.0
    %1941 = vmatpush2.msra.mxu0 0.0
    %1942 = vmatprep.subr.mxu0 0.0
    %1943 = vmatpush2.msra.mxu0 0.0
    %1944 = vmatprep.subr.mxu0 0.0
    %1945 = vmatpush2.msra.mxu0 0.0
    %1946 = vmatprep.subr.mxu0 0.0
    %1947 = vmatpush2.msra.mxu0 0.0
    %1948 = vmatprep.subr.mxu0 0.0
    %1949 = vmatpush2.msra.mxu0 0.0
    %1950 = vmatprep.subr.mxu0 0.0
    %1951 = vmatpush2.msra.mxu0 0.0
    %1952 = vmatprep.subr.mxu0 0.0
    %1953 = vmatpush2.msra.mxu0 0.0
    %1954 = vmatprep.subr.mxu0 0.0
    %1955 = vmatpush2.msra.mxu0 0.0
    %1956 = vmatprep.subr.mxu0 0.0
    %1957 = vmatpush2.msra.mxu0 0.0
    %1958 = vmatprep.subr.mxu0 0.0
    %1959 = vmatpush2.msra.mxu0 0.0
    %1960 = vmatprep.subr.mxu0 0.0
    %1961 = vmatpush2.msra.mxu0 0.0
    %1962 = vmatprep.mubr.f32.mxu0 0.0
    %1963 = vmatmul.mubr.f32.gmra.mxu0 %v1893
    %v1964 = vpop.f32.mrf.mxu0
    %v1965 = vadd.f32 %v1890, %v1964
    %v1966 = vpop.f32.mrf.mxu0
    %1967 = vmatprep.mubr.f32.mxu0 0.0
    %1968 = vmatmul.mubr.f32.gmra.mxu0 %v1896
    %v1969 = vpop.f32.mrf.mxu0
    %v1970 = vadd.f32 %v1890, %v1969
    %v1971 = vpop.f32.mrf.mxu0
    %1972 = vdwg.mxu0
    %v1973 = vld [vmem:[#allocation26] sm:$0xff]
    %v1974 = vld [vmem:[%s17] sm:$0x1]
    %v1976 = vlaneseq
    %v1977 = vshrl.u32 %v1976, 7
    %v1978 = vsub.s32 0, %v1977
    %v1979 = vrot.slane %v1974, %v1978
    %1981 = vmatprep.subr.mxu0 0.0
    %1982 = vmatpush1.msra.mxu0 0.0
    %1983 = vmatprep.subr.mxu0 0.0
    %1984 = vmatpush1.msra.mxu0 0.0
    %1985 = vmatprep.subr.mxu0 0.0
    %1986 = vmatpush1.msra.mxu0 0.0
    %1987 = vmatprep.subr.mxu0 0.0
    %1988 = vmatpush1.msra.mxu0 0.0
    %1989 = vmatprep.subr.mxu0 0.0
    %1990 = vmatpush1.msra.mxu0 0.0
    %1991 = vmatprep.subr.mxu0 0.0
    %1992 = vmatpush1.msra.mxu0 0.0
    %1993 = vmatprep.subr.mxu0 0.0
    %1994 = vmatpush1.msra.mxu0 0.0
    %1995 = vmatprep.subr.mxu0 0.0
    %1996 = vmatpush1.msra.mxu0 0.0
    %1997 = vmatprep.subr.mxu0 0.0
    %1998 = vmatpush1.msra.mxu0 0.0
    %1999 = vmatprep.subr.mxu0 0.0
    %2000 = vmatpush1.msra.mxu0 0.0
    %2001 = vmatprep.subr.mxu0 0.0
    %2002 = vmatpush1.msra.mxu0 0.0
    %2003 = vmatprep.subr.mxu0 0.0
    %2004 = vmatpush1.msra.mxu0 0.0
    %2005 = vmatprep.subr.mxu0 0.0
    %2006 = vmatpush1.msra.mxu0 0.0
    %2007 = vmatprep.subr.mxu0 0.0
    %2008 = vmatpush1.msra.mxu0 0.0
    %2009 = vmatprep.subr.mxu0 0.0
    %2010 = vmatpush1.msra.mxu0 0.0
    %2011 = vmatprep.subr.mxu0 0.0
    %2012 = vmatpush1.msra.mxu0 %v1973
    %2013 = vmatprep.subr.mxu0 0.0
    %2014 = vmatpush2.msra.mxu0 0.0
    %2015 = vmatprep.subr.mxu0 0.0
    %2016 = vmatpush2.msra.mxu0 0.0
    %2017 = vmatprep.subr.mxu0 0.0
    %2018 = vmatpush2.msra.mxu0 0.0
    %2019 = vmatprep.subr.mxu0 0.0
    %2020 = vmatpush2.msra.mxu0 0.0
    %2021 = vmatprep.subr.mxu0 0.0
    %2022 = vmatpush2.msra.mxu0 0.0
    %2023 = vmatprep.subr.mxu0 0.0
    %2024 = vmatpush2.msra.mxu0 0.0
    %2025 = vmatprep.subr.mxu0 0.0
    %2026 = vmatpush2.msra.mxu0 0.0
    %2027 = vmatprep.subr.mxu0 0.0
    %2028 = vmatpush2.msra.mxu0 0.0
    %2029 = vmatprep.subr.mxu0 0.0
    %2030 = vmatpush2.msra.mxu0 0.0
    %2031 = vmatprep.subr.mxu0 0.0
    %2032 = vmatpush2.msra.mxu0 0.0
    %2033 = vmatprep.subr.mxu0 0.0
    %2034 = vmatpush2.msra.mxu0 0.0
    %2035 = vmatprep.subr.mxu0 0.0
    %2036 = vmatpush2.msra.mxu0 0.0
    %2037 = vmatprep.subr.mxu0 0.0
    %2038 = vmatpush2.msra.mxu0 0.0
    %2039 = vmatprep.subr.mxu0 0.0
    %2040 = vmatpush2.msra.mxu0 0.0
    %2041 = vmatprep.subr.mxu0 0.0
    %2042 = vmatpush2.msra.mxu0 0.0
    %2043 = vmatprep.subr.mxu0 0.0
    %2044 = vmatpush2.msra.mxu0 0.0
    %2045 = vmatprep.mubr.f32.mxu0 0.0
    %2046 = vmatmul.mubr.f32.gmra.mxu0 %v1893
    %v2047 = vpop.f32.mrf.mxu0
    %v2048 = vadd.f32 %v1979, %v2047
    %v2049 = vpop.f32.mrf.mxu0
    %2050 = vmatprep.mubr.f32.mxu0 0.0
    %2051 = vmatmul.mubr.f32.gmra.mxu0 %v1896
    %v2052 = vpop.f32.mrf.mxu0
    %v2053 = vadd.f32 %v1979, %v2052
    %v2054 = vpop.f32.mrf.mxu0
    %2055 = vdwg.mxu0
    %v2056 = vld [vmem:[#allocation27] sm:$0xff]
    %v2057 = vld [vmem:[#allocation27 + $0x8] sm:$0xff]
    %v2058 = vld [vmem:[%s18] sm:$0xf]
    %v2060 = vrot.slane %v1970, 7
    %v2063 = vrot.slane %v2048, 5
    %v2066 = vrot.slane %v2053, 4
    %vm2068 = vcmask 1040384
    %v2069 = vsel %vm2068, %v1965, %v2060
    %vm2070 = vcmask 1041408
    %v2071 = vsel %vm2070, %v2069, %v2063
    %vm2072 = vcmask 1042432
    %v2073 = vsel %vm2072, %v2071, %v2066
    %v2074 = vmul.f32 %v2058, 0.0
    %v2076 = vsel %vm301, %v2074, 0
    %2078 = vmatprep.subr.mxu0 0.0
    %2079 = vmatpush1.msra.mxu0 0.0
    %2080 = vmatprep.subr.mxu0 0.0
    %2081 = vmatpush1.msra.mxu0 0.0
    %2082 = vmatprep.subr.mxu0 0.0
    %2083 = vmatpush1.msra.mxu0 0.0
    %2084 = vmatprep.subr.mxu0 0.0
    %2085 = vmatpush1.msra.mxu0 0.0
    %2086 = vmatprep.subr.mxu0 0.0
    %2087 = vmatpush1.msra.mxu0 0.0
    %2088 = vmatprep.subr.mxu0 0.0
    %2089 = vmatpush1.msra.mxu0 0.0
    %2090 = vmatprep.subr.mxu0 0.0
    %2091 = vmatpush1.msra.mxu0 0.0
    %2092 = vmatprep.subr.mxu0 0.0
    %2093 = vmatpush1.msra.mxu0 0.0
    %2094 = vmatprep.subr.mxu0 0.0
    %2095 = vmatpush1.msra.mxu0 0.0
    %2096 = vmatprep.subr.mxu0 0.0
    %2097 = vmatpush1.msra.mxu0 0.0
    %2098 = vmatprep.subr.mxu0 0.0
    %2099 = vmatpush1.msra.mxu0 0.0
    %2100 = vmatprep.subr.mxu0 0.0
    %2101 = vmatpush1.msra.mxu0 0.0
    %2102 = vmatprep.subr.mxu0 0.0
    %2103 = vmatpush1.msra.mxu0 0.0
    %2104 = vmatprep.subr.mxu0 0.0
    %2105 = vmatpush1.msra.mxu0 0.0
    %2106 = vmatprep.subr.mxu0 0.0
    %2107 = vmatpush1.msra.mxu0 %v2057
    %2108 = vmatprep.subr.mxu0 0.0
    %2109 = vmatpush1.msra.mxu0 %v2056
    %2110 = vmatprep.subr.mxu0 0.0
    %2111 = vmatpush2.msra.mxu0 0.0
    %2112 = vmatprep.subr.mxu0 0.0
    %2113 = vmatpush2.msra.mxu0 0.0
    %2114 = vmatprep.subr.mxu0 0.0
    %2115 = vmatpush2.msra.mxu0 0.0
    %2116 = vmatprep.subr.mxu0 0.0
    %2117 = vmatpush2.msra.mxu0 0.0
    %2118 = vmatprep.subr.mxu0 0.0
    %2119 = vmatpush2.msra.mxu0 0.0
    %2120 = vmatprep.subr.mxu0 0.0
    %2121 = vmatpush2.msra.mxu0 0.0
    %2122 = vmatprep.subr.mxu0 0.0
    %2123 = vmatpush2.msra.mxu0 0.0
    %2124 = vmatprep.subr.mxu0 0.0
    %2125 = vmatpush2.msra.mxu0 0.0
    %2126 = vmatprep.subr.mxu0 0.0
    %2127 = vmatpush2.msra.mxu0 0.0
    %2128 = vmatprep.subr.mxu0 0.0
    %2129 = vmatpush2.msra.mxu0 0.0
    %2130 = vmatprep.subr.mxu0 0.0
    %2131 = vmatpush2.msra.mxu0 0.0
    %2132 = vmatprep.subr.mxu0 0.0
    %2133 = vmatpush2.msra.mxu0 0.0
    %2134 = vmatprep.subr.mxu0 0.0
    %2135 = vmatpush2.msra.mxu0 0.0
    %2136 = vmatprep.subr.mxu0 0.0
    %2137 = vmatpush2.msra.mxu0 0.0
    %2138 = vmatprep.subr.mxu0 0.0
    %2139 = vmatpush2.msra.mxu0 0.0
    %2140 = vmatprep.subr.mxu0 0.0
    %2141 = vmatpush2.msra.mxu0 0.0
    %2142 = vmatprep.mubr.f32.mxu0 0.0
    %2143 = vmatmul.mubr.f32.gmra.mxu0 %v2076
    %v2144 = vpop.f32.mrf.mxu0
    %v2145 = vadd.f32 0.0, %v2144
    %v2146 = vpop.f32.mrf.mxu0
    %2147 = vdwg.mxu0
    %v2148 = vadd.f32 %v2073, %v2145
    %v2149 = vxor.u32 %v2148, 2147483648
    %v2150 = vmul.f32 %v2149, 1.442695
    %v2151 = vpow.pop %v2150
    %v2152 = vadd.f32 %v2151, 1.0
    %v2153 = vrcp.pop %v2152
    %v2154 = vmul.f32 1.0, %v2153
    %v2155 = vtanh.pop %v2148
    %v2156 = vmul.f32 %v2154, 0.0
    %2158 = vrot.lane.b32.xlu0 %v2155, 112
    %v2159 = vpop.permute.xlu0 %2158
    %v2161 = vmul.f32 %v2154, %v2159
    %2163 = vrot.lane.b32.xlu0 %v2161, 8
    %v2164 = vpop.permute.xlu0 %2163
    %v2166 = vadd.f32 %v2156, %v2164
    %v2167 = vtanh.pop %v2166
    %2169 = vrot.lane.b32.xlu0 %v2167, 16
    %v2170 = vpop.permute.xlu0 %2169
    %v2172 = vmul.f32 %v2154, %v2170
    %2174 = vrot.lane.b32.xlu0 %v2172, 104
    %v2175 = vpop.permute.xlu0 %2174
    %vm2177 = vcmask 57344
    %2178 = vst.msk [vmem:[#allocation2] sm:$0x1] %vm2177, %v2175
    %vm2179 = vcmask 59394
    %2180 = vst.msk [vmem:[#allocation3 + $0x5] sm:$0x4] %vm2179, %v2175
    %vm2181 = vcmask 58369
    %2182 = vst.msk [vmem:[#allocation2 + $0x7] sm:$0x2] %vm2181, %v2175
    %vm2183 = vcmask 60419
    %2184 = vst.msk [vmem:[#allocation3 + $0xc] sm:$0x8] %vm2183, %v2175
    %v2186 = vrot.slane %v1965, 1
    %v2188 = vrot.slane %v2048, 4
    %v2190 = vrot.slane %v2053, 3
    %v2192 = vsel %vm2068, %v2186, %v1970
    %v2193 = vsel %vm2070, %v2192, %v2188
    %v2194 = vsel %vm2072, %v2193, %v2190
    %2195 = vrot.lane.b32.xlu0 %v2172, 112
    %v2196 = vpop.permute.xlu0 %2195
    %v2198 = vsel %vm654, %v2175, %v2196
    %v2199 = vmul.f32 %v2198, %v2058
    %v2201 = vsel %vm301, %v2199, 0
    %2203 = vmatprep.subr.mxu0 0.0
    %2204 = vmatpush1.msra.mxu0 0.0
    %2205 = vmatprep.subr.mxu0 0.0
    %2206 = vmatpush1.msra.mxu0 0.0
    %2207 = vmatprep.subr.mxu0 0.0
    %2208 = vmatpush1.msra.mxu0 0.0
    %2209 = vmatprep.subr.mxu0 0.0
    %2210 = vmatpush1.msra.mxu0 0.0
    %2211 = vmatprep.subr.mxu0 0.0
    %2212 = vmatpush1.msra.mxu0 0.0
    %2213 = vmatprep.subr.mxu0 0.0
    %2214 = vmatpush1.msra.mxu0 0.0
    %2215 = vmatprep.subr.mxu0 0.0
    %2216 = vmatpush1.msra.mxu0 0.0
    %2217 = vmatprep.subr.mxu0 0.0
    %2218 = vmatpush1.msra.mxu0 0.0
    %2219 = vmatprep.subr.mxu0 0.0
    %2220 = vmatpush1.msra.mxu0 0.0
    %2221 = vmatprep.subr.mxu0 0.0
    %2222 = vmatpush1.msra.mxu0 0.0
    %2223 = vmatprep.subr.mxu0 0.0
    %2224 = vmatpush1.msra.mxu0 0.0
    %2225 = vmatprep.subr.mxu0 0.0
    %2226 = vmatpush1.msra.mxu0 0.0
    %2227 = vmatprep.subr.mxu0 0.0
    %2228 = vmatpush1.msra.mxu0 0.0
    %2229 = vmatprep.subr.mxu0 0.0
    %2230 = vmatpush1.msra.mxu0 0.0
    %2231 = vmatprep.subr.mxu0 0.0
    %2232 = vmatpush1.msra.mxu0 %v2057
    %2233 = vmatprep.subr.mxu0 0.0
    %2234 = vmatpush1.msra.mxu0 %v2056
    %2235 = vmatprep.subr.mxu0 0.0
    %2236 = vmatpush2.msra.mxu0 0.0
    %2237 = vmatprep.subr.mxu0 0.0
    %2238 = vmatpush2.msra.mxu0 0.0
    %2239 = vmatprep.subr.mxu0 0.0
    %2240 = vmatpush2.msra.mxu0 0.0
    %2241 = vmatprep.subr.mxu0 0.0
    %2242 = vmatpush2.msra.mxu0 0.0
    %2243 = vmatprep.subr.mxu0 0.0
    %2244 = vmatpush2.msra.mxu0 0.0
    %2245 = vmatprep.subr.mxu0 0.0
    %2246 = vmatpush2.msra.mxu0 0.0
    %2247 = vmatprep.subr.mxu0 0.0
    %2248 = vmatpush2.msra.mxu0 0.0
    %2249 = vmatprep.subr.mxu0 0.0
    %2250 = vmatpush2.msra.mxu0 0.0
    %2251 = vmatprep.subr.mxu0 0.0
    %2252 = vmatpush2.msra.mxu0 0.0
    %2253 = vmatprep.subr.mxu0 0.0
    %2254 = vmatpush2.msra.mxu0 0.0
    %2255 = vmatprep.subr.mxu0 0.0
    %2256 = vmatpush2.msra.mxu0 0.0
    %2257 = vmatprep.subr.mxu0 0.0
    %2258 = vmatpush2.msra.mxu0 0.0
    %2259 = vmatprep.subr.mxu0 0.0
    %2260 = vmatpush2.msra.mxu0 0.0
    %2261 = vmatprep.subr.mxu0 0.0
    %2262 = vmatpush2.msra.mxu0 0.0
    %2263 = vmatprep.subr.mxu0 0.0
    %2264 = vmatpush2.msra.mxu0 0.0
    %2265 = vmatprep.subr.mxu0 0.0
    %2266 = vmatpush2.msra.mxu0 0.0
    %2267 = vmatprep.mubr.f32.mxu0 0.0
    %2268 = vmatmul.mubr.f32.gmra.mxu0 %v2201
    %v2269 = vpop.f32.mrf.mxu0
    %v2270 = vadd.f32 0.0, %v2269
    %v2271 = vpop.f32.mrf.mxu0
    %2272 = vdwg.mxu0
    %v2273 = vadd.f32 %v2194, %v2270
    %v2274 = vxor.u32 %v2273, 2147483648
    %v2275 = vmul.f32 %v2274, 1.442695
    %v2276 = vpow.pop %v2275
    %v2277 = vadd.f32 %v2276, 1.0
    %v2278 = vrcp.pop %v2277
    %v2279 = vmul.f32 1.0, %v2278
    %v2280 = vtanh.pop %v2273
    %v2281 = vmul.f32 %v2279, %v2166
    %2283 = vrot.lane.b32.xlu0 %v2280, 112
    %v2284 = vpop.permute.xlu0 %2283
    %v2286 = vmul.f32 %v2279, %v2284
    %2288 = vrot.lane.b32.xlu0 %v2286, 8
    %v2289 = vpop.permute.xlu0 %2288
    %v2291 = vadd.f32 %v2281, %v2289
    %v2292 = vtanh.pop %v2291
    %2294 = vrot.lane.b32.xlu0 %v2292, 16
    %v2295 = vpop.permute.xlu0 %2294
    %v2297 = vmul.f32 %v2279, %v2295
    %2299 = vrot.lane.b32.xlu0 %v2297, 104
    %v2300 = vpop.permute.xlu0 %2299
    %2302 = vst.msk [vmem:[#allocation2 + $0x1] sm:$0x1] %vm2177, %v2300
    %2303 = vst.msk [vmem:[#allocation3 + $0x4] sm:$0x4] %vm2179, %v2300
    %2304 = vst.msk [vmem:[#allocation2 + $0x8] sm:$0x2] %vm2181, %v2300
    %2305 = vst.msk [vmem:[#allocation3 + $0xb] sm:$0x8] %vm2183, %v2300
    %v2306 = vrot.slane %v1965, 2
    %v2308 = vrot.slane %v1970, 1
    %v2310 = vrot.slane %v2048, 3
    %v2312 = vrot.slane %v2053, 2
    %v2314 = vsel %vm2068, %v2306, %v2308
    %v2315 = vsel %vm2070, %v2314, %v2310
    %v2316 = vsel %vm2072, %v2315, %v2312
    %2317 = vrot.lane.b32.xlu0 %v2297, 112
    %v2318 = vpop.permute.xlu0 %2317
    %v2320 = vsel %vm654, %v2300, %v2318
    %v2321 = vmul.f32 %v2320, %v2058
    %v2323 = vsel %vm301, %v2321, 0
    %2325 = vmatprep.subr.mxu0 0.0
    %2326 = vmatpush1.msra.mxu0 0.0
    %2327 = vmatprep.subr.mxu0 0.0
    %2328 = vmatpush1.msra.mxu0 0.0
    %2329 = vmatprep.subr.mxu0 0.0
    %2330 = vmatpush1.msra.mxu0 0.0
    %2331 = vmatprep.subr.mxu0 0.0
    %2332 = vmatpush1.msra.mxu0 0.0
    %2333 = vmatprep.subr.mxu0 0.0
    %2334 = vmatpush1.msra.mxu0 0.0
    %2335 = vmatprep.subr.mxu0 0.0
    %2336 = vmatpush1.msra.mxu0 0.0
    %2337 = vmatprep.subr.mxu0 0.0
    %2338 = vmatpush1.msra.mxu0 0.0
    %2339 = vmatprep.subr.mxu0 0.0
    %2340 = vmatpush1.msra.mxu0 0.0
    %2341 = vmatprep.subr.mxu0 0.0
    %2342 = vmatpush1.msra.mxu0 0.0
    %2343 = vmatprep.subr.mxu0 0.0
    %2344 = vmatpush1.msra.mxu0 0.0
    %2345 = vmatprep.subr.mxu0 0.0
    %2346 = vmatpush1.msra.mxu0 0.0
    %2347 = vmatprep.subr.mxu0 0.0
    %2348 = vmatpush1.msra.mxu0 0.0
    %2349 = vmatprep.subr.mxu0 0.0
    %2350 = vmatpush1.msra.mxu0 0.0
    %2351 = vmatprep.subr.mxu0 0.0
    %2352 = vmatpush1.msra.mxu0 0.0
    %2353 = vmatprep.subr.mxu0 0.0
    %2354 = vmatpush1.msra.mxu0 %v2057
    %2355 = vmatprep.subr.mxu0 0.0
    %2356 = vmatpush1.msra.mxu0 %v2056
    %2357 = vmatprep.subr.mxu0 0.0
    %2358 = vmatpush2.msra.mxu0 0.0
    %2359 = vmatprep.subr.mxu0 0.0
    %2360 = vmatpush2.msra.mxu0 0.0
    %2361 = vmatprep.subr.mxu0 0.0
    %2362 = vmatpush2.msra.mxu0 0.0
    %2363 = vmatprep.subr.mxu0 0.0
    %2364 = vmatpush2.msra.mxu0 0.0
    %2365 = vmatprep.subr.mxu0 0.0
    %2366 = vmatpush2.msra.mxu0 0.0
    %2367 = vmatprep.subr.mxu0 0.0
    %2368 = vmatpush2.msra.mxu0 0.0
    %2369 = vmatprep.subr.mxu0 0.0
    %2370 = vmatpush2.msra.mxu0 0.0
    %2371 = vmatprep.subr.mxu0 0.0
    %2372 = vmatpush2.msra.mxu0 0.0
    %2373 = vmatprep.subr.mxu0 0.0
    %2374 = vmatpush2.msra.mxu0 0.0
    %2375 = vmatprep.subr.mxu0 0.0
    %2376 = vmatpush2.msra.mxu0 0.0
    %2377 = vmatprep.subr.mxu0 0.0
    %2378 = vmatpush2.msra.mxu0 0.0
    %2379 = vmatprep.subr.mxu0 0.0
    %2380 = vmatpush2.msra.mxu0 0.0
    %2381 = vmatprep.subr.mxu0 0.0
    %2382 = vmatpush2.msra.mxu0 0.0
    %2383 = vmatprep.subr.mxu0 0.0
    %2384 = vmatpush2.msra.mxu0 0.0
    %2385 = vmatprep.subr.mxu0 0.0
    %2386 = vmatpush2.msra.mxu0 0.0
    %2387 = vmatprep.subr.mxu0 0.0
    %2388 = vmatpush2.msra.mxu0 0.0
    %2389 = vmatprep.mubr.f32.mxu0 0.0
    %2390 = vmatmul.mubr.f32.gmra.mxu0 %v2323
    %v2391 = vpop.f32.mrf.mxu0
    %v2392 = vadd.f32 0.0, %v2391
    %v2393 = vpop.f32.mrf.mxu0
    %2394 = vdwg.mxu0
    %v2395 = vadd.f32 %v2316, %v2392
    %v2396 = vxor.u32 %v2395, 2147483648
    %v2397 = vmul.f32 %v2396, 1.442695
    %v2398 = vpow.pop %v2397
    %v2399 = vadd.f32 %v2398, 1.0
    %v2400 = vrcp.pop %v2399
    %v2401 = vmul.f32 1.0, %v2400
    %v2402 = vtanh.pop %v2395
    %v2403 = vmul.f32 %v2401, %v2291
    %2405 = vrot.lane.b32.xlu0 %v2402, 112
    %v2406 = vpop.permute.xlu0 %2405
    %v2408 = vmul.f32 %v2401, %v2406
    %2410 = vrot.lane.b32.xlu0 %v2408, 8
    %v2411 = vpop.permute.xlu0 %2410
    %v2413 = vadd.f32 %v2403, %v2411
    %v2414 = vtanh.pop %v2413
    %2416 = vrot.lane.b32.xlu0 %v2414, 16
    %v2417 = vpop.permute.xlu0 %2416
    %v2419 = vmul.f32 %v2401, %v2417
    %2421 = vrot.lane.b32.xlu0 %v2419, 104
    %v2422 = vpop.permute.xlu0 %2421
    %2424 = vst.msk [vmem:[#allocation2 + $0x2] sm:$0x1] %vm2177, %v2422
    %2425 = vst.msk [vmem:[#allocation3 + $0x3] sm:$0x4] %vm2179, %v2422
    %2426 = vst.msk [vmem:[#allocation2 + $0x9] sm:$0x2] %vm2181, %v2422
    %2427 = vst.msk [vmem:[#allocation3 + $0xa] sm:$0x8] %vm2183, %v2422
    %v2428 = vrot.slane %v1965, 3
    %v2430 = vrot.slane %v1970, 2
    %v2432 = vrot.slane %v2048, 2
    %v2434 = vrot.slane %v2053, 1
    %v2436 = vsel %vm2068, %v2428, %v2430
    %v2437 = vsel %vm2070, %v2436, %v2432
    %v2438 = vsel %vm2072, %v2437, %v2434
    %2439 = vrot.lane.b32.xlu0 %v2419, 112
    %v2440 = vpop.permute.xlu0 %2439
    %v2442 = vsel %vm654, %v2422, %v2440
    %v2443 = vmul.f32 %v2442, %v2058
    %v2445 = vsel %vm301, %v2443, 0
    %2447 = vmatprep.subr.mxu0 0.0
    %2448 = vmatpush1.msra.mxu0 0.0
    %2449 = vmatprep.subr.mxu0 0.0
    %2450 = vmatpush1.msra.mxu0 0.0
    %2451 = vmatprep.subr.mxu0 0.0
    %2452 = vmatpush1.msra.mxu0 0.0
    %2453 = vmatprep.subr.mxu0 0.0
    %2454 = vmatpush1.msra.mxu0 0.0
    %2455 = vmatprep.subr.mxu0 0.0
    %2456 = vmatpush1.msra.mxu0 0.0
    %2457 = vmatprep.subr.mxu0 0.0
    %2458 = vmatpush1.msra.mxu0 0.0
    %2459 = vmatprep.subr.mxu0 0.0
    %2460 = vmatpush1.msra.mxu0 0.0
    %2461 = vmatprep.subr.mxu0 0.0
    %2462 = vmatpush1.msra.mxu0 0.0
    %2463 = vmatprep.subr.mxu0 0.0
    %2464 = vmatpush1.msra.mxu0 0.0
    %2465 = vmatprep.subr.mxu0 0.0
    %2466 = vmatpush1.msra.mxu0 0.0
    %2467 = vmatprep.subr.mxu0 0.0
    %2468 = vmatpush1.msra.mxu0 0.0
    %2469 = vmatprep.subr.mxu0 0.0
    %2470 = vmatpush1.msra.mxu0 0.0
    %2471 = vmatprep.subr.mxu0 0.0
    %2472 = vmatpush1.msra.mxu0 0.0
    %2473 = vmatprep.subr.mxu0 0.0
    %2474 = vmatpush1.msra.mxu0 0.0
    %2475 = vmatprep.subr.mxu0 0.0
    %2476 = vmatpush1.msra.mxu0 %v2057
    %2477 = vmatprep.subr.mxu0 0.0
    %2478 = vmatpush1.msra.mxu0 %v2056
    %2479 = vmatprep.subr.mxu0 0.0
    %2480 = vmatpush2.msra.mxu0 0.0
    %2481 = vmatprep.subr.mxu0 0.0
    %2482 = vmatpush2.msra.mxu0 0.0
    %2483 = vmatprep.subr.mxu0 0.0
    %2484 = vmatpush2.msra.mxu0 0.0
    %2485 = vmatprep.subr.mxu0 0.0
    %2486 = vmatpush2.msra.mxu0 0.0
    %2487 = vmatprep.subr.mxu0 0.0
    %2488 = vmatpush2.msra.mxu0 0.0
    %2489 = vmatprep.subr.mxu0 0.0
    %2490 = vmatpush2.msra.mxu0 0.0
    %2491 = vmatprep.subr.mxu0 0.0
    %2492 = vmatpush2.msra.mxu0 0.0
    %2493 = vmatprep.subr.mxu0 0.0
    %2494 = vmatpush2.msra.mxu0 0.0
    %2495 = vmatprep.subr.mxu0 0.0
    %2496 = vmatpush2.msra.mxu0 0.0
    %2497 = vmatprep.subr.mxu0 0.0
    %2498 = vmatpush2.msra.mxu0 0.0
    %2499 = vmatprep.subr.mxu0 0.0
    %2500 = vmatpush2.msra.mxu0 0.0
    %2501 = vmatprep.subr.mxu0 0.0
    %2502 = vmatpush2.msra.mxu0 0.0
    %2503 = vmatprep.subr.mxu0 0.0
    %2504 = vmatpush2.msra.mxu0 0.0
    %2505 = vmatprep.subr.mxu0 0.0
    %2506 = vmatpush2.msra.mxu0 0.0
    %2507 = vmatprep.subr.mxu0 0.0
    %2508 = vmatpush2.msra.mxu0 0.0
    %2509 = vmatprep.subr.mxu0 0.0
    %2510 = vmatpush2.msra.mxu0 0.0
    %2511 = vmatprep.mubr.f32.mxu0 0.0
    %2512 = vmatmul.mubr.f32.gmra.mxu0 %v2445
    %v2513 = vpop.f32.mrf.mxu0
    %v2514 = vadd.f32 0.0, %v2513
    %v2515 = vpop.f32.mrf.mxu0
    %2516 = vdwg.mxu0
    %v2517 = vadd.f32 %v2438, %v2514
    %v2518 = vxor.u32 %v2517, 2147483648
    %v2519 = vmul.f32 %v2518, 1.442695
    %v2520 = vpow.pop %v2519
    %v2521 = vadd.f32 %v2520, 1.0
    %v2522 = vrcp.pop %v2521
    %v2523 = vmul.f32 1.0, %v2522
    %v2524 = vtanh.pop %v2517
    %v2525 = vmul.f32 %v2523, %v2413
    %2527 = vrot.lane.b32.xlu0 %v2524, 112
    %v2528 = vpop.permute.xlu0 %2527
    %v2530 = vmul.f32 %v2523, %v2528
    %2532 = vrot.lane.b32.xlu0 %v2530, 8
    %v2533 = vpop.permute.xlu0 %2532
    %v2535 = vadd.f32 %v2525, %v2533
    %v2536 = vtanh.pop %v2535
    %2538 = vrot.lane.b32.xlu0 %v2536, 16
    %v2539 = vpop.permute.xlu0 %2538
    %v2541 = vmul.f32 %v2523, %v2539
    %2543 = vrot.lane.b32.xlu0 %v2541, 104
    %v2544 = vpop.permute.xlu0 %2543
    %2546 = vst.msk [vmem:[#allocation2 + $0x3] sm:$0x1] %vm2177, %v2544
    %2547 = vst.msk [vmem:[#allocation3 + $0x2] sm:$0x4] %vm2179, %v2544
    %2548 = vst.msk [vmem:[#allocation2 + $0xa] sm:$0x2] %vm2181, %v2544
    %2549 = vst.msk [vmem:[#allocation3 + $0x9] sm:$0x8] %vm2183, %v2544
    %v2550 = vrot.slane %v1965, 4
    %v2552 = vrot.slane %v1970, 3
    %v2554 = vrot.slane %v2048, 1
    %v2556 = vsel %vm2068, %v2550, %v2552
    %v2557 = vsel %vm2070, %v2556, %v2554
    %v2558 = vsel %vm2072, %v2557, %v2053
    %2559 = vrot.lane.b32.xlu0 %v2541, 112
    %v2560 = vpop.permute.xlu0 %2559
    %v2562 = vsel %vm654, %v2544, %v2560
    %v2563 = vmul.f32 %v2562, %v2058
    %v2565 = vsel %vm301, %v2563, 0
    %2567 = vmatprep.subr.mxu0 0.0
    %2568 = vmatpush1.msra.mxu0 0.0
    %2569 = vmatprep.subr.mxu0 0.0
    %2570 = vmatpush1.msra.mxu0 0.0
    %2571 = vmatprep.subr.mxu0 0.0
    %2572 = vmatpush1.msra.mxu0 0.0
    %2573 = vmatprep.subr.mxu0 0.0
    %2574 = vmatpush1.msra.mxu0 0.0
    %2575 = vmatprep.subr.mxu0 0.0
    %2576 = vmatpush1.msra.mxu0 0.0
    %2577 = vmatprep.subr.mxu0 0.0
    %2578 = vmatpush1.msra.mxu0 0.0
    %2579 = vmatprep.subr.mxu0 0.0
    %2580 = vmatpush1.msra.mxu0 0.0
    %2581 = vmatprep.subr.mxu0 0.0
    %2582 = vmatpush1.msra.mxu0 0.0
    %2583 = vmatprep.subr.mxu0 0.0
    %2584 = vmatpush1.msra.mxu0 0.0
    %2585 = vmatprep.subr.mxu0 0.0
    %2586 = vmatpush1.msra.mxu0 0.0
    %2587 = vmatprep.subr.mxu0 0.0
    %2588 = vmatpush1.msra.mxu0 0.0
    %2589 = vmatprep.subr.mxu0 0.0
    %2590 = vmatpush1.msra.mxu0 0.0
    %2591 = vmatprep.subr.mxu0 0.0
    %2592 = vmatpush1.msra.mxu0 0.0
    %2593 = vmatprep.subr.mxu0 0.0
    %2594 = vmatpush1.msra.mxu0 0.0
    %2595 = vmatprep.subr.mxu0 0.0
    %2596 = vmatpush1.msra.mxu0 %v2057
    %2597 = vmatprep.subr.mxu0 0.0
    %2598 = vmatpush1.msra.mxu0 %v2056
    %2599 = vmatprep.subr.mxu0 0.0
    %2600 = vmatpush2.msra.mxu0 0.0
    %2601 = vmatprep.subr.mxu0 0.0
    %2602 = vmatpush2.msra.mxu0 0.0
    %2603 = vmatprep.subr.mxu0 0.0
    %2604 = vmatpush2.msra.mxu0 0.0
    %2605 = vmatprep.subr.mxu0 0.0
    %2606 = vmatpush2.msra.mxu0 0.0
    %2607 = vmatprep.subr.mxu0 0.0
    %2608 = vmatpush2.msra.mxu0 0.0
    %2609 = vmatprep.subr.mxu0 0.0
    %2610 = vmatpush2.msra.mxu0 0.0
    %2611 = vmatprep.subr.mxu0 0.0
    %2612 = vmatpush2.msra.mxu0 0.0
    %2613 = vmatprep.subr.mxu0 0.0
    %2614 = vmatpush2.msra.mxu0 0.0
    %2615 = vmatprep.subr.mxu0 0.0
    %2616 = vmatpush2.msra.mxu0 0.0
    %2617 = vmatprep.subr.mxu0 0.0
    %2618 = vmatpush2.msra.mxu0 0.0
    %2619 = vmatprep.subr.mxu0 0.0
    %2620 = vmatpush2.msra.mxu0 0.0
    %2621 = vmatprep.subr.mxu0 0.0
    %2622 = vmatpush2.msra.mxu0 0.0
    %2623 = vmatprep.subr.mxu0 0.0
    %2624 = vmatpush2.msra.mxu0 0.0
    %2625 = vmatprep.subr.mxu0 0.0
    %2626 = vmatpush2.msra.mxu0 0.0
    %2627 = vmatprep.subr.mxu0 0.0
    %2628 = vmatpush2.msra.mxu0 0.0
    %2629 = vmatprep.subr.mxu0 0.0
    %2630 = vmatpush2.msra.mxu0 0.0
    %2631 = vmatprep.mubr.f32.mxu0 0.0
    %2632 = vmatmul.mubr.f32.gmra.mxu0 %v2565
    %v2633 = vpop.f32.mrf.mxu0
    %v2634 = vadd.f32 0.0, %v2633
    %v2635 = vpop.f32.mrf.mxu0
    %2636 = vdwg.mxu0
    %v2637 = vadd.f32 %v2558, %v2634
    %v2638 = vxor.u32 %v2637, 2147483648
    %v2639 = vmul.f32 %v2638, 1.442695
    %v2640 = vpow.pop %v2639
    %v2641 = vadd.f32 %v2640, 1.0
    %v2642 = vrcp.pop %v2641
    %v2643 = vmul.f32 1.0, %v2642
    %v2644 = vtanh.pop %v2637
    %v2645 = vmul.f32 %v2643, %v2535
    %2647 = vrot.lane.b32.xlu0 %v2644, 112
    %v2648 = vpop.permute.xlu0 %2647
    %v2650 = vmul.f32 %v2643, %v2648
    %2652 = vrot.lane.b32.xlu0 %v2650, 8
    %v2653 = vpop.permute.xlu0 %2652
    %v2655 = vadd.f32 %v2645, %v2653
    %v2656 = vtanh.pop %v2655
    %2658 = vrot.lane.b32.xlu0 %v2656, 16
    %v2659 = vpop.permute.xlu0 %2658
    %v2661 = vmul.f32 %v2643, %v2659
    %2663 = vrot.lane.b32.xlu0 %v2661, 104
    %v2664 = vpop.permute.xlu0 %2663
    %2666 = vst.msk [vmem:[#allocation2 + $0x4] sm:$0x1] %vm2177, %v2664
    %2667 = vst.msk [vmem:[#allocation3 + $0x1] sm:$0x4] %vm2179, %v2664
    %2668 = vst.msk [vmem:[#allocation2 + $0xb] sm:$0x2] %vm2181, %v2664
    %2669 = vst.msk [vmem:[#allocation3 + $0x8] sm:$0x8] %vm2183, %v2664
    %v2670 = vrot.slane %v1965, 5
    %v2672 = vrot.slane %v1970, 4
    %v2674 = vrot.slane %v2053, 7
    %v2676 = vsel %vm2068, %v2670, %v2672
    %v2677 = vsel %vm2070, %v2676, %v2048
    %v2678 = vsel %vm2072, %v2677, %v2674
    %2679 = vrot.lane.b32.xlu0 %v2661, 112
    %v2680 = vpop.permute.xlu0 %2679
    %v2682 = vsel %vm654, %v2664, %v2680
    %v2683 = vmul.f32 %v2682, %v2058
    %v2685 = vsel %vm301, %v2683, 0
    %2687 = vmatprep.subr.mxu0 0.0
    %2688 = vmatpush1.msra.mxu0 0.0
    %2689 = vmatprep.subr.mxu0 0.0
    %2690 = vmatpush1.msra.mxu0 0.0
    %2691 = vmatprep.subr.mxu0 0.0
    %2692 = vmatpush1.msra.mxu0 0.0
    %2693 = vmatprep.subr.mxu0 0.0
    %2694 = vmatpush1.msra.mxu0 0.0
    %2695 = vmatprep.subr.mxu0 0.0
    %2696 = vmatpush1.msra.mxu0 0.0
    %2697 = vmatprep.subr.mxu0 0.0
    %2698 = vmatpush1.msra.mxu0 0.0
    %2699 = vmatprep.subr.mxu0 0.0
    %2700 = vmatpush1.msra.mxu0 0.0
    %2701 = vmatprep.subr.mxu0 0.0
    %2702 = vmatpush1.msra.mxu0 0.0
    %2703 = vmatprep.subr.mxu0 0.0
    %2704 = vmatpush1.msra.mxu0 0.0
    %2705 = vmatprep.subr.mxu0 0.0
    %2706 = vmatpush1.msra.mxu0 0.0
    %2707 = vmatprep.subr.mxu0 0.0
    %2708 = vmatpush1.msra.mxu0 0.0
    %2709 = vmatprep.subr.mxu0 0.0
    %2710 = vmatpush1.msra.mxu0 0.0
    %2711 = vmatprep.subr.mxu0 0.0
    %2712 = vmatpush1.msra.mxu0 0.0
    %2713 = vmatprep.subr.mxu0 0.0
    %2714 = vmatpush1.msra.mxu0 0.0
    %2715 = vmatprep.subr.mxu0 0.0
    %2716 = vmatpush1.msra.mxu0 %v2057
    %2717 = vmatprep.subr.mxu0 0.0
    %2718 = vmatpush1.msra.mxu0 %v2056
    %2719 = vmatprep.subr.mxu0 0.0
    %2720 = vmatpush2.msra.mxu0 0.0
    %2721 = vmatprep.subr.mxu0 0.0
    %2722 = vmatpush2.msra.mxu0 0.0
    %2723 = vmatprep.subr.mxu0 0.0
    %2724 = vmatpush2.msra.mxu0 0.0
    %2725 = vmatprep.subr.mxu0 0.0
    %2726 = vmatpush2.msra.mxu0 0.0
    %2727 = vmatprep.subr.mxu0 0.0
    %2728 = vmatpush2.msra.mxu0 0.0
    %2729 = vmatprep.subr.mxu0 0.0
    %2730 = vmatpush2.msra.mxu0 0.0
    %2731 = vmatprep.subr.mxu0 0.0
    %2732 = vmatpush2.msra.mxu0 0.0
    %2733 = vmatprep.subr.mxu0 0.0
    %2734 = vmatpush2.msra.mxu0 0.0
    %2735 = vmatprep.subr.mxu0 0.0
    %2736 = vmatpush2.msra.mxu0 0.0
    %2737 = vmatprep.subr.mxu0 0.0
    %2738 = vmatpush2.msra.mxu0 0.0
    %2739 = vmatprep.subr.mxu0 0.0
    %2740 = vmatpush2.msra.mxu0 0.0
    %2741 = vmatprep.subr.mxu0 0.0
    %2742 = vmatpush2.msra.mxu0 0.0
    %2743 = vmatprep.subr.mxu0 0.0
    %2744 = vmatpush2.msra.mxu0 0.0
    %2745 = vmatprep.subr.mxu0 0.0
    %2746 = vmatpush2.msra.mxu0 0.0
    %2747 = vmatprep.subr.mxu0 0.0
    %2748 = vmatpush2.msra.mxu0 0.0
    %2749 = vmatprep.subr.mxu0 0.0
    %2750 = vmatpush2.msra.mxu0 0.0
    %2751 = vmatprep.mubr.f32.mxu0 0.0
    %2752 = vmatmul.mubr.f32.gmra.mxu0 %v2685
    %v2753 = vpop.f32.mrf.mxu0
    %v2754 = vadd.f32 0.0, %v2753
    %v2755 = vpop.f32.mrf.mxu0
    %2756 = vdwg.mxu0
    %v2757 = vadd.f32 %v2678, %v2754
    %v2758 = vxor.u32 %v2757, 2147483648
    %v2759 = vmul.f32 %v2758, 1.442695
    %v2760 = vpow.pop %v2759
    %v2761 = vadd.f32 %v2760, 1.0
    %v2762 = vrcp.pop %v2761
    %v2763 = vmul.f32 1.0, %v2762
    %v2764 = vtanh.pop %v2757
    %v2765 = vmul.f32 %v2763, %v2655
    %2767 = vrot.lane.b32.xlu0 %v2764, 112
    %v2768 = vpop.permute.xlu0 %2767
    %v2770 = vmul.f32 %v2763, %v2768
    %2772 = vrot.lane.b32.xlu0 %v2770, 8
    %v2773 = vpop.permute.xlu0 %2772
    %v2775 = vadd.f32 %v2765, %v2773
    %v2776 = vtanh.pop %v2775
    %2778 = vrot.lane.b32.xlu0 %v2776, 16
    %v2779 = vpop.permute.xlu0 %2778
    %v2781 = vmul.f32 %v2763, %v2779
    %2783 = vrot.lane.b32.xlu0 %v2781, 104
    %v2784 = vpop.permute.xlu0 %2783
    %2786 = vst.msk [vmem:[#allocation2 + $0x5] sm:$0x1] %vm2177, %v2784
    %2787 = vst.msk [vmem:[#allocation3] sm:$0x4] %vm2179, %v2784
    %2788 = vst.msk [vmem:[#allocation2 + $0xc] sm:$0x2] %vm2181, %v2784
    %2789 = vst.msk [vmem:[#allocation3 + $0x7] sm:$0x8] %vm2183, %v2784
    %v2790 = vrot.slane %v1965, 6
    %v2792 = vrot.slane %v1970, 5
    %v2794 = vrot.slane %v2048, 7
    %v2796 = vrot.slane %v2053, 6
    %v2798 = vsel %vm2068, %v2790, %v2792
    %v2799 = vsel %vm2070, %v2798, %v2794
    %v2800 = vsel %vm2072, %v2799, %v2796
    %2801 = vrot.lane.b32.xlu0 %v2781, 112
    %v2802 = vpop.permute.xlu0 %2801
    %v2804 = vsel %vm654, %v2784, %v2802
    %v2805 = vmul.f32 %v2804, %v2058
    %v2807 = vsel %vm301, %v2805, 0
    %2809 = vmatprep.subr.mxu0 0.0
    %2810 = vmatpush1.msra.mxu0 0.0
    %2811 = vmatprep.subr.mxu0 0.0
    %2812 = vmatpush1.msra.mxu0 0.0
    %2813 = vmatprep.subr.mxu0 0.0
    %2814 = vmatpush1.msra.mxu0 0.0
    %2815 = vmatprep.subr.mxu0 0.0
    %2816 = vmatpush1.msra.mxu0 0.0
    %2817 = vmatprep.subr.mxu0 0.0
    %2818 = vmatpush1.msra.mxu0 0.0
    %2819 = vmatprep.subr.mxu0 0.0
    %2820 = vmatpush1.msra.mxu0 0.0
    %2821 = vmatprep.subr.mxu0 0.0
    %2822 = vmatpush1.msra.mxu0 0.0
    %2823 = vmatprep.subr.mxu0 0.0
    %2824 = vmatpush1.msra.mxu0 0.0
    %2825 = vmatprep.subr.mxu0 0.0
    %2826 = vmatpush1.msra.mxu0 0.0
    %2827 = vmatprep.subr.mxu0 0.0
    %2828 = vmatpush1.msra.mxu0 0.0
    %2829 = vmatprep.subr.mxu0 0.0
    %2830 = vmatpush1.msra.mxu0 0.0
    %2831 = vmatprep.subr.mxu0 0.0
    %2832 = vmatpush1.msra.mxu0 0.0
    %2833 = vmatprep.subr.mxu0 0.0
    %2834 = vmatpush1.msra.mxu0 0.0
    %2835 = vmatprep.subr.mxu0 0.0
    %2836 = vmatpush1.msra.mxu0 0.0
    %2837 = vmatprep.subr.mxu0 0.0
    %2838 = vmatpush1.msra.mxu0 %v2057
    %2839 = vmatprep.subr.mxu0 0.0
    %2840 = vmatpush1.msra.mxu0 %v2056
    %2841 = vmatprep.subr.mxu0 0.0
    %2842 = vmatpush2.msra.mxu0 0.0
    %2843 = vmatprep.subr.mxu0 0.0
    %2844 = vmatpush2.msra.mxu0 0.0
    %2845 = vmatprep.subr.mxu0 0.0
    %2846 = vmatpush2.msra.mxu0 0.0
    %2847 = vmatprep.subr.mxu0 0.0
    %2848 = vmatpush2.msra.mxu0 0.0
    %2849 = vmatprep.subr.mxu0 0.0
    %2850 = vmatpush2.msra.mxu0 0.0
    %2851 = vmatprep.subr.mxu0 0.0
    %2852 = vmatpush2.msra.mxu0 0.0
    %2853 = vmatprep.subr.mxu0 0.0
    %2854 = vmatpush2.msra.mxu0 0.0
    %2855 = vmatprep.subr.mxu0 0.0
    %2856 = vmatpush2.msra.mxu0 0.0
    %2857 = vmatprep.subr.mxu0 0.0
    %2858 = vmatpush2.msra.mxu0 0.0
    %2859 = vmatprep.subr.mxu0 0.0
    %2860 = vmatpush2.msra.mxu0 0.0
    %2861 = vmatprep.subr.mxu0 0.0
    %2862 = vmatpush2.msra.mxu0 0.0
    %2863 = vmatprep.subr.mxu0 0.0
    %2864 = vmatpush2.msra.mxu0 0.0
    %2865 = vmatprep.subr.mxu0 0.0
    %2866 = vmatpush2.msra.mxu0 0.0
    %2867 = vmatprep.subr.mxu0 0.0
    %2868 = vmatpush2.msra.mxu0 0.0
    %2869 = vmatprep.subr.mxu0 0.0
    %2870 = vmatpush2.msra.mxu0 0.0
    %2871 = vmatprep.subr.mxu0 0.0
    %2872 = vmatpush2.msra.mxu0 0.0
    %2873 = vmatprep.mubr.f32.mxu0 0.0
    %2874 = vmatmul.mubr.f32.gmra.mxu0 %v2807
    %v2875 = vpop.f32.mrf.mxu0
    %v2876 = vadd.f32 0.0, %v2875
    %v2877 = vpop.f32.mrf.mxu0
    %2878 = vdwg.mxu0
    %v2879 = vadd.f32 %v2800, %v2876
    %v2880 = vxor.u32 %v2879, 2147483648
    %v2881 = vmul.f32 %v2880, 1.442695
    %v2882 = vpow.pop %v2881
    %v2883 = vadd.f32 %v2882, 1.0
    %v2884 = vrcp.pop %v2883
    %v2885 = vmul.f32 1.0, %v2884
    %v2886 = vtanh.pop %v2879
    %v2887 = vmul.f32 %v2885, %v2775
    %2889 = vrot.lane.b32.xlu0 %v2886, 112
    %v2890 = vpop.permute.xlu0 %2889
    %v2892 = vmul.f32 %v2885, %v2890
    %2894 = vrot.lane.b32.xlu0 %v2892, 8
    %v2895 = vpop.permute.xlu0 %2894
    %v2897 = vadd.f32 %v2887, %v2895
    %v2898 = vtanh.pop %v2897
    %2900 = vrot.lane.b32.xlu0 %v2898, 16
    %v2901 = vpop.permute.xlu0 %2900
    %v2903 = vmul.f32 %v2885, %v2901
    %2905 = vrot.lane.b32.xlu0 %v2903, 104
    %v2906 = vpop.permute.xlu0 %2905
    %2908 = vst.msk [vmem:[#allocation2 + $0x6] sm:$0x1] %vm2177, %v2906
    %2909 = vst.msk [vmem:[#allocation3 - $0x1] sm:$0x4] %vm2179, %v2906
    %2910 = vst.msk [vmem:[#allocation2 + $0xd] sm:$0x2] %vm2181, %v2906
    %2911 = vst.msk [vmem:[#allocation3 + $0x6] sm:$0x8] %vm2183, %v2906
    %v2912 = vrot.slane %v1965, 7
    %v2914 = vrot.slane %v1970, 6
    %v2916 = vrot.slane %v2048, 6
    %v2918 = vrot.slane %v2053, 5
    %v2920 = vsel %vm2068, %v2912, %v2914
    %v2921 = vsel %vm2070, %v2920, %v2916
    %v2922 = vsel %vm2072, %v2921, %v2918
    %2923 = vrot.lane.b32.xlu0 %v2903, 112
    %v2924 = vpop.permute.xlu0 %2923
    %v2926 = vsel %vm654, %v2906, %v2924
    %v2927 = vmul.f32 %v2926, %v2058
    %v2929 = vsel %vm301, %v2927, 0
    %2931 = vmatprep.subr.mxu0 0.0
    %2932 = vmatpush1.msra.mxu0 0.0
    %2933 = vmatprep.subr.mxu0 0.0
    %2934 = vmatpush1.msra.mxu0 0.0
    %2935 = vmatprep.subr.mxu0 0.0
    %2936 = vmatpush1.msra.mxu0 0.0
    %2937 = vmatprep.subr.mxu0 0.0
    %2938 = vmatpush1.msra.mxu0 0.0
    %2939 = vmatprep.subr.mxu0 0.0
    %2940 = vmatpush1.msra.mxu0 0.0
    %2941 = vmatprep.subr.mxu0 0.0
    %2942 = vmatpush1.msra.mxu0 0.0
    %2943 = vmatprep.subr.mxu0 0.0
    %2944 = vmatpush1.msra.mxu0 0.0
    %2945 = vmatprep.subr.mxu0 0.0
    %2946 = vmatpush1.msra.mxu0 0.0
    %2947 = vmatprep.subr.mxu0 0.0
    %2948 = vmatpush1.msra.mxu0 0.0
    %2949 = vmatprep.subr.mxu0 0.0
    %2950 = vmatpush1.msra.mxu0 0.0
    %2951 = vmatprep.subr.mxu0 0.0
    %2952 = vmatpush1.msra.mxu0 0.0
    %2953 = vmatprep.subr.mxu0 0.0
    %2954 = vmatpush1.msra.mxu0 0.0
    %2955 = vmatprep.subr.mxu0 0.0
    %2956 = vmatpush1.msra.mxu0 0.0
    %2957 = vmatprep.subr.mxu0 0.0
    %2958 = vmatpush1.msra.mxu0 0.0
    %2959 = vmatprep.subr.mxu0 0.0
    %2960 = vmatpush1.msra.mxu0 %v2057
    %2961 = vmatprep.subr.mxu0 0.0
    %2962 = vmatpush1.msra.mxu0 %v2056
    %2963 = vmatprep.subr.mxu0 0.0
    %2964 = vmatpush2.msra.mxu0 0.0
    %2965 = vmatprep.subr.mxu0 0.0
    %2966 = vmatpush2.msra.mxu0 0.0
    %2967 = vmatprep.subr.mxu0 0.0
    %2968 = vmatpush2.msra.mxu0 0.0
    %2969 = vmatprep.subr.mxu0 0.0
    %2970 = vmatpush2.msra.mxu0 0.0
    %2971 = vmatprep.subr.mxu0 0.0
    %2972 = vmatpush2.msra.mxu0 0.0
    %2973 = vmatprep.subr.mxu0 0.0
    %2974 = vmatpush2.msra.mxu0 0.0
    %2975 = vmatprep.subr.mxu0 0.0
    %2976 = vmatpush2.msra.mxu0 0.0
    %2977 = vmatprep.subr.mxu0 0.0
    %2978 = vmatpush2.msra.mxu0 0.0
    %2979 = vmatprep.subr.mxu0 0.0
    %2980 = vmatpush2.msra.mxu0 0.0
    %2981 = vmatprep.subr.mxu0 0.0
    %2982 = vmatpush2.msra.mxu0 0.0
    %2983 = vmatprep.subr.mxu0 0.0
    %2984 = vmatpush2.msra.mxu0 0.0
    %2985 = vmatprep.subr.mxu0 0.0
    %2986 = vmatpush2.msra.mxu0 0.0
    %2987 = vmatprep.subr.mxu0 0.0
    %2988 = vmatpush2.msra.mxu0 0.0
    %2989 = vmatprep.subr.mxu0 0.0
    %2990 = vmatpush2.msra.mxu0 0.0
    %2991 = vmatprep.subr.mxu0 0.0
    %2992 = vmatpush2.msra.mxu0 0.0
    %2993 = vmatprep.subr.mxu0 0.0
    %2994 = vmatpush2.msra.mxu0 0.0
    %2995 = vmatprep.mubr.f32.mxu0 0.0
    %2996 = vmatmul.mubr.f32.gmra.mxu0 %v2929
    %v2997 = vpop.f32.mrf.mxu0
    %v2998 = vadd.f32 0.0, %v2997
    %v2999 = vpop.f32.mrf.mxu0
    %3000 = vdwg.mxu0
    %v3001 = vadd.f32 %v2922, %v2998
    %v3002 = vxor.u32 %v3001, 2147483648
    %v3003 = vmul.f32 %v3002, 1.442695
    %v3004 = vpow.pop %v3003
    %v3005 = vadd.f32 %v3004, 1.0
    %v3006 = vrcp.pop %v3005
    %v3007 = vmul.f32 1.0, %v3006
    %v3008 = vtanh.pop %v3001
    %v3009 = vmul.f32 %v3007, %v2897
    %3011 = vrot.lane.b32.xlu0 %v3008, 112
    %v3012 = vpop.permute.xlu0 %3011
    %v3014 = vmul.f32 %v3007, %v3012
    %3016 = vrot.lane.b32.xlu0 %v3014, 8
    %v3017 = vpop.permute.xlu0 %3016
    %v3019 = vadd.f32 %v3009, %v3017
    %v3020 = vtanh.pop %v3019
    %3022 = vrot.lane.b32.xlu0 %v3020, 16
    %v3023 = vpop.permute.xlu0 %3022
    %v3025 = vmul.f32 %v3007, %v3023
    %3027 = vrot.lane.b32.xlu0 %v3025, 104
    %v3028 = vpop.permute.xlu0 %3027
    %3030 = vst.msk [vmem:[#allocation2 + $0x7] sm:$0x1] %vm2177, %v3028
    %3031 = vst.msk [vmem:[#allocation3 - $0x2] sm:$0x4] %vm2179, %v3028
    %3032 = vst.msk [vmem:[#allocation2 + $0xe] sm:$0x2] %vm2181, %v3028
    %3033 = vst.msk [vmem:[#allocation3 + $0x5] sm:$0x8] %vm2183, %v3028
    %v3034 = vld [vmem:[#allocation2] sm:$0xff]
    %v3035 = vld [vmem:[#allocation2 + $0x8] sm:$0xff]
    %vm3036 = vcmp.gt.f32.partialorder %v3034, 0.0
    %vm3037 = vcmp.gt.f32.partialorder %v3035, 0.0
    %v3038 = vmul.f32 %v3034, 0.01
    %v3039 = vmul.f32 %v3035, 0.01
    %v3040 = vsel %vm3036, %v3034, %v3038
    %v3041 = vsel %vm3037, %v3035, %v3039
    %v3042 = vld [vmem:[#allocation30] sm:$0xff]
    %v3043 = vld [vmem:[#allocation3] sm:$0xff]
    %v3044 = vld [vmem:[#allocation3 + $0x8] sm:$0xff]
    %vm3045 = vcmp.gt.f32.partialorder %v3043, 0.0
    %vm3046 = vcmp.gt.f32.partialorder %v3044, 0.0
    %v3047 = vmul.f32 %v3043, 0.01
    %v3048 = vmul.f32 %v3044, 0.01
    %v3049 = vsel %vm3045, %v3043, %v3047
    %v3050 = vsel %vm3046, %v3044, %v3048
    %v3051 = vld [vmem:[#allocation32] sm:$0xff]
    %v3053 = vsel %vm654, %v3049, 0
    %v3056 = vsel %vm654, %v3050, 0
    %3058 = vmatprep.subr.mxu0 0.0
    %3059 = vmatpush1.msra.mxu0 0.0
    %3060 = vmatprep.subr.mxu0 0.0
    %3061 = vmatpush1.msra.mxu0 0.0
    %3062 = vmatprep.subr.mxu0 0.0
    %3063 = vmatpush1.msra.mxu0 0.0
    %3064 = vmatprep.subr.mxu0 0.0
    %3065 = vmatpush1.msra.mxu0 0.0
    %3066 = vmatprep.subr.mxu0 0.0
    %3067 = vmatpush1.msra.mxu0 0.0
    %3068 = vmatprep.subr.mxu0 0.0
    %3069 = vmatpush1.msra.mxu0 0.0
    %3070 = vmatprep.subr.mxu0 0.0
    %3071 = vmatpush1.msra.mxu0 0.0
    %3072 = vmatprep.subr.mxu0 0.0
    %3073 = vmatpush1.msra.mxu0 0.0
    %3074 = vmatprep.subr.mxu0 0.0
    %3075 = vmatpush1.msra.mxu0 0.0
    %3076 = vmatprep.subr.mxu0 0.0
    %3077 = vmatpush1.msra.mxu0 0.0
    %3078 = vmatprep.subr.mxu0 0.0
    %3079 = vmatpush1.msra.mxu0 0.0
    %3080 = vmatprep.subr.mxu0 0.0
    %3081 = vmatpush1.msra.mxu0 0.0
    %3082 = vmatprep.subr.mxu0 0.0
    %3083 = vmatpush1.msra.mxu0 0.0
    %3084 = vmatprep.subr.mxu0 0.0
    %3085 = vmatpush1.msra.mxu0 0.0
    %3086 = vmatprep.subr.mxu0 0.0
    %3087 = vmatpush1.msra.mxu0 0.0
    %3088 = vmatprep.subr.mxu0 0.0
    %3089 = vmatpush1.msra.mxu0 %v3051
    %3090 = vmatprep.subr.mxu0 0.0
    %3091 = vmatpush2.msra.mxu0 0.0
    %3092 = vmatprep.subr.mxu0 0.0
    %3093 = vmatpush2.msra.mxu0 0.0
    %3094 = vmatprep.subr.mxu0 0.0
    %3095 = vmatpush2.msra.mxu0 0.0
    %3096 = vmatprep.subr.mxu0 0.0
    %3097 = vmatpush2.msra.mxu0 0.0
    %3098 = vmatprep.subr.mxu0 0.0
    %3099 = vmatpush2.msra.mxu0 0.0
    %3100 = vmatprep.subr.mxu0 0.0
    %3101 = vmatpush2.msra.mxu0 0.0
    %3102 = vmatprep.subr.mxu0 0.0
    %3103 = vmatpush2.msra.mxu0 0.0
    %3104 = vmatprep.subr.mxu0 0.0
    %3105 = vmatpush2.msra.mxu0 0.0
    %3106 = vmatprep.subr.mxu0 0.0
    %3107 = vmatpush2.msra.mxu0 0.0
    %3108 = vmatprep.subr.mxu0 0.0
    %3109 = vmatpush2.msra.mxu0 0.0
    %3110 = vmatprep.subr.mxu0 0.0
    %3111 = vmatpush2.msra.mxu0 0.0
    %3112 = vmatprep.subr.mxu0 0.0
    %3113 = vmatpush2.msra.mxu0 0.0
    %3114 = vmatprep.subr.mxu0 0.0
    %3115 = vmatpush2.msra.mxu0 0.0
    %3116 = vmatprep.subr.mxu0 0.0
    %3117 = vmatpush2.msra.mxu0 0.0
    %3118 = vmatprep.subr.mxu0 0.0
    %3119 = vmatpush2.msra.mxu0 0.0
    %3120 = vmatprep.subr.mxu0 0.0
    %3121 = vmatpush2.msra.mxu0 0.0
    %3122 = vmatprep.mubr.f32.mxu0 0.0
    %3123 = vmatmul.mubr.f32.gmra.mxu0 %v3053
    %v3124 = vpop.f32.mrf.mxu0
    %v3125 = vadd.f32 0.0, %v3124
    %v3126 = vpop.f32.mrf.mxu0
    %3127 = vmatprep.mubr.f32.mxu0 0.0
    %3128 = vmatmul.mubr.f32.gmra.mxu0 %v3056
    %v3129 = vpop.f32.mrf.mxu0
    %v3130 = vadd.f32 0.0, %v3129
    %v3131 = vpop.f32.mrf.mxu0
    %3132 = vdwg.mxu0
    %v3134 = vsel %vm654, %v3040, 0
    %v3137 = vsel %vm654, %v3041, 0
    %3139 = vmatprep.subr.mxu0 0.0
    %3140 = vmatpush1.msra.mxu0 0.0
    %3141 = vmatprep.subr.mxu0 0.0
    %3142 = vmatpush1.msra.mxu0 0.0
    %3143 = vmatprep.subr.mxu0 0.0
    %3144 = vmatpush1.msra.mxu0 0.0
    %3145 = vmatprep.subr.mxu0 0.0
    %3146 = vmatpush1.msra.mxu0 0.0
    %3147 = vmatprep.subr.mxu0 0.0
    %3148 = vmatpush1.msra.mxu0 0.0
    %3149 = vmatprep.subr.mxu0 0.0
    %3150 = vmatpush1.msra.mxu0 0.0
    %3151 = vmatprep.subr.mxu0 0.0
    %3152 = vmatpush1.msra.mxu0 0.0
    %3153 = vmatprep.subr.mxu0 0.0
    %3154 = vmatpush1.msra.mxu0 0.0
    %3155 = vmatprep.subr.mxu0 0.0
    %3156 = vmatpush1.msra.mxu0 0.0
    %3157 = vmatprep.subr.mxu0 0.0
    %3158 = vmatpush1.msra.mxu0 0.0
    %3159 = vmatprep.subr.mxu0 0.0
    %3160 = vmatpush1.msra.mxu0 0.0
    %3161 = vmatprep.subr.mxu0 0.0
    %3162 = vmatpush1.msra.mxu0 0.0
    %3163 = vmatprep.subr.mxu0 0.0
    %3164 = vmatpush1.msra.mxu0 0.0
    %3165 = vmatprep.subr.mxu0 0.0
    %3166 = vmatpush1.msra.mxu0 0.0
    %3167 = vmatprep.subr.mxu0 0.0
    %3168 = vmatpush1.msra.mxu0 0.0
    %3169 = vmatprep.subr.mxu0 0.0
    %3170 = vmatpush1.msra.mxu0 %v3042
    %3171 = vmatprep.subr.mxu0 0.0
    %3172 = vmatpush2.msra.mxu0 0.0
    %3173 = vmatprep.subr.mxu0 0.0
    %3174 = vmatpush2.msra.mxu0 0.0
    %3175 = vmatprep.subr.mxu0 0.0
    %3176 = vmatpush2.msra.mxu0 0.0
    %3177 = vmatprep.subr.mxu0 0.0
    %3178 = vmatpush2.msra.mxu0 0.0
    %3179 = vmatprep.subr.mxu0 0.0
    %3180 = vmatpush2.msra.mxu0 0.0
    %3181 = vmatprep.subr.mxu0 0.0
    %3182 = vmatpush2.msra.mxu0 0.0
    %3183 = vmatprep.subr.mxu0 0.0
    %3184 = vmatpush2.msra.mxu0 0.0
    %3185 = vmatprep.subr.mxu0 0.0
    %3186 = vmatpush2.msra.mxu0 0.0
    %3187 = vmatprep.subr.mxu0 0.0
    %3188 = vmatpush2.msra.mxu0 0.0
    %3189 = vmatprep.subr.mxu0 0.0
    %3190 = vmatpush2.msra.mxu0 0.0
    %3191 = vmatprep.subr.mxu0 0.0
    %3192 = vmatpush2.msra.mxu0 0.0
    %3193 = vmatprep.subr.mxu0 0.0
    %3194 = vmatpush2.msra.mxu0 0.0
    %3195 = vmatprep.subr.mxu0 0.0
    %3196 = vmatpush2.msra.mxu0 0.0
    %3197 = vmatprep.subr.mxu0 0.0
    %3198 = vmatpush2.msra.mxu0 0.0
    %3199 = vmatprep.subr.mxu0 0.0
    %3200 = vmatpush2.msra.mxu0 0.0
    %3201 = vmatprep.subr.mxu0 0.0
    %3202 = vmatpush2.msra.mxu0 0.0
    %3203 = vmatprep.mubr.f32.mxu0 0.0
    %3204 = vmatmul.mubr.f32.gmra.mxu0 %v3134
    %v3205 = vpop.f32.mrf.mxu0
    %v3206 = vadd.f32 %v3125, %v3205
    %v3207 = vpop.f32.mrf.mxu0
    %3208 = vmatprep.mubr.f32.mxu0 0.0
    %3209 = vmatmul.mubr.f32.gmra.mxu0 %v3137
    %v3210 = vpop.f32.mrf.mxu0
    %v3211 = vadd.f32 %v3130, %v3210
    %v3212 = vpop.f32.mrf.mxu0
    %3213 = vdwg.mxu0
    %v3214 = vld [vmem:[%s21] sm:$0xff]
    %v3215 = vld [vmem:[%s21 + $0x8] sm:$0xff]
    %v3216 = vld [vmem:[%s21 + $0x10] sm:$0xff]
    %v3217 = vld [vmem:[%s21 + $0x18] sm:$0xff]
    %v3219 = vsel %vm387, %v1302, 0
    %v3222 = vsel %vm387, %v1881, 0
    %3224 = vmatprep.subr.mxu0 0.0
    %3225 = vmatpush1.msra.mxu0 0.0
    %3226 = vmatprep.subr.mxu0 0.0
    %3227 = vmatpush1.msra.mxu0 0.0
    %3228 = vmatprep.subr.mxu0 0.0
    %3229 = vmatpush1.msra.mxu0 0.0
    %3230 = vmatprep.subr.mxu0 0.0
    %3231 = vmatpush1.msra.mxu0 0.0
    %3232 = vmatprep.subr.mxu0 0.0
    %3233 = vmatpush1.msra.mxu0 0.0
    %3234 = vmatprep.subr.mxu0 0.0
    %3235 = vmatpush1.msra.mxu0 0.0
    %3236 = vmatprep.subr.mxu0 0.0
    %3237 = vmatpush1.msra.mxu0 0.0
    %3238 = vmatprep.subr.mxu0 0.0
    %3239 = vmatpush1.msra.mxu0 0.0
    %3240 = vmatprep.subr.mxu0 0.0
    %3241 = vmatpush1.msra.mxu0 0.0
    %3242 = vmatprep.subr.mxu0 0.0
    %3243 = vmatpush1.msra.mxu0 0.0
    %3244 = vmatprep.subr.mxu0 0.0
    %3245 = vmatpush1.msra.mxu0 0.0
    %3246 = vmatprep.subr.mxu0 0.0
    %3247 = vmatpush1.msra.mxu0 0.0
    %3248 = vmatprep.subr.mxu0 0.0
    %3249 = vmatpush1.msra.mxu0 %v3217
    %3250 = vmatprep.subr.mxu0 0.0
    %3251 = vmatpush1.msra.mxu0 %v3216
    %3252 = vmatprep.subr.mxu0 0.0
    %3253 = vmatpush1.msra.mxu0 %v3215
    %3254 = vmatprep.subr.mxu0 0.0
    %3255 = vmatpush1.msra.mxu0 %v3214
    %3256 = vmatprep.subr.mxu0 0.0
    %3257 = vmatpush2.msra.mxu0 0.0
    %3258 = vmatprep.subr.mxu0 0.0
    %3259 = vmatpush2.msra.mxu0 0.0
    %3260 = vmatprep.subr.mxu0 0.0
    %3261 = vmatpush2.msra.mxu0 0.0
    %3262 = vmatprep.subr.mxu0 0.0
    %3263 = vmatpush2.msra.mxu0 0.0
    %3264 = vmatprep.subr.mxu0 0.0
    %3265 = vmatpush2.msra.mxu0 0.0
    %3266 = vmatprep.subr.mxu0 0.0
    %3267 = vmatpush2.msra.mxu0 0.0
    %3268 = vmatprep.subr.mxu0 0.0
    %3269 = vmatpush2.msra.mxu0 0.0
    %3270 = vmatprep.subr.mxu0 0.0
    %3271 = vmatpush2.msra.mxu0 0.0
    %3272 = vmatprep.subr.mxu0 0.0
    %3273 = vmatpush2.msra.mxu0 0.0
    %3274 = vmatprep.subr.mxu0 0.0
    %3275 = vmatpush2.msra.mxu0 0.0
    %3276 = vmatprep.subr.mxu0 0.0
    %3277 = vmatpush2.msra.mxu0 0.0
    %3278 = vmatprep.subr.mxu0 0.0
    %3279 = vmatpush2.msra.mxu0 0.0
    %3280 = vmatprep.subr.mxu0 0.0
    %3281 = vmatpush2.msra.mxu0 0.0
    %3282 = vmatprep.subr.mxu0 0.0
    %3283 = vmatpush2.msra.mxu0 0.0
    %3284 = vmatprep.subr.mxu0 0.0
    %3285 = vmatpush2.msra.mxu0 0.0
    %3286 = vmatprep.subr.mxu0 0.0
    %3287 = vmatpush2.msra.mxu0 0.0
    %3288 = vmatprep.mubr.f32.mxu0 0.0
    %3289 = vmatmul.mubr.f32.gmra.mxu0 %v3219
    %v3290 = vpop.f32.mrf.mxu0
    %v3291 = vadd.f32 0.0, %v3290
    %v3292 = vpop.f32.mrf.mxu0
    %3293 = vmatprep.mubr.f32.mxu0 0.0
    %3294 = vmatmul.mubr.f32.gmra.mxu0 %v3222
    %v3295 = vpop.f32.mrf.mxu0
    %v3296 = vadd.f32 0.0, %v3295
    %v3297 = vpop.f32.mrf.mxu0
    %3298 = vdwg.mxu0
    %v3299 = vadd.f32 %v3206, %v3291
    %v3300 = vadd.f32 %v3211, %v3296
    %v3301 = vld [vmem:[%s22] sm:$0x1]
    %v3303 = vlaneseq
    %v3304 = vshrl.u32 %v3303, 7
    %v3305 = vsub.s32 0, %v3304
    %v3306 = vrot.slane %v3301, %v3305
    %v3308 = vadd.f32 %v3299, %v3306
    %v3309 = vadd.f32 %v3300, %v3306
    %vm3310 = vcmp.gt.f32.partialorder %v3308, 0.0
    %vm3311 = vcmp.gt.f32.partialorder %v3309, 0.0
    %v3312 = vmul.f32 %v3308, 1.442695
    %v3313 = vpow.pop %v3312
    %v3314 = vmul.f32 %v3309, 1.442695
    %v3315 = vpow.pop %v3314
    %v3316 = vsub.f32 %v3313, 1.0
    %v3317 = vsub.f32 %v3315, 1.0
    %v3318 = vsel %vm3310, %v3308, %v3316
    %v3319 = vsel %vm3311, %v3309, %v3317
    %3320 = vst.msk [vmem:[#allocation33] sm:$0xff] %vm387, %v3318
    %3321 = vst.msk [vmem:[#allocation33 + $0x8] sm:$0xff] %vm387, %v3319
    // Predicated region
    $region162: #{_lambda_.1} parent=1 // pred_check
      _
    $region163: #{_lambda_.1} parent=1 // pred_check_branch
      %3323 = sbr.rel (0) target = $region165
    $region164: #{_lambda_.1} parent=1 // pred_region
      %s3325 = ssub.s32 256, 256
      %3326 = vsyncadd [#allocation8], %s3325
      %s3327 = sshll.u32 [#allocation33], 4
      %s3328 = int_to_ptr.vmem [resolvable:$true] %s3327
      %3333 = dma.vmem_to_hbm [thread:$0]  %s3328, 256, %s23, [#allocation8], 128, 128, 8
    $region165: #{_lambda_.1} parent=1 // pred_fallthru
      _
    // Predicated region
    $region166: #{_lambda_.1} parent=1 // pred_check
      _
    $region167: #{_lambda_.1} parent=1 // pred_check_branch
      %3335 = sbr.rel (0) target = $region169
    $region168: #{_lambda_.1} parent=1 // pred_region
      %3336 = dma.done [#allocation8], 256
    $region169: #{_lambda_.1} parent=1 // pred_fallthru
      _
    %3337 = vsyncpa [#allocation7], 1
    %3338 = vsyncpa [#allocation10], 1
    %3339 = vsyncpa [#allocation13], 1
    %3340 = vsyncpa [#allocation16], 1
    %3341 = vsyncpa [#allocation19], 1
    %3342 = vsyncpa [#allocation22], 1
    %3343 = vsyncpa [#allocation25], 1
    %3344 = vsyncpa [#allocation28], 1
    %3345 = vsyncpa [#allocation31], 1
    %3346 = vsyncpa [#allocation8], 1

</llo_original>
